<compile_context>
chip_gen: v7x
topology: tpu7x:2x2x1
jax: 0.10.0
libtpu: 0.0.40
codegen_flags: <defaults>
</compile_context>

<pallas_src>
import jax
import jax.numpy as jnp
from jax.experimental import pallas as pl
from jax.experimental.pallas import tpu as pltpu

EPS_BN = 1e-5        # nn.BatchNorm1d default eps
EPS_NORM = 1e-12     # F.normalize default eps
ATTR_DIM = 35        # raw attribute feature dim
ATTR_PAD = 128       # lane-padded attr dim (zero rows in W1 => identical math)
BATCH_TILE = 128     # rows of each modality processed per grid step (default)
ROW_ALIGN = 16       # bf16 sublane packing => keep row offsets 16-aligned


def _round_up(x, m):
    return (x + m - 1) // m * m


def _masked_bn_relu(h, mask, n_valid, gamma, beta):
    """Training-mode BatchNorm1d (biased variance over the n_valid mask=1 rows) + ReLU."""
    inv_n = 1.0 / float(n_valid)
    mean = jnp.sum(h * mask, axis=0, keepdims=True) * inv_n
    cent = h - mean
    var = jnp.sum(cent * cent * mask, axis=0, keepdims=True) * inv_n
    return jnp.maximum(cent * jax.lax.rsqrt(var + EPS_BN) * gamma + beta, 0.0)


# ----------------------------------------------------------------------------
# Fused kernel: per-chunk aligners + last-step epilogue (attr MLP, projector,
# L2-normalize).  All intermediates stay in VMEM.
# ----------------------------------------------------------------------------
def _make_kernel(batch, b_pad, tile):
    f32 = jnp.float32
    bf16 = jnp.bfloat16

    def kernel(v1_ref, v2_ref, txt_ref, attrp_ref,
               w_vis_ref, w_txt_ref,
               aw1_ref, ab1_ref, ag_ref, abt_ref, aw2_ref,
               pw1_ref, pg_ref, pbt_ref, pw2_ref,
               attr_feat_ref, proj_out_ref,
               allfeat_ref):
        i = pl.program_id(0)

        # ---- per-chunk aligners: inputs are already bf16; two dots share the
        #      resident w_vis RHS; results go straight into the bf16 allfeat
        #      scratch (no stacking scratch, no f32 round-trips). ----
        w_vis = w_vis_ref[...]
        v1p = jnp.dot(v1_ref[...], w_vis, preferred_element_type=f32)
        v2p = jnp.dot(v2_ref[...], w_vis, preferred_element_type=f32)
        txtp = jnp.dot(txt_ref[...], w_txt_ref[...], preferred_element_type=f32)

        allfeat_ref[pl.ds(pl.multiple_of(i * tile, ROW_ALIGN), tile), :] = \
            v1p.astype(bf16)
        allfeat_ref[pl.ds(pl.multiple_of(b_pad + i * tile, ROW_ALIGN), tile), :] = \
            v2p.astype(bf16)
        allfeat_ref[pl.ds(pl.multiple_of(2 * b_pad + i * tile, ROW_ALIGN), tile), :] = \
            txtp.astype(bf16)

        # ---- epilogue on the last chunk: batch-coupled BN / projector / normalize
        @pl.when(i == pl.num_programs(0) - 1)
        def _():
            # attr MLP encoder: Linear(35->512) + BN(train) + ReLU  (35 lane-padded)
            rows = jax.lax.broadcasted_iota(jnp.int32, (b_pad, 1), 0)
            mask = (rows < batch).astype(f32)
            h = jnp.dot(attrp_ref[...], aw1_ref[...],
                        preferred_element_type=f32) + ab1_ref[...]
            feat = _masked_bn_relu(h, mask, batch, ag_ref[...], abt_ref[...])
            attr_feat_ref[...] = feat
            attr_proj = jnp.dot((feat * mask).astype(bf16), aw2_ref[...],
                                preferred_element_type=f32)
            allfeat_ref[pl.ds(3 * b_pad, b_pad), :] = attr_proj.astype(bf16)

            # shared Projector over the concatenated [img1; img2; txt; attr] batch.
            # BN stats over the 4*batch valid rows only (padded rows excluded).
            rows4 = jax.lax.broadcasted_iota(jnp.int32, (4 * b_pad, 1), 0)
            valid4 = rows4 < batch
            for s in range(1, 4):
                valid4 = valid4 | ((rows4 >= s * b_pad) & (rows4 < s * b_pad + batch))
            mask4 = valid4.astype(f32)

            p1 = jnp.dot(allfeat_ref[...], pw1_ref[...], preferred_element_type=f32)
            pn = _masked_bn_relu(p1, mask4, 4 * batch, pg_ref[...], pbt_ref[...])
            out = jnp.dot(pn.astype(bf16), pw2_ref[...], preferred_element_type=f32)

            # F.normalize(dim=-1): x * rsqrt(max(sum x^2, eps^2))  (f32)
            ss = jnp.sum(out * out, axis=-1, keepdims=True)
            proj_out_ref[...] = out * jax.lax.rsqrt(jnp.maximum(ss, EPS_NORM * EPS_NORM))

    return kernel


def _full_spec(shape):
    n = len(shape)
    return pl.BlockSpec(shape, lambda i, _n=n: (0,) * _n)


def _vmem_limit(tile, b_pad):
    bf2, f4 = 2, 4
    est = 2 * tile * (2048 + 2048 + 768) * bf2                       # dbl-buffered chunk inputs
    est += 2 * b_pad * ATTR_PAD * bf2                                # resident attr input
    est += 2 * ((2048 * 128 + 768 * 128 + ATTR_PAD * 512 + 512 * 128
                 + 2 * 128 * 128) * bf2 + 3 * (512 + 128) * f4)      # weights / biases
    est += 2 * (b_pad * 512 * f4 + 4 * b_pad * 128 * f4)             # resident outputs
    est += 4 * b_pad * 128 * bf2                                     # allfeat scratch
    est += 2 * b_pad * 512 * f4 + 3 * 4 * b_pad * 128 * f4           # epilogue temporaries
    # headroom, clamped so the limit is also safe on v7x (64 MiB physical VMEM)
    return int(min(max(int(est * 1.5) + (4 << 20), 32 << 20), 64 << 20))


def vikl_fused_call(v1, v2, txt, attr_p, params, batch, tile):
    b_pad = v1.shape[0]
    num_chunks = b_pad // tile
    operands = (v1, v2, txt, attr_p,
                params["w_vis"], params["w_txt"],
                params["attr_w1"], params["attr_b1"],
                params["attr_bn_g"], params["attr_bn_b"], params["attr_w2"],
                params["proj_w1"], params["proj_bn_g"], params["proj_bn_b"],
                params["proj_w2"])
    chunk2 = lambda i: (i, 0)
    in_specs = [pl.BlockSpec((tile, 2048), chunk2),
                pl.BlockSpec((tile, 2048), chunk2),
                pl.BlockSpec((tile, 768), chunk2),
                _full_spec(attr_p.shape)] + \
               [_full_spec(x.shape) for x in operands[4:]]
    out_specs = [_full_spec((b_pad, 512)), _full_spec((4 * b_pad, 128))]

    return pl.pallas_call(
        _make_kernel(batch, b_pad, tile),
        out_shape=(jax.ShapeDtypeStruct((b_pad, 512), jnp.float32),     # attr_embeds
                   jax.ShapeDtypeStruct((4 * b_pad, 128), jnp.float32)),  # normalized proj
        grid_spec=pltpu.PrefetchScalarGridSpec(
            num_scalar_prefetch=0,
            grid=(num_chunks,),
            in_specs=in_specs,
            out_specs=out_specs,
            scratch_shapes=[pltpu.VMEM((4 * b_pad, 128), jnp.bfloat16)]),
        compiler_params=pltpu.CompilerParams(
            dimension_semantics=("arbitrary",),
            vmem_limit_bytes=_vmem_limit(tile, b_pad)),
    )(*operands)


# ----------------------------------------------------------------------------
# Full ViKLNet_mixProj forward (post-backbone)
# ----------------------------------------------------------------------------
def vikl_forward(params, inputs, batch_tile=BATCH_TILE):
    img_feat1 = inputs["view1_features"]   # [B, 2048]  (resnet50 output stub)
    img_feat2 = inputs["view2_features"]   # [B, 2048]
    text_feat = inputs["text_pooled"]      # [B, 768]   (BERT pooled output stub)
    attr = inputs["attr"]                  # [B, 35]
    B = img_feat1.shape[0]

    batch_tile = _round_up(batch_tile, ROW_ALIGN)
    if B <= batch_tile:
        b_pad = _round_up(B, ROW_ALIGN)
        tile = b_pad
    else:
        tile = batch_tile
        b_pad = _round_up(B, batch_tile)
    row_pad = b_pad - B

    # cast to bf16 (kernel MXU operands) and pad rows / attr lanes with zeros;
    # BN stats inside the kernel are masked to the B valid rows.
    def prep(x, lane_pad=0):
        return jnp.pad(x.astype(jnp.bfloat16), ((0, row_pad), (0, lane_pad)))

    v1 = prep(img_feat1)
    v2 = prep(img_feat2)
    txt = prep(text_feat)
    attr_p = prep(attr, ATTR_PAD - attr.shape[1])

    attr_embeds_p, proj_p = vikl_fused_call(v1, v2, txt, attr_p, params, B, tile)

    attr_embeds = attr_embeds_p[:B]
    image_proj1_n = proj_p[0 * b_pad:0 * b_pad + B]
    image_proj2_n = proj_p[1 * b_pad:1 * b_pad + B]
    text_proj_n = proj_p[2 * b_pad:2 * b_pad + B]
    attr_proj_n = proj_p[3 * b_pad:3 * b_pad + B]

    return (img_feat1, image_proj1_n,
            img_feat2, image_proj2_n,
            text_feat, text_proj_n,
            attr_embeds, attr_proj_n)


# ----------------------------------------------------------------------------
# Pure-JAX reference (mirrors the kernel's bf16 cast points) for validation.
# ----------------------------------------------------------------------------
def vikl_reference(params, inputs):
    f32, bf16 = jnp.float32, jnp.bfloat16
    v1 = inputs["view1_features"].astype(bf16)
    v2 = inputs["view2_features"].astype(bf16)
    txt = inputs["text_pooled"].astype(bf16)
    attr = jnp.pad(inputs["attr"],
                   ((0, 0), (0, ATTR_PAD - inputs["attr"].shape[1]))).astype(bf16)

    def bn_relu(h, g, b):
        m = jnp.mean(h, axis=0, keepdims=True)
        v = jnp.mean((h - m) ** 2, axis=0, keepdims=True)
        return jnp.maximum((h - m) * jax.lax.rsqrt(v + EPS_BN) * g + b, 0.0)

    vis1 = jnp.dot(v1, params["w_vis"], preferred_element_type=f32)
    vis2 = jnp.dot(v2, params["w_vis"], preferred_element_type=f32)
    txtp = jnp.dot(txt, params["w_txt"], preferred_element_type=f32)
    h = jnp.dot(attr, params["attr_w1"], preferred_element_type=f32) + params["attr_b1"]
    feat = bn_relu(h, params["attr_bn_g"], params["attr_bn_b"])
    attrp = jnp.dot(feat.astype(bf16), params["attr_w2"], preferred_element_type=f32)

    allf = jnp.concatenate([vis1, vis2, txtp, attrp], axis=0).astype(bf16)
    p1 = jnp.dot(allf, params["proj_w1"], preferred_element_type=f32)
    pn = bn_relu(p1, params["proj_bn_g"], params["proj_bn_b"])
    out = jnp.dot(pn.astype(bf16), params["proj_w2"], preferred_element_type=f32)
    ss = jnp.sum(out * out, axis=-1, keepdims=True)
    out = out * jax.lax.rsqrt(jnp.maximum(ss, EPS_NORM * EPS_NORM))
    return feat, out


def init_params(key):
    ks = jax.random.split(key, 8)
    s = 0.02
    bf16 = jnp.bfloat16
    # attr W1 padded from [35,512] to [128,512] with zero rows (identical math)
    attr_w1 = s * jax.random.normal(ks[2], (ATTR_DIM, 512), jnp.float32)
    attr_w1 = jnp.pad(attr_w1, ((0, ATTR_PAD - ATTR_DIM), (0, 0)))
    return {
        # vision_aligner: nn.Linear(2048, 128, bias=False), stored [in,out], bf16
        "w_vis": (s * jax.random.normal(ks[0], (2048, 128), jnp.float32)).astype(bf16),
        # text_aligner: nn.Linear(768, 128, bias=False)
        "w_txt": (s * jax.random.normal(ks[1], (768, 128), jnp.float32)).astype(bf16),
        # attr MLP encoder: Linear(35, 512) + BatchNorm1d(512)
        "attr_w1": attr_w1.astype(bf16),
        "attr_b1": s * jax.random.normal(ks[3], (1, 512), jnp.float32),
        "attr_bn_g": jnp.ones((1, 512), jnp.float32),
        "attr_bn_b": jnp.zeros((1, 512), jnp.float32),
        # attr aligner: Linear(512, 128, bias=False)
        "attr_w2": (s * jax.random.normal(ks[4], (512, 128), jnp.float32)).astype(bf16),
        # Projector: Linear(128,128,nb) + BN(128) + ReLU + Linear(128,128,nb)
        "proj_w1": (s * jax.random.normal(ks[5], (128, 128), jnp.float32)).astype(bf16),
        "proj_bn_g": jnp.ones((1, 128), jnp.float32),
        "proj_bn_b": jnp.zeros((1, 128), jnp.float32),
        "proj_w2": (s * jax.random.normal(ks[6], (128, 128), jnp.float32)).astype(bf16),
    }


def _check(params, inputs, outs, tol=2e-2):
    B = inputs["attr"].shape[0]
    ref_feat, ref_proj = vikl_reference(params, inputs)
    got_projs = [outs[1], outs[3], outs[5], outs[7]]
    for idx, g in enumerate(got_projs):
        r = ref_proj[idx * B:(idx + 1) * B]
        assert float(jnp.max(jnp.abs(g - r))) < tol
        norms = jnp.sqrt(jnp.sum(g * g, axis=-1))
        assert bool(jnp.all(jnp.abs(norms - 1.0) < 1e-4))
    assert float(jnp.max(jnp.abs(outs[6] - ref_feat))) < tol
    assert bool(jnp.all(outs[6] >= 0.0))


if __name__ == "__main__":
    key = jax.random.PRNGKey(0)
    kp, k1, k2, k3, k4 = jax.random.split(key, 5)
    params = init_params(kp)

    # small smoke test (single chunk)
    B = 2
    inputs = {
        "view1_features": jax.random.normal(k1, (B, 2048), jnp.float32),
        "view2_features": jax.random.normal(k2, (B, 2048), jnp.float32),
        "text_pooled": jax.random.normal(k3, (B, 768), jnp.float32),
        "attr": jax.random.normal(k4, (B, ATTR_DIM), jnp.float32),
    }
    outs = jax.block_until_ready(vikl_forward(params, inputs))
    _check(params, inputs, outs)

    # exercise the multi-chunk grid + masked-BN path (B=40 padded to 48, tile=16)
    k5, k6, k7, k8 = jax.random.split(jax.random.PRNGKey(1), 4)
    B2 = 40
    inputs2 = {
        "view1_features": jax.random.normal(k5, (B2, 2048), jnp.float32),
        "view2_features": jax.random.normal(k6, (B2, 2048), jnp.float32),
        "text_pooled": jax.random.normal(k7, (B2, 768), jnp.float32),
        "attr": jax.random.normal(k8, (B2, ATTR_DIM), jnp.float32),
    }
    outs2 = jax.block_until_ready(vikl_forward(params, inputs2, batch_tile=16))
    _check(params, inputs2, outs2)

    print("KERNEL_OK")
</pallas_src>

<mosaic_0001>
module attributes {stable_mosaic.version = 11 : i64} {
  func.func @kernel(%arg0: i32, %arg1: memref<16x2048xbf16, #tpu.memory_space<vmem>>, %arg2: memref<16x2048xbf16, #tpu.memory_space<vmem>>, %arg3: memref<16x768xbf16, #tpu.memory_space<vmem>>, %arg4: memref<16x128xbf16, #tpu.memory_space<vmem>>, %arg5: memref<2048x128xbf16, #tpu.memory_space<vmem>>, %arg6: memref<768x128xbf16, #tpu.memory_space<vmem>>, %arg7: memref<128x512xbf16, #tpu.memory_space<vmem>>, %arg8: memref<1x512xf32, #tpu.memory_space<vmem>>, %arg9: memref<1x512xf32, #tpu.memory_space<vmem>>, %arg10: memref<1x512xf32, #tpu.memory_space<vmem>>, %arg11: memref<512x128xbf16, #tpu.memory_space<vmem>>, %arg12: memref<128x128xbf16, #tpu.memory_space<vmem>>, %arg13: memref<1x128xf32, #tpu.memory_space<vmem>>, %arg14: memref<1x128xf32, #tpu.memory_space<vmem>>, %arg15: memref<128x128xbf16, #tpu.memory_space<vmem>>, %arg16: memref<16x512xf32, #tpu.memory_space<vmem>>, %arg17: memref<64x128xf32, #tpu.memory_space<vmem>>, %arg18: memref<64x128xbf16, #tpu.memory_space<vmem>>) attributes {dimension_semantics = [#tpu.dimension_semantics<arbitrary>], iteration_bounds = array<i64: 1>, scalar_prefetch = 0 : i64, scratch_operands = 1 : i64, tpu.core_type = #tpu.core_type<tc>, window_params = [{transform_indices = @transform_0, window_bounds = array<i64: 16, 2048>}, {transform_indices = @transform_1, window_bounds = array<i64: 16, 2048>}, {transform_indices = @transform_2, window_bounds = array<i64: 16, 768>}, {pipeline_mode = #tpu.pipeline_mode<synchronous>, transform_indices = @transform_3, window_bounds = array<i64: 16, 128>}, {pipeline_mode = #tpu.pipeline_mode<synchronous>, transform_indices = @transform_4, window_bounds = array<i64: 2048, 128>}, {pipeline_mode = #tpu.pipeline_mode<synchronous>, transform_indices = @transform_5, window_bounds = array<i64: 768, 128>}, {pipeline_mode = #tpu.pipeline_mode<synchronous>, transform_indices = @transform_6, window_bounds = array<i64: 128, 512>}, {pipeline_mode = #tpu.pipeline_mode<synchronous>, transform_indices = @transform_7, window_bounds = array<i64: 1, 512>}, {pipeline_mode = #tpu.pipeline_mode<synchronous>, transform_indices = @transform_8, window_bounds = array<i64: 1, 512>}, {pipeline_mode = #tpu.pipeline_mode<synchronous>, transform_indices = @transform_9, window_bounds = array<i64: 1, 512>}, {pipeline_mode = #tpu.pipeline_mode<synchronous>, transform_indices = @transform_10, window_bounds = array<i64: 512, 128>}, {pipeline_mode = #tpu.pipeline_mode<synchronous>, transform_indices = @transform_11, window_bounds = array<i64: 128, 128>}, {pipeline_mode = #tpu.pipeline_mode<synchronous>, transform_indices = @transform_12, window_bounds = array<i64: 1, 128>}, {pipeline_mode = #tpu.pipeline_mode<synchronous>, transform_indices = @transform_13, window_bounds = array<i64: 1, 128>}, {pipeline_mode = #tpu.pipeline_mode<synchronous>, transform_indices = @transform_14, window_bounds = array<i64: 128, 128>}, {pipeline_mode = #tpu.pipeline_mode<synchronous>, transform_indices = @transform_15, window_bounds = array<i64: 16, 512>}, {pipeline_mode = #tpu.pipeline_mode<synchronous>, transform_indices = @transform_16, window_bounds = array<i64: 64, 128>}]} {
    %c0 = arith.constant 0 : index
    %c0_0 = arith.constant 0 : index
    %0 = vector.load %arg5[%c0, %c0_0] : memref<2048x128xbf16, #tpu.memory_space<vmem>>, vector<2048x128xbf16>
    %c0_1 = arith.constant 0 : index
    %c0_2 = arith.constant 0 : index
    %1 = vector.load %arg1[%c0_1, %c0_2] : memref<16x2048xbf16, #tpu.memory_space<vmem>>, vector<16x2048xbf16>
    %cst = arith.constant dense<0.000000e+00> : vector<16x128xf32>
    %2 = tpu.matmul %1, %0, %cst {dimension_numbers = #tpu.dot_dimension_numbers<[1], [0], [0], [1], [0, 0, 1, 1], [], []>} : vector<16x2048xbf16>, vector<2048x128xbf16>, vector<16x128xf32> -> vector<16x128xf32>
    %c0_3 = arith.constant 0 : index
    %c0_4 = arith.constant 0 : index
    %3 = vector.load %arg2[%c0_3, %c0_4] : memref<16x2048xbf16, #tpu.memory_space<vmem>>, vector<16x2048xbf16>
    %cst_5 = arith.constant dense<0.000000e+00> : vector<16x128xf32>
    %4 = tpu.matmul %3, %0, %cst_5 {dimension_numbers = #tpu.dot_dimension_numbers<[1], [0], [0], [1], [0, 0, 1, 1], [], []>} : vector<16x2048xbf16>, vector<2048x128xbf16>, vector<16x128xf32> -> vector<16x128xf32>
    %c0_6 = arith.constant 0 : index
    %c0_7 = arith.constant 0 : index
    %5 = vector.load %arg3[%c0_6, %c0_7] : memref<16x768xbf16, #tpu.memory_space<vmem>>, vector<16x768xbf16>
    %c0_8 = arith.constant 0 : index
    %c0_9 = arith.constant 0 : index
    %6 = vector.load %arg6[%c0_8, %c0_9] : memref<768x128xbf16, #tpu.memory_space<vmem>>, vector<768x128xbf16>
    %cst_10 = arith.constant dense<0.000000e+00> : vector<16x128xf32>
    %7 = tpu.matmul %5, %6, %cst_10 {dimension_numbers = #tpu.dot_dimension_numbers<[1], [0], [0], [1], [0, 0, 1, 1], [], []>} : vector<16x768xbf16>, vector<768x128xbf16>, vector<16x128xf32> -> vector<16x128xf32>
    %8 = arith.truncf %2 : vector<16x128xf32> to vector<16x128xbf16>
    %c16_i32 = arith.constant 16 : i32
    %9 = arith.muli %arg0, %c16_i32 : i32
    %10 = tpu.assume_multiple %9, 16 : i32
    %11 = arith.index_cast %10 : i32 to index
    %c0_11 = arith.constant 0 : index
    %12 = vector.load %arg18[%11, %c0_11] : memref<64x128xbf16, #tpu.memory_space<vmem>>, vector<16x128xbf16>
    tpu.vector_store %arg18[%11, %c0_11], %8 {strides = array<i32>} : memref<64x128xbf16, #tpu.memory_space<vmem>>, vector<16x128xbf16>,
    %13 = arith.truncf %4 : vector<16x128xf32> to vector<16x128xbf16>
    %c16_i32_12 = arith.constant 16 : i32
    %14 = arith.muli %arg0, %c16_i32_12 : i32
    %c16_i32_13 = arith.constant 16 : i32
    %15 = arith.addi %c16_i32_13, %14 : i32
    %16 = tpu.assume_multiple %15, 16 : i32
    %17 = arith.index_cast %16 : i32 to index
    %c0_14 = arith.constant 0 : index
    %18 = vector.load %arg18[%17, %c0_14] : memref<64x128xbf16, #tpu.memory_space<vmem>>, vector<16x128xbf16>
    tpu.vector_store %arg18[%17, %c0_14], %13 {strides = array<i32>} : memref<64x128xbf16, #tpu.memory_space<vmem>>, vector<16x128xbf16>,
    %19 = arith.truncf %7 : vector<16x128xf32> to vector<16x128xbf16>
    %c16_i32_15 = arith.constant 16 : i32
    %20 = arith.muli %arg0, %c16_i32_15 : i32
    %c32_i32 = arith.constant 32 : i32
    %21 = arith.addi %c32_i32, %20 : i32
    %22 = tpu.assume_multiple %21, 16 : i32
    %23 = arith.index_cast %22 : i32 to index
    %c0_16 = arith.constant 0 : index
    %24 = vector.load %arg18[%23, %c0_16] : memref<64x128xbf16, #tpu.memory_space<vmem>>, vector<16x128xbf16>
    tpu.vector_store %arg18[%23, %c0_16], %19 {strides = array<i32>} : memref<64x128xbf16, #tpu.memory_space<vmem>>, vector<16x128xbf16>,
    %c0_i32 = arith.constant 0 : i32
    %25 = arith.cmpi eq, %arg0, %c0_i32 : i32
    %26 = arith.extui %25 : i1 to i32
    %c0_i32_17 = arith.constant 0 : i32
    %27 = arith.cmpi ne, %26, %c0_i32_17 : i32
    scf.if %27 {
      %28 = tpu.iota {dimensions = array<i32: 0>} : vector<16x1xi32>
      %c2_i32 = arith.constant 2 : i32
      %29 = vector.broadcast %c2_i32 : i32 to vector<16x1xi32>
      %30 = arith.cmpi slt, %28, %29 : vector<16x1xi32>
      %31 = arith.extui %30 : vector<16x1xi1> to vector<16x1xi32>
      %32 = arith.sitofp %31 : vector<16x1xi32> to vector<16x1xf32>
      %c0_18 = arith.constant 0 : index
      %c0_19 = arith.constant 0 : index
      %33 = vector.load %arg4[%c0_18, %c0_19] : memref<16x128xbf16, #tpu.memory_space<vmem>>, vector<16x128xbf16>
      %c0_20 = arith.constant 0 : index
      %c0_21 = arith.constant 0 : index
      %34 = vector.load %arg7[%c0_20, %c0_21] : memref<128x512xbf16, #tpu.memory_space<vmem>>, vector<128x512xbf16>
      %cst_22 = arith.constant dense<0.000000e+00> : vector<16x512xf32>
      %35 = tpu.matmul %33, %34, %cst_22 {dimension_numbers = #tpu.dot_dimension_numbers<[1], [0], [0], [1], [0, 0, 1, 1], [], []>} : vector<16x128xbf16>, vector<128x512xbf16>, vector<16x512xf32> -> vector<16x512xf32>
      %c0_23 = arith.constant 0 : index
      %c0_24 = arith.constant 0 : index
      %36 = vector.load %arg8[%c0_23, %c0_24] : memref<1x512xf32, #tpu.memory_space<vmem>>, vector<1x512xf32>
      %37 = vector.broadcast %36 : vector<1x512xf32> to vector<16x512xf32>
      %38 = arith.addf %35, %37 : vector<16x512xf32>
      %c0_25 = arith.constant 0 : index
      %c0_26 = arith.constant 0 : index
      %39 = vector.load %arg9[%c0_25, %c0_26] : memref<1x512xf32, #tpu.memory_space<vmem>>, vector<1x512xf32>
      %c0_27 = arith.constant 0 : index
      %c0_28 = arith.constant 0 : index
      %40 = vector.load %arg10[%c0_27, %c0_28] : memref<1x512xf32, #tpu.memory_space<vmem>>, vector<1x512xf32>
      %41 = vector.broadcast %32 : vector<16x1xf32> to vector<16x512xf32>
      %42 = arith.mulf %38, %41 : vector<16x512xf32>
      %cst_29 = arith.constant dense<0.000000e+00> : vector<512xf32>
      %43 = vector.multi_reduction <add>, %42, %cst_29 [0] : vector<16x512xf32> to vector<512xf32>
      %44 = vector.shape_cast %43 : vector<512xf32> to vector<1x512xf32>
      %cst_30 = arith.constant 5.000000e-01 : f32
      %45 = vector.broadcast %cst_30 : f32 to vector<1x512xf32>
      %46 = arith.mulf %44, %45 : vector<1x512xf32>
      %47 = vector.broadcast %46 : vector<1x512xf32> to vector<16x512xf32>
      %48 = arith.subf %38, %47 : vector<16x512xf32>
      %49 = arith.mulf %48, %48 : vector<16x512xf32>
      %50 = vector.broadcast %32 : vector<16x1xf32> to vector<16x512xf32>
      %51 = arith.mulf %49, %50 : vector<16x512xf32>
      %cst_31 = arith.constant dense<0.000000e+00> : vector<512xf32>
      %52 = vector.multi_reduction <add>, %51, %cst_31 [0] : vector<16x512xf32> to vector<512xf32>
      %53 = vector.shape_cast %52 : vector<512xf32> to vector<1x512xf32>
      %cst_32 = arith.constant 5.000000e-01 : f32
      %54 = vector.broadcast %cst_32 : f32 to vector<1x512xf32>
      %55 = arith.mulf %53, %54 : vector<1x512xf32>
      %cst_33 = arith.constant 9.99999974E-6 : f32
      %56 = vector.broadcast %cst_33 : f32 to vector<1x512xf32>
      %57 = arith.addf %55, %56 : vector<1x512xf32>
      %58 = math.rsqrt %57 : vector<1x512xf32>
      %59 = vector.broadcast %58 : vector<1x512xf32> to vector<16x512xf32>
      %60 = arith.mulf %48, %59 : vector<16x512xf32>
      %61 = vector.broadcast %39 : vector<1x512xf32> to vector<16x512xf32>
      %62 = arith.mulf %60, %61 : vector<16x512xf32>
      %63 = vector.broadcast %40 : vector<1x512xf32> to vector<16x512xf32>
      %64 = arith.addf %62, %63 : vector<16x512xf32>
      %cst_34 = arith.constant 0.000000e+00 : f32
      %65 = vector.broadcast %cst_34 : f32 to vector<16x512xf32>
      %66 = arith.maximumf %64, %65 : vector<16x512xf32>
      %c0_35 = arith.constant 0 : index
      %c0_36 = arith.constant 0 : index
      %67 = vector.load %arg16[%c0_35, %c0_36] : memref<16x512xf32, #tpu.memory_space<vmem>>, vector<16x512xf32>
      tpu.vector_store %arg16[%c0_35, %c0_36], %66 {strides = array<i32>} : memref<16x512xf32, #tpu.memory_space<vmem>>, vector<16x512xf32>,
      %68 = vector.broadcast %32 : vector<16x1xf32> to vector<16x512xf32>
      %69 = arith.mulf %66, %68 : vector<16x512xf32>
      %70 = arith.truncf %69 : vector<16x512xf32> to vector<16x512xbf16>
      %c0_37 = arith.constant 0 : index
      %c0_38 = arith.constant 0 : index
      %71 = vector.load %arg11[%c0_37, %c0_38] : memref<512x128xbf16, #tpu.memory_space<vmem>>, vector<512x128xbf16>
      %cst_39 = arith.constant dense<0.000000e+00> : vector<16x128xf32>
      %72 = tpu.matmul %70, %71, %cst_39 {dimension_numbers = #tpu.dot_dimension_numbers<[1], [0], [0], [1], [0, 0, 1, 1], [], []>} : vector<16x512xbf16>, vector<512x128xbf16>, vector<16x128xf32> -> vector<16x128xf32>
      %73 = arith.truncf %72 : vector<16x128xf32> to vector<16x128xbf16>
      %c48 = arith.constant 48 : index
      %c0_40 = arith.constant 0 : index
      %74 = vector.load %arg18[%c48, %c0_40] : memref<64x128xbf16, #tpu.memory_space<vmem>>, vector<16x128xbf16>
      tpu.vector_store %arg18[%c48, %c0_40], %73 {strides = array<i32>} : memref<64x128xbf16, #tpu.memory_space<vmem>>, vector<16x128xbf16>,
      %75 = tpu.iota {dimensions = array<i32: 0>} : vector<64x1xi32>
      %c2_i32_41 = arith.constant 2 : i32
      %76 = vector.broadcast %c2_i32_41 : i32 to vector<64x1xi32>
      %77 = arith.cmpi slt, %75, %76 : vector<64x1xi32>
      %c16_i32_42 = arith.constant 16 : i32
      %78 = vector.broadcast %c16_i32_42 : i32 to vector<64x1xi32>
      %79 = arith.cmpi sge, %75, %78 : vector<64x1xi32>
      %c18_i32 = arith.constant 18 : i32
      %80 = vector.broadcast %c18_i32 : i32 to vector<64x1xi32>
      %81 = arith.cmpi slt, %75, %80 : vector<64x1xi32>
      %82 = arith.andi %79, %81 : vector<64x1xi1>
      %83 = arith.ori %77, %82 : vector<64x1xi1>
      %c32_i32_43 = arith.constant 32 : i32
      %84 = vector.broadcast %c32_i32_43 : i32 to vector<64x1xi32>
      %85 = arith.cmpi sge, %75, %84 : vector<64x1xi32>
      %c34_i32 = arith.constant 34 : i32
      %86 = vector.broadcast %c34_i32 : i32 to vector<64x1xi32>
      %87 = arith.cmpi slt, %75, %86 : vector<64x1xi32>
      %88 = arith.andi %85, %87 : vector<64x1xi1>
      %89 = arith.ori %83, %88 : vector<64x1xi1>
      %c48_i32 = arith.constant 48 : i32
      %90 = vector.broadcast %c48_i32 : i32 to vector<64x1xi32>
      %91 = arith.cmpi sge, %75, %90 : vector<64x1xi32>
      %c50_i32 = arith.constant 50 : i32
      %92 = vector.broadcast %c50_i32 : i32 to vector<64x1xi32>
      %93 = arith.cmpi slt, %75, %92 : vector<64x1xi32>
      %94 = arith.andi %91, %93 : vector<64x1xi1>
      %95 = arith.ori %89, %94 : vector<64x1xi1>
      %96 = arith.extui %95 : vector<64x1xi1> to vector<64x1xi32>
      %97 = arith.sitofp %96 : vector<64x1xi32> to vector<64x1xf32>
      %c0_44 = arith.constant 0 : index
      %c0_45 = arith.constant 0 : index
      %98 = vector.load %arg18[%c0_44, %c0_45] : memref<64x128xbf16, #tpu.memory_space<vmem>>, vector<64x128xbf16>
      %c0_46 = arith.constant 0 : index
      %c0_47 = arith.constant 0 : index
      %99 = vector.load %arg12[%c0_46, %c0_47] : memref<128x128xbf16, #tpu.memory_space<vmem>>, vector<128x128xbf16>
      %cst_48 = arith.constant dense<0.000000e+00> : vector<64x128xf32>
      %100 = tpu.matmul %98, %99, %cst_48 {dimension_numbers = #tpu.dot_dimension_numbers<[1], [0], [0], [1], [0, 0, 1, 1], [], []>} : vector<64x128xbf16>, vector<128x128xbf16>, vector<64x128xf32> -> vector<64x128xf32>
      %c0_49 = arith.constant 0 : index
      %c0_50 = arith.constant 0 : index
      %101 = vector.load %arg13[%c0_49, %c0_50] : memref<1x128xf32, #tpu.memory_space<vmem>>, vector<1x128xf32>
      %c0_51 = arith.constant 0 : index
      %c0_52 = arith.constant 0 : index
      %102 = vector.load %arg14[%c0_51, %c0_52] : memref<1x128xf32, #tpu.memory_space<vmem>>, vector<1x128xf32>
      %103 = vector.broadcast %97 : vector<64x1xf32> to vector<64x128xf32>
      %104 = arith.mulf %100, %103 : vector<64x128xf32>
      %cst_53 = arith.constant dense<0.000000e+00> : vector<128xf32>
      %105 = vector.multi_reduction <add>, %104, %cst_53 [0] : vector<64x128xf32> to vector<128xf32>
      %106 = vector.shape_cast %105 : vector<128xf32> to vector<1x128xf32>
      %cst_54 = arith.constant 1.250000e-01 : f32
      %107 = vector.broadcast %cst_54 : f32 to vector<1x128xf32>
      %108 = arith.mulf %106, %107 : vector<1x128xf32>
      %109 = vector.broadcast %108 : vector<1x128xf32> to vector<64x128xf32>
      %110 = arith.subf %100, %109 : vector<64x128xf32>
      %111 = arith.mulf %110, %110 : vector<64x128xf32>
      %112 = vector.broadcast %97 : vector<64x1xf32> to vector<64x128xf32>
      %113 = arith.mulf %111, %112 : vector<64x128xf32>
      %cst_55 = arith.constant dense<0.000000e+00> : vector<128xf32>
      %114 = vector.multi_reduction <add>, %113, %cst_55 [0] : vector<64x128xf32> to vector<128xf32>
      %115 = vector.shape_cast %114 : vector<128xf32> to vector<1x128xf32>
      %cst_56 = arith.constant 1.250000e-01 : f32
      %116 = vector.broadcast %cst_56 : f32 to vector<1x128xf32>
      %117 = arith.mulf %115, %116 : vector<1x128xf32>
      %cst_57 = arith.constant 9.99999974E-6 : f32
      %118 = vector.broadcast %cst_57 : f32 to vector<1x128xf32>
      %119 = arith.addf %117, %118 : vector<1x128xf32>
      %120 = math.rsqrt %119 : vector<1x128xf32>
      %121 = vector.broadcast %120 : vector<1x128xf32> to vector<64x128xf32>
      %122 = arith.mulf %110, %121 : vector<64x128xf32>
      %123 = vector.broadcast %101 : vector<1x128xf32> to vector<64x128xf32>
      %124 = arith.mulf %122, %123 : vector<64x128xf32>
      %125 = vector.broadcast %102 : vector<1x128xf32> to vector<64x128xf32>
      %126 = arith.addf %124, %125 : vector<64x128xf32>
      %cst_58 = arith.constant 0.000000e+00 : f32
      %127 = vector.broadcast %cst_58 : f32 to vector<64x128xf32>
      %128 = arith.maximumf %126, %127 : vector<64x128xf32>
      %129 = arith.truncf %128 : vector<64x128xf32> to vector<64x128xbf16>
      %c0_59 = arith.constant 0 : index
      %c0_60 = arith.constant 0 : index
      %130 = vector.load %arg15[%c0_59, %c0_60] : memref<128x128xbf16, #tpu.memory_space<vmem>>, vector<128x128xbf16>
      %cst_61 = arith.constant dense<0.000000e+00> : vector<64x128xf32>
      %131 = tpu.matmul %129, %130, %cst_61 {dimension_numbers = #tpu.dot_dimension_numbers<[1], [0], [0], [1], [0, 0, 1, 1], [], []>} : vector<64x128xbf16>, vector<128x128xbf16>, vector<64x128xf32> -> vector<64x128xf32>
      %132 = arith.mulf %131, %131 : vector<64x128xf32>
      %cst_62 = arith.constant dense<0.000000e+00> : vector<64xf32>
      %133 = vector.multi_reduction <add>, %132, %cst_62 [1] : vector<64x128xf32> to vector<64xf32>
      %134 = vector.shape_cast %133 : vector<64xf32> to vector<64x1xf32>
      %cst_63 = arith.constant 1.000000e-24 : f32
      %135 = vector.broadcast %cst_63 : f32 to vector<64x1xf32>
      %136 = arith.maximumf %134, %135 : vector<64x1xf32>
      %137 = math.rsqrt %136 : vector<64x1xf32>
      %138 = vector.broadcast %137 : vector<64x1xf32> to vector<64x128xf32>
      %139 = arith.mulf %131, %138 : vector<64x128xf32>
      %c0_64 = arith.constant 0 : index
      %c0_65 = arith.constant 0 : index
      %140 = vector.load %arg17[%c0_64, %c0_65] : memref<64x128xf32, #tpu.memory_space<vmem>>, vector<64x128xf32>
      tpu.vector_store %arg17[%c0_64, %c0_65], %139 {strides = array<i32>} : memref<64x128xf32, #tpu.memory_space<vmem>>, vector<64x128xf32>,
    } else {
    }
    return
  }
  func.func @transform_0(%arg0: i32) -> (i32, i32) {
    %c0_i32 = arith.constant 0 : i32
    %c0_i32_0 = arith.constant 0 : i32
    return %arg0, %c0_i32 : i32, i32
  }
  func.func @transform_1(%arg0: i32) -> (i32, i32) {
    %c0_i32 = arith.constant 0 : i32
    %c0_i32_0 = arith.constant 0 : i32
    return %arg0, %c0_i32 : i32, i32
  }
  func.func @transform_2(%arg0: i32) -> (i32, i32) {
    %c0_i32 = arith.constant 0 : i32
    %c0_i32_0 = arith.constant 0 : i32
    return %arg0, %c0_i32 : i32, i32
  }
  func.func @transform_3(%arg0: i32) -> (i32, i32) {
    %c0_i32 = arith.constant 0 : i32
    %c0_i32_0 = arith.constant 0 : i32
    %c0_i32_1 = arith.constant 0 : i32
    return %c0_i32, %c0_i32_0 : i32, i32
  }
  func.func @transform_4(%arg0: i32) -> (i32, i32) {
    %c0_i32 = arith.constant 0 : i32
    %c0_i32_0 = arith.constant 0 : i32
    %c0_i32_1 = arith.constant 0 : i32
    return %c0_i32, %c0_i32_0 : i32, i32
  }
  func.func @transform_5(%arg0: i32) -> (i32, i32) {
    %c0_i32 = arith.constant 0 : i32
    %c0_i32_0 = arith.constant 0 : i32
    %c0_i32_1 = arith.constant 0 : i32
    return %c0_i32, %c0_i32_0 : i32, i32
  }
  func.func @transform_6(%arg0: i32) -> (i32, i32) {
    %c0_i32 = arith.constant 0 : i32
    %c0_i32_0 = arith.constant 0 : i32
    %c0_i32_1 = arith.constant 0 : i32
    return %c0_i32, %c0_i32_0 : i32, i32
  }
  func.func @transform_7(%arg0: i32) -> (i32, i32) {
    %c0_i32 = arith.constant 0 : i32
    %c0_i32_0 = arith.constant 0 : i32
    %c0_i32_1 = arith.constant 0 : i32
    return %c0_i32, %c0_i32_0 : i32, i32
  }
  func.func @transform_8(%arg0: i32) -> (i32, i32) {
    %c0_i32 = arith.constant 0 : i32
    %c0_i32_0 = arith.constant 0 : i32
    %c0_i32_1 = arith.constant 0 : i32
    return %c0_i32, %c0_i32_0 : i32, i32
  }
  func.func @transform_9(%arg0: i32) -> (i32, i32) {
    %c0_i32 = arith.constant 0 : i32
    %c0_i32_0 = arith.constant 0 : i32
    %c0_i32_1 = arith.constant 0 : i32
    return %c0_i32, %c0_i32_0 : i32, i32
  }
  func.func @transform_10(%arg0: i32) -> (i32, i32) {
    %c0_i32 = arith.constant 0 : i32
    %c0_i32_0 = arith.constant 0 : i32
    %c0_i32_1 = arith.constant 0 : i32
    return %c0_i32, %c0_i32_0 : i32, i32
  }
  func.func @transform_11(%arg0: i32) -> (i32, i32) {
    %c0_i32 = arith.constant 0 : i32
    %c0_i32_0 = arith.constant 0 : i32
    %c0_i32_1 = arith.constant 0 : i32
    return %c0_i32, %c0_i32_0 : i32, i32
  }
  func.func @transform_12(%arg0: i32) -> (i32, i32) {
    %c0_i32 = arith.constant 0 : i32
    %c0_i32_0 = arith.constant 0 : i32
    %c0_i32_1 = arith.constant 0 : i32
    return %c0_i32, %c0_i32_0 : i32, i32
  }
  func.func @transform_13(%arg0: i32) -> (i32, i32) {
    %c0_i32 = arith.constant 0 : i32
    %c0_i32_0 = arith.constant 0 : i32
    %c0_i32_1 = arith.constant 0 : i32
    return %c0_i32, %c0_i32_0 : i32, i32
  }
  func.func @transform_14(%arg0: i32) -> (i32, i32) {
    %c0_i32 = arith.constant 0 : i32
    %c0_i32_0 = arith.constant 0 : i32
    %c0_i32_1 = arith.constant 0 : i32
    return %c0_i32, %c0_i32_0 : i32, i32
  }
  func.func @transform_15(%arg0: i32) -> (i32, i32) {
    %c0_i32 = arith.constant 0 : i32
    %c0_i32_0 = arith.constant 0 : i32
    %c0_i32_1 = arith.constant 0 : i32
    return %c0_i32, %c0_i32_0 : i32, i32
  }
  func.func @transform_16(%arg0: i32) -> (i32, i32) {
    %c0_i32 = arith.constant 0 : i32
    %c0_i32_0 = arith.constant 0 : i32
    %c0_i32_1 = arith.constant 0 : i32
    return %c0_i32, %c0_i32_0 : i32, i32
  }
}

</mosaic_0001>

<llo_original>
// kernel: tpu_custom_call.1
$region0: #{tpu_custom_call.1}
  #allocation0 [shape = 'u32[]', space=smem, size = 0x4, offset = 0x4, fixed_abs, tag = 'smem constant byte address 0x4 - core index']
  #allocation1 [shape = 'u32[144,128]{1,0:T(1,128)}', space=vmem, size = 0x12000, scoped, tag = 'internal scratch']
  #allocation2 [shape = 'bf16[64,128]{1,0:T(16,128)(2,1)}', space=vmem, size = 0x4000, scoped, tag = 'scratch operand']
  %s0 = inlined_call_operand.hbm [shape: bf16[16,2048], index: 0, kind: input, shape index: {}]
  %s1 = inlined_call_operand.hbm [shape: bf16[16,2048], index: 1, kind: input, shape index: {}]
  %s2 = inlined_call_operand.hbm [shape: bf16[16,768], index: 2, kind: input, shape index: {}]
  %s3 = inlined_call_operand.vmem [shape: bf16[16,128], index: 3, kind: input, shape index: {}]
  %s4 = inlined_call_operand.hbm [shape: bf16[2048,128], index: 4, kind: input, shape index: {}]
  %s5 = inlined_call_operand.hbm [shape: bf16[768,128], index: 5, kind: input, shape index: {}]
  %s6 = inlined_call_operand.hbm [shape: bf16[128,512], index: 6, kind: input, shape index: {}]
  %s7 = inlined_call_operand.vmem [shape: f32[1,512], index: 7, kind: input, shape index: {}]
  %s8 = inlined_call_operand.vmem [shape: f32[1,512], index: 8, kind: input, shape index: {}]
  %s9 = inlined_call_operand.vmem [shape: f32[1,512], index: 9, kind: input, shape index: {}]
  %s10 = inlined_call_operand.hbm [shape: bf16[512,128], index: 10, kind: input, shape index: {}]
  %s11 = inlined_call_operand.hbm [shape: bf16[128,128], index: 11, kind: input, shape index: {}]
  %s12 = inlined_call_operand.vmem [shape: f32[1,128], index: 12, kind: input, shape index: {}]
  %s13 = inlined_call_operand.vmem [shape: f32[1,128], index: 13, kind: input, shape index: {}]
  %s14 = inlined_call_operand.hbm [shape: bf16[128,128], index: 14, kind: input, shape index: {}]
  %s15 = inlined_call_operand.hbm [shape: f32[16,512], index: 15, kind: output, shape index: {0}]
  %s16 = inlined_call_operand.hbm [shape: f32[64,128], index: 16, kind: output, shape index: {1}]
  %17 = xla_tuple %s15, %s16
  %s18 = sld [smem:[#allocation0]]
  $region118: #{tpu_custom_call.1} parent=0
    _
  %s20 = ssub.s32 1, %s18
  %s21 = scalar_select 0, %s20, %s18
  $region1: #{tpu_custom_call.1} parent=0
    #allocation3 [shape = 'u8[65536]{0}', space=vmem, size = 0x10000, scoped, tag = 'input window, operand 0, single buffered']
    #allocation4 [shape = 's32[1]{0}', space=sflag, size = 0x4, scoped, tag = 'scoped memory for tpu_custom_call.1']
    #allocation5 [shape = 's32[1]{0}', space=sflag, size = 0x4, scoped, tag = 'scoped memory for tpu_custom_call.1']
    #allocation6 [shape = 'u8[65536]{0}', space=vmem, size = 0x10000, scoped, tag = 'input window, operand 1, single buffered']
    #allocation7 [shape = 's32[1]{0}', space=sflag, size = 0x4, scoped, tag = 'scoped memory for tpu_custom_call.1']
    #allocation8 [shape = 'u8[24576]{0}', space=vmem, size = 0x6000, scoped, tag = 'input window, operand 2, single buffered']
    #allocation9 [shape = 'u8[524288]{0}', space=vmem, size = 0x80000, scoped, tag = 'input window, operand 4, single buffered']
    #allocation10 [shape = 's32[1]{0}', space=sflag, size = 0x4, scoped, tag = 'scoped memory for tpu_custom_call.1']
    #allocation11 [shape = 'u8[196608]{0}', space=vmem, size = 0x30000, scoped, tag = 'input window, operand 5, single buffered']
    #allocation12 [shape = 'u8[131072]{0}', space=vmem, size = 0x20000, scoped, tag = 'input window, operand 6, single buffered']
    #allocation13 [shape = 's32[1]{0}', space=sflag, size = 0x4, scoped, tag = 'scoped memory for tpu_custom_call.1']
    #allocation14 [shape = 'u8[131072]{0}', space=vmem, size = 0x20000, scoped, tag = 'input window, operand 10, single buffered']
    #allocation15 [shape = 'u8[32768]{0}', space=vmem, size = 0x8000, scoped, tag = 'input window, operand 11, single buffered']
    #allocation16 [shape = 's32[1]{0}', space=sflag, size = 0x4, scoped, tag = 'scoped memory for tpu_custom_call.1']
    #allocation17 [shape = 'u8[32768]{0}', space=vmem, size = 0x8000, scoped, tag = 'input window, operand 14, single buffered']
    #allocation18 [shape = 'u8[32768]{0}', space=vmem, size = 0x8000, scoped, tag = 'output window, operand 0, single buffered']
    #allocation19 [shape = 'u8[32768]{0}', space=vmem, size = 0x8000, scoped, tag = 'output window, operand 1, single buffered']
    #allocation20 [shape = 's32[1]{0}', space=sflag, size = 0x4, scoped, tag = 'scoped memory for tpu_custom_call.1']
    %22 = vsyncpa [#allocation4], 0
    %23 = vsyncpa [#allocation7], 0
    %24 = vsyncpa [#allocation10], 0
    %25 = vsyncpa [#allocation13], 0
    %26 = vsyncpa [#allocation16], 0
    %27 = vsyncpa [#allocation5], 0
    %28 = vsyncpa [#allocation20], 0
    // Predicated region
    $region2: #{tpu_custom_call.1} parent=1 // pred_check
      _
    $region3: #{tpu_custom_call.1} parent=1 // pred_check_branch
      %30 = sbr.rel (0) target = $region5
    $region4: #{tpu_custom_call.1} parent=1 // pred_region
      %s32 = ssub.s32 2048, 2048
      %33 = vsyncadd [#allocation4], %s32
      %s34 = sshll.u32 [#allocation3], 4
      %s35 = int_to_ptr.vmem [resolvable:$true] %s34
      %40 = dma.hbm_to_vmem [thread:$0]  %s0, 2048, %s35, [#allocation4], 1024, 1024, 64
    $region5: #{tpu_custom_call.1} parent=1 // pred_fallthru
      _
    // Predicated region
    $region6: #{tpu_custom_call.1} parent=1 // pred_check
      _
    $region7: #{tpu_custom_call.1} parent=1 // pred_check_branch
      %42 = sbr.rel (0) target = $region9
    $region8: #{tpu_custom_call.1} parent=1 // pred_region
      %s44 = ssub.s32 2048, 2048
      %45 = vsyncadd [#allocation7], %s44
      %s46 = sshll.u32 [#allocation6], 4
      %s47 = int_to_ptr.vmem [resolvable:$true] %s46
      %52 = dma.hbm_to_vmem [thread:$0]  %s1, 2048, %s47, [#allocation7], 1024, 1024, 64
    $region9: #{tpu_custom_call.1} parent=1 // pred_fallthru
      _
    // Predicated region
    $region10: #{tpu_custom_call.1} parent=1 // pred_check
      _
    $region11: #{tpu_custom_call.1} parent=1 // pred_check_branch
      %54 = sbr.rel (0) target = $region13
    $region12: #{tpu_custom_call.1} parent=1 // pred_region
      %s56 = ssub.s32 768, 768
      %57 = vsyncadd [#allocation7], %s56
      %s58 = sshll.u32 [#allocation8], 4
      %s59 = int_to_ptr.vmem [resolvable:$true] %s58
      %64 = dma.hbm_to_vmem [thread:$0]  %s2, 768, %s59, [#allocation7], 384, 384, 24
    $region13: #{tpu_custom_call.1} parent=1 // pred_fallthru
      _
    // Predicated region
    $region14: #{tpu_custom_call.1} parent=1 // pred_check
      _
    $region15: #{tpu_custom_call.1} parent=1 // pred_check_branch
      %66 = sbr.rel (0) target = $region17
    $region16: #{tpu_custom_call.1} parent=1 // pred_region
      _
    $region17: #{tpu_custom_call.1} parent=1 // pred_fallthru
      _
    // Predicated region
    $region18: #{tpu_custom_call.1} parent=1 // pred_check
      _
    $region19: #{tpu_custom_call.1} parent=1 // pred_check_branch
      %68 = sbr.rel (0) target = $region21
    $region20: #{tpu_custom_call.1} parent=1 // pred_region
      %s70 = ssub.s32 16384, 16384
      %71 = vsyncadd [#allocation10], %s70
      %s72 = sshll.u32 [#allocation9], 4
      %s73 = int_to_ptr.vmem [resolvable:$true] %s72
      %78 = dma.hbm_to_vmem [thread:$0]  %s4, 16384, %s73, [#allocation10], 64, 64, 4
    $region21: #{tpu_custom_call.1} parent=1 // pred_fallthru
      _
    // Predicated region
    $region22: #{tpu_custom_call.1} parent=1 // pred_check
      _
    $region23: #{tpu_custom_call.1} parent=1 // pred_check_branch
      %80 = sbr.rel (0) target = $region25
    $region24: #{tpu_custom_call.1} parent=1 // pred_region
      %s82 = ssub.s32 6144, 6144
      %83 = vsyncadd [#allocation10], %s82
      %s84 = sshll.u32 [#allocation11], 4
      %s85 = int_to_ptr.vmem [resolvable:$true] %s84
      %90 = dma.hbm_to_vmem [thread:$0]  %s5, 6144, %s85, [#allocation10], 64, 64, 4
    $region25: #{tpu_custom_call.1} parent=1 // pred_fallthru
      _
    // Predicated region
    $region26: #{tpu_custom_call.1} parent=1 // pred_check
      _
    $region27: #{tpu_custom_call.1} parent=1 // pred_check_branch
      %92 = sbr.rel (0) target = $region29
    $region28: #{tpu_custom_call.1} parent=1 // pred_region
      %s94 = ssub.s32 4096, 4096
      %95 = vsyncadd [#allocation13], %s94
      %s96 = sshll.u32 [#allocation12], 4
      %s97 = int_to_ptr.vmem [resolvable:$true] %s96
      %102 = dma.hbm_to_vmem [thread:$0]  %s6, 4096, %s97, [#allocation13], 256, 256, 16
    $region29: #{tpu_custom_call.1} parent=1 // pred_fallthru
      _
    // Predicated region
    $region30: #{tpu_custom_call.1} parent=1 // pred_check
      _
    $region31: #{tpu_custom_call.1} parent=1 // pred_check_branch
      %104 = sbr.rel (0) target = $region33
    $region32: #{tpu_custom_call.1} parent=1 // pred_region
      _
    $region33: #{tpu_custom_call.1} parent=1 // pred_fallthru
      _
    // Predicated region
    $region34: #{tpu_custom_call.1} parent=1 // pred_check
      _
    $region35: #{tpu_custom_call.1} parent=1 // pred_check_branch
      %106 = sbr.rel (0) target = $region37
    $region36: #{tpu_custom_call.1} parent=1 // pred_region
      _
    $region37: #{tpu_custom_call.1} parent=1 // pred_fallthru
      _
    // Predicated region
    $region38: #{tpu_custom_call.1} parent=1 // pred_check
      _
    $region39: #{tpu_custom_call.1} parent=1 // pred_check_branch
      %108 = sbr.rel (0) target = $region41
    $region40: #{tpu_custom_call.1} parent=1 // pred_region
      _
    $region41: #{tpu_custom_call.1} parent=1 // pred_fallthru
      _
    // Predicated region
    $region42: #{tpu_custom_call.1} parent=1 // pred_check
      _
    $region43: #{tpu_custom_call.1} parent=1 // pred_check_branch
      %110 = sbr.rel (0) target = $region45
    $region44: #{tpu_custom_call.1} parent=1 // pred_region
      %s112 = ssub.s32 4096, 4096
      %113 = vsyncadd [#allocation13], %s112
      %s114 = sshll.u32 [#allocation14], 4
      %s115 = int_to_ptr.vmem [resolvable:$true] %s114
      %120 = dma.hbm_to_vmem [thread:$0]  %s10, 4096, %s115, [#allocation13], 64, 64, 4
    $region45: #{tpu_custom_call.1} parent=1 // pred_fallthru
      _
    // Predicated region
    $region46: #{tpu_custom_call.1} parent=1 // pred_check
      _
    $region47: #{tpu_custom_call.1} parent=1 // pred_check_branch
      %122 = sbr.rel (0) target = $region49
    $region48: #{tpu_custom_call.1} parent=1 // pred_region
      %s124 = ssub.s32 1024, 1024
      %125 = vsyncadd [#allocation16], %s124
      %s126 = sshll.u32 [#allocation15], 4
      %s127 = int_to_ptr.vmem [resolvable:$true] %s126
      %132 = dma.hbm_to_vmem [thread:$0]  %s11, 1024, %s127, [#allocation16], 64, 64, 4
    $region49: #{tpu_custom_call.1} parent=1 // pred_fallthru
      _
    // Predicated region
    $region50: #{tpu_custom_call.1} parent=1 // pred_check
      _
    $region51: #{tpu_custom_call.1} parent=1 // pred_check_branch
      %134 = sbr.rel (0) target = $region53
    $region52: #{tpu_custom_call.1} parent=1 // pred_region
      _
    $region53: #{tpu_custom_call.1} parent=1 // pred_fallthru
      _
    // Predicated region
    $region54: #{tpu_custom_call.1} parent=1 // pred_check
      _
    $region55: #{tpu_custom_call.1} parent=1 // pred_check_branch
      %136 = sbr.rel (0) target = $region57
    $region56: #{tpu_custom_call.1} parent=1 // pred_region
      _
    $region57: #{tpu_custom_call.1} parent=1 // pred_fallthru
      _
    // Predicated region
    $region58: #{tpu_custom_call.1} parent=1 // pred_check
      _
    $region59: #{tpu_custom_call.1} parent=1 // pred_check_branch
      %138 = sbr.rel (0) target = $region61
    $region60: #{tpu_custom_call.1} parent=1 // pred_region
      %s140 = ssub.s32 1024, 1024
      %141 = vsyncadd [#allocation16], %s140
      %s142 = sshll.u32 [#allocation17], 4
      %s143 = int_to_ptr.vmem [resolvable:$true] %s142
      %148 = dma.hbm_to_vmem [thread:$0]  %s14, 1024, %s143, [#allocation16], 64, 64, 4
    $region61: #{tpu_custom_call.1} parent=1 // pred_fallthru
      _
    // Predicated region
    $region62: #{tpu_custom_call.1} parent=1 // pred_check
      _
    $region63: #{tpu_custom_call.1} parent=1 // pred_check_branch
      %150 = sbr.rel (0) target = $region65
    $region64: #{tpu_custom_call.1} parent=1 // pred_region
      %151 = dma.done [#allocation4], 2048
    $region65: #{tpu_custom_call.1} parent=1 // pred_fallthru
      _
    // Predicated region
    $region66: #{tpu_custom_call.1} parent=1 // pred_check
      _
    $region67: #{tpu_custom_call.1} parent=1 // pred_check_branch
      %153 = sbr.rel (0) target = $region69
    $region68: #{tpu_custom_call.1} parent=1 // pred_region
      %154 = dma.done [#allocation7], 2048
    $region69: #{tpu_custom_call.1} parent=1 // pred_fallthru
      _
    // Predicated region
    $region70: #{tpu_custom_call.1} parent=1 // pred_check
      _
    $region71: #{tpu_custom_call.1} parent=1 // pred_check_branch
      %156 = sbr.rel (0) target = $region73
    $region72: #{tpu_custom_call.1} parent=1 // pred_region
      %157 = dma.done [#allocation7], 768
    $region73: #{tpu_custom_call.1} parent=1 // pred_fallthru
      _
    // Predicated region
    $region74: #{tpu_custom_call.1} parent=1 // pred_check
      _
    $region75: #{tpu_custom_call.1} parent=1 // pred_check_branch
      %159 = sbr.rel (0) target = $region77
    $region76: #{tpu_custom_call.1} parent=1 // pred_region
      %160 = dma.done [#allocation10], 16384
    $region77: #{tpu_custom_call.1} parent=1 // pred_fallthru
      _
    // Predicated region
    $region78: #{tpu_custom_call.1} parent=1 // pred_check
      _
    $region79: #{tpu_custom_call.1} parent=1 // pred_check_branch
      %162 = sbr.rel (0) target = $region81
    $region80: #{tpu_custom_call.1} parent=1 // pred_region
      %163 = dma.done [#allocation10], 6144
    $region81: #{tpu_custom_call.1} parent=1 // pred_fallthru
      _
    // Predicated region
    $region82: #{tpu_custom_call.1} parent=1 // pred_check
      _
    $region83: #{tpu_custom_call.1} parent=1 // pred_check_branch
      %165 = sbr.rel (0) target = $region85
    $region84: #{tpu_custom_call.1} parent=1 // pred_region
      %166 = dma.done [#allocation13], 4096
    $region85: #{tpu_custom_call.1} parent=1 // pred_fallthru
      _
    // Predicated region
    $region86: #{tpu_custom_call.1} parent=1 // pred_check
      _
    $region87: #{tpu_custom_call.1} parent=1 // pred_check_branch
      %168 = sbr.rel (0) target = $region89
    $region88: #{tpu_custom_call.1} parent=1 // pred_region
      %169 = dma.done [#allocation13], 4096
    $region89: #{tpu_custom_call.1} parent=1 // pred_fallthru
      _
    // Predicated region
    $region90: #{tpu_custom_call.1} parent=1 // pred_check
      _
    $region91: #{tpu_custom_call.1} parent=1 // pred_check_branch
      %171 = sbr.rel (0) target = $region93
    $region92: #{tpu_custom_call.1} parent=1 // pred_region
      %172 = dma.done [#allocation16], 1024
    $region93: #{tpu_custom_call.1} parent=1 // pred_fallthru
      _
    // Predicated region
    $region94: #{tpu_custom_call.1} parent=1 // pred_check
      _
    $region95: #{tpu_custom_call.1} parent=1 // pred_check_branch
      %174 = sbr.rel (0) target = $region97
    $region96: #{tpu_custom_call.1} parent=1 // pred_region
      %175 = dma.done [#allocation16], 1024
    $region97: #{tpu_custom_call.1} parent=1 // pred_fallthru
      _
    %v177 = vld [vmem:[#allocation9] sm:$0xf]
    %v178 = vld [vmem:[#allocation9 + $0x4] sm:$0xf]
    %v179 = vld [vmem:[#allocation9 + $0x8] sm:$0xf]
    %v180 = vld [vmem:[#allocation9 + $0xc] sm:$0xf]
    %v181 = vld [vmem:[#allocation9 + $0x10] sm:$0xf]
    %v182 = vld [vmem:[#allocation9 + $0x14] sm:$0xf]
    %v183 = vld [vmem:[#allocation9 + $0x18] sm:$0xf]
    %v184 = vld [vmem:[#allocation9 + $0x1c] sm:$0xf]
    %v185 = vld [vmem:[#allocation9 + $0x20] sm:$0xf]
    %v186 = vld [vmem:[#allocation9 + $0x24] sm:$0xf]
    %v187 = vld [vmem:[#allocation9 + $0x28] sm:$0xf]
    %v188 = vld [vmem:[#allocation9 + $0x2c] sm:$0xf]
    %v189 = vld [vmem:[#allocation9 + $0x30] sm:$0xf]
    %v190 = vld [vmem:[#allocation9 + $0x34] sm:$0xf]
    %v191 = vld [vmem:[#allocation9 + $0x38] sm:$0xf]
    %v192 = vld [vmem:[#allocation9 + $0x3c] sm:$0xf]
    %v193 = vld [vmem:[#allocation9 + $0x40] sm:$0xf]
    %v194 = vld [vmem:[#allocation9 + $0x44] sm:$0xf]
    %v195 = vld [vmem:[#allocation9 + $0x48] sm:$0xf]
    %v196 = vld [vmem:[#allocation9 + $0x4c] sm:$0xf]
    %v197 = vld [vmem:[#allocation9 + $0x50] sm:$0xf]
    %v198 = vld [vmem:[#allocation9 + $0x54] sm:$0xf]
    %v199 = vld [vmem:[#allocation9 + $0x58] sm:$0xf]
    %v200 = vld [vmem:[#allocation9 + $0x5c] sm:$0xf]
    %v201 = vld [vmem:[#allocation9 + $0x60] sm:$0xf]
    %v202 = vld [vmem:[#allocation9 + $0x64] sm:$0xf]
    %v203 = vld [vmem:[#allocation9 + $0x68] sm:$0xf]
    %v204 = vld [vmem:[#allocation9 + $0x6c] sm:$0xf]
    %v205 = vld [vmem:[#allocation9 + $0x70] sm:$0xf]
    %v206 = vld [vmem:[#allocation9 + $0x74] sm:$0xf]
    %v207 = vld [vmem:[#allocation9 + $0x78] sm:$0xf]
    %v208 = vld [vmem:[#allocation9 + $0x7c] sm:$0xf]
    %v209 = vld [vmem:[#allocation9 + $0x80] sm:$0xf]
    %v210 = vld [vmem:[#allocation9 + $0x84] sm:$0xf]
    %v211 = vld [vmem:[#allocation9 + $0x88] sm:$0xf]
    %v212 = vld [vmem:[#allocation9 + $0x8c] sm:$0xf]
    %v213 = vld [vmem:[#allocation9 + $0x90] sm:$0xf]
    %v214 = vld [vmem:[#allocation9 + $0x94] sm:$0xf]
    %v215 = vld [vmem:[#allocation9 + $0x98] sm:$0xf]
    %v216 = vld [vmem:[#allocation9 + $0x9c] sm:$0xf]
    %v217 = vld [vmem:[#allocation9 + $0xa0] sm:$0xf]
    %v218 = vld [vmem:[#allocation9 + $0xa4] sm:$0xf]
    %v219 = vld [vmem:[#allocation9 + $0xa8] sm:$0xf]
    %v220 = vld [vmem:[#allocation9 + $0xac] sm:$0xf]
    %v221 = vld [vmem:[#allocation9 + $0xb0] sm:$0xf]
    %v222 = vld [vmem:[#allocation9 + $0xb4] sm:$0xf]
    %v223 = vld [vmem:[#allocation9 + $0xb8] sm:$0xf]
    %v224 = vld [vmem:[#allocation9 + $0xbc] sm:$0xf]
    %v225 = vld [vmem:[#allocation9 + $0xc0] sm:$0xf]
    %v226 = vld [vmem:[#allocation9 + $0xc4] sm:$0xf]
    %v227 = vld [vmem:[#allocation9 + $0xc8] sm:$0xf]
    %v228 = vld [vmem:[#allocation9 + $0xcc] sm:$0xf]
    %v229 = vld [vmem:[#allocation9 + $0xd0] sm:$0xf]
    %v230 = vld [vmem:[#allocation9 + $0xd4] sm:$0xf]
    %v231 = vld [vmem:[#allocation9 + $0xd8] sm:$0xf]
    %v232 = vld [vmem:[#allocation9 + $0xdc] sm:$0xf]
    %v233 = vld [vmem:[#allocation9 + $0xe0] sm:$0xf]
    %v234 = vld [vmem:[#allocation9 + $0xe4] sm:$0xf]
    %v235 = vld [vmem:[#allocation9 + $0xe8] sm:$0xf]
    %v236 = vld [vmem:[#allocation9 + $0xec] sm:$0xf]
    %v237 = vld [vmem:[#allocation9 + $0xf0] sm:$0xf]
    %v238 = vld [vmem:[#allocation9 + $0xf4] sm:$0xf]
    %v239 = vld [vmem:[#allocation9 + $0xf8] sm:$0xf]
    %v240 = vld [vmem:[#allocation9 + $0xfc] sm:$0xf]
    %v241 = vld [vmem:[#allocation9 + $0x100] sm:$0xf]
    %v242 = vld [vmem:[#allocation9 + $0x104] sm:$0xf]
    %v243 = vld [vmem:[#allocation9 + $0x108] sm:$0xf]
    %v244 = vld [vmem:[#allocation9 + $0x10c] sm:$0xf]
    %v245 = vld [vmem:[#allocation9 + $0x110] sm:$0xf]
    %v246 = vld [vmem:[#allocation9 + $0x114] sm:$0xf]
    %v247 = vld [vmem:[#allocation9 + $0x118] sm:$0xf]
    %v248 = vld [vmem:[#allocation9 + $0x11c] sm:$0xf]
    %v249 = vld [vmem:[#allocation9 + $0x120] sm:$0xf]
    %v250 = vld [vmem:[#allocation9 + $0x124] sm:$0xf]
    %v251 = vld [vmem:[#allocation9 + $0x128] sm:$0xf]
    %v252 = vld [vmem:[#allocation9 + $0x12c] sm:$0xf]
    %v253 = vld [vmem:[#allocation9 + $0x130] sm:$0xf]
    %v254 = vld [vmem:[#allocation9 + $0x134] sm:$0xf]
    %v255 = vld [vmem:[#allocation9 + $0x138] sm:$0xf]
    %v256 = vld [vmem:[#allocation9 + $0x13c] sm:$0xf]
    %v257 = vld [vmem:[#allocation9 + $0x140] sm:$0xf]
    %v258 = vld [vmem:[#allocation9 + $0x144] sm:$0xf]
    %v259 = vld [vmem:[#allocation9 + $0x148] sm:$0xf]
    %v260 = vld [vmem:[#allocation9 + $0x14c] sm:$0xf]
    %v261 = vld [vmem:[#allocation9 + $0x150] sm:$0xf]
    %v262 = vld [vmem:[#allocation9 + $0x154] sm:$0xf]
    %v263 = vld [vmem:[#allocation9 + $0x158] sm:$0xf]
    %v264 = vld [vmem:[#allocation9 + $0x15c] sm:$0xf]
    %v265 = vld [vmem:[#allocation9 + $0x160] sm:$0xf]
    %v266 = vld [vmem:[#allocation9 + $0x164] sm:$0xf]
    %v267 = vld [vmem:[#allocation9 + $0x168] sm:$0xf]
    %v268 = vld [vmem:[#allocation9 + $0x16c] sm:$0xf]
    %v269 = vld [vmem:[#allocation9 + $0x170] sm:$0xf]
    %v270 = vld [vmem:[#allocation9 + $0x174] sm:$0xf]
    %v271 = vld [vmem:[#allocation9 + $0x178] sm:$0xf]
    %v272 = vld [vmem:[#allocation9 + $0x17c] sm:$0xf]
    %v273 = vld [vmem:[#allocation9 + $0x180] sm:$0xf]
    %v274 = vld [vmem:[#allocation9 + $0x184] sm:$0xf]
    %v275 = vld [vmem:[#allocation9 + $0x188] sm:$0xf]
    %v276 = vld [vmem:[#allocation9 + $0x18c] sm:$0xf]
    %v277 = vld [vmem:[#allocation9 + $0x190] sm:$0xf]
    %v278 = vld [vmem:[#allocation9 + $0x194] sm:$0xf]
    %v279 = vld [vmem:[#allocation9 + $0x198] sm:$0xf]
    %v280 = vld [vmem:[#allocation9 + $0x19c] sm:$0xf]
    %v281 = vld [vmem:[#allocation9 + $0x1a0] sm:$0xf]
    %v282 = vld [vmem:[#allocation9 + $0x1a4] sm:$0xf]
    %v283 = vld [vmem:[#allocation9 + $0x1a8] sm:$0xf]
    %v284 = vld [vmem:[#allocation9 + $0x1ac] sm:$0xf]
    %v285 = vld [vmem:[#allocation9 + $0x1b0] sm:$0xf]
    %v286 = vld [vmem:[#allocation9 + $0x1b4] sm:$0xf]
    %v287 = vld [vmem:[#allocation9 + $0x1b8] sm:$0xf]
    %v288 = vld [vmem:[#allocation9 + $0x1bc] sm:$0xf]
    %v289 = vld [vmem:[#allocation9 + $0x1c0] sm:$0xf]
    %v290 = vld [vmem:[#allocation9 + $0x1c4] sm:$0xf]
    %v291 = vld [vmem:[#allocation9 + $0x1c8] sm:$0xf]
    %v292 = vld [vmem:[#allocation9 + $0x1cc] sm:$0xf]
    %v293 = vld [vmem:[#allocation9 + $0x1d0] sm:$0xf]
    %v294 = vld [vmem:[#allocation9 + $0x1d4] sm:$0xf]
    %v295 = vld [vmem:[#allocation9 + $0x1d8] sm:$0xf]
    %v296 = vld [vmem:[#allocation9 + $0x1dc] sm:$0xf]
    %v297 = vld [vmem:[#allocation9 + $0x1e0] sm:$0xf]
    %v298 = vld [vmem:[#allocation9 + $0x1e4] sm:$0xf]
    %v299 = vld [vmem:[#allocation9 + $0x1e8] sm:$0xf]
    %v300 = vld [vmem:[#allocation9 + $0x1ec] sm:$0xf]
    %v301 = vld [vmem:[#allocation9 + $0x1f0] sm:$0xf]
    %v302 = vld [vmem:[#allocation9 + $0x1f4] sm:$0xf]
    %v303 = vld [vmem:[#allocation9 + $0x1f8] sm:$0xf]
    %v304 = vld [vmem:[#allocation9 + $0x1fc] sm:$0xf]
    %v305 = vld [vmem:[#allocation9 + $0x200] sm:$0xf]
    %v306 = vld [vmem:[#allocation9 + $0x204] sm:$0xf]
    %v307 = vld [vmem:[#allocation9 + $0x208] sm:$0xf]
    %v308 = vld [vmem:[#allocation9 + $0x20c] sm:$0xf]
    %v309 = vld [vmem:[#allocation9 + $0x210] sm:$0xf]
    %v310 = vld [vmem:[#allocation9 + $0x214] sm:$0xf]
    %v311 = vld [vmem:[#allocation9 + $0x218] sm:$0xf]
    %v312 = vld [vmem:[#allocation9 + $0x21c] sm:$0xf]
    %v313 = vld [vmem:[#allocation9 + $0x220] sm:$0xf]
    %v314 = vld [vmem:[#allocation9 + $0x224] sm:$0xf]
    %v315 = vld [vmem:[#allocation9 + $0x228] sm:$0xf]
    %v316 = vld [vmem:[#allocation9 + $0x22c] sm:$0xf]
    %v317 = vld [vmem:[#allocation9 + $0x230] sm:$0xf]
    %v318 = vld [vmem:[#allocation9 + $0x234] sm:$0xf]
    %v319 = vld [vmem:[#allocation9 + $0x238] sm:$0xf]
    %v320 = vld [vmem:[#allocation9 + $0x23c] sm:$0xf]
    %v321 = vld [vmem:[#allocation9 + $0x240] sm:$0xf]
    %v322 = vld [vmem:[#allocation9 + $0x244] sm:$0xf]
    %v323 = vld [vmem:[#allocation9 + $0x248] sm:$0xf]
    %v324 = vld [vmem:[#allocation9 + $0x24c] sm:$0xf]
    %v325 = vld [vmem:[#allocation9 + $0x250] sm:$0xf]
    %v326 = vld [vmem:[#allocation9 + $0x254] sm:$0xf]
    %v327 = vld [vmem:[#allocation9 + $0x258] sm:$0xf]
    %v328 = vld [vmem:[#allocation9 + $0x25c] sm:$0xf]
    %v329 = vld [vmem:[#allocation9 + $0x260] sm:$0xf]
    %v330 = vld [vmem:[#allocation9 + $0x264] sm:$0xf]
    %v331 = vld [vmem:[#allocation9 + $0x268] sm:$0xf]
    %v332 = vld [vmem:[#allocation9 + $0x26c] sm:$0xf]
    %v333 = vld [vmem:[#allocation9 + $0x270] sm:$0xf]
    %v334 = vld [vmem:[#allocation9 + $0x274] sm:$0xf]
    %v335 = vld [vmem:[#allocation9 + $0x278] sm:$0xf]
    %v336 = vld [vmem:[#allocation9 + $0x27c] sm:$0xf]
    %v337 = vld [vmem:[#allocation9 + $0x280] sm:$0xf]
    %v338 = vld [vmem:[#allocation9 + $0x284] sm:$0xf]
    %v339 = vld [vmem:[#allocation9 + $0x288] sm:$0xf]
    %v340 = vld [vmem:[#allocation9 + $0x28c] sm:$0xf]
    %v341 = vld [vmem:[#allocation9 + $0x290] sm:$0xf]
    %v342 = vld [vmem:[#allocation9 + $0x294] sm:$0xf]
    %v343 = vld [vmem:[#allocation9 + $0x298] sm:$0xf]
    %v344 = vld [vmem:[#allocation9 + $0x29c] sm:$0xf]
    %v345 = vld [vmem:[#allocation9 + $0x2a0] sm:$0xf]
    %v346 = vld [vmem:[#allocation9 + $0x2a4] sm:$0xf]
    %v347 = vld [vmem:[#allocation9 + $0x2a8] sm:$0xf]
    %v348 = vld [vmem:[#allocation9 + $0x2ac] sm:$0xf]
    %v349 = vld [vmem:[#allocation9 + $0x2b0] sm:$0xf]
    %v350 = vld [vmem:[#allocation9 + $0x2b4] sm:$0xf]
    %v351 = vld [vmem:[#allocation9 + $0x2b8] sm:$0xf]
    %v352 = vld [vmem:[#allocation9 + $0x2bc] sm:$0xf]
    %v353 = vld [vmem:[#allocation9 + $0x2c0] sm:$0xf]
    %v354 = vld [vmem:[#allocation9 + $0x2c4] sm:$0xf]
    %v355 = vld [vmem:[#allocation9 + $0x2c8] sm:$0xf]
    %v356 = vld [vmem:[#allocation9 + $0x2cc] sm:$0xf]
    %v357 = vld [vmem:[#allocation9 + $0x2d0] sm:$0xf]
    %v358 = vld [vmem:[#allocation9 + $0x2d4] sm:$0xf]
    %v359 = vld [vmem:[#allocation9 + $0x2d8] sm:$0xf]
    %v360 = vld [vmem:[#allocation9 + $0x2dc] sm:$0xf]
    %v361 = vld [vmem:[#allocation9 + $0x2e0] sm:$0xf]
    %v362 = vld [vmem:[#allocation9 + $0x2e4] sm:$0xf]
    %v363 = vld [vmem:[#allocation9 + $0x2e8] sm:$0xf]
    %v364 = vld [vmem:[#allocation9 + $0x2ec] sm:$0xf]
    %v365 = vld [vmem:[#allocation9 + $0x2f0] sm:$0xf]
    %v366 = vld [vmem:[#allocation9 + $0x2f4] sm:$0xf]
    %v367 = vld [vmem:[#allocation9 + $0x2f8] sm:$0xf]
    %v368 = vld [vmem:[#allocation9 + $0x2fc] sm:$0xf]
    %v369 = vld [vmem:[#allocation9 + $0x300] sm:$0xf]
    %v370 = vld [vmem:[#allocation9 + $0x304] sm:$0xf]
    %v371 = vld [vmem:[#allocation9 + $0x308] sm:$0xf]
    %v372 = vld [vmem:[#allocation9 + $0x30c] sm:$0xf]
    %v373 = vld [vmem:[#allocation9 + $0x310] sm:$0xf]
    %v374 = vld [vmem:[#allocation9 + $0x314] sm:$0xf]
    %v375 = vld [vmem:[#allocation9 + $0x318] sm:$0xf]
    %v376 = vld [vmem:[#allocation9 + $0x31c] sm:$0xf]
    %v377 = vld [vmem:[#allocation9 + $0x320] sm:$0xf]
    %v378 = vld [vmem:[#allocation9 + $0x324] sm:$0xf]
    %v379 = vld [vmem:[#allocation9 + $0x328] sm:$0xf]
    %v380 = vld [vmem:[#allocation9 + $0x32c] sm:$0xf]
    %v381 = vld [vmem:[#allocation9 + $0x330] sm:$0xf]
    %v382 = vld [vmem:[#allocation9 + $0x334] sm:$0xf]
    %v383 = vld [vmem:[#allocation9 + $0x338] sm:$0xf]
    %v384 = vld [vmem:[#allocation9 + $0x33c] sm:$0xf]
    %v385 = vld [vmem:[#allocation9 + $0x340] sm:$0xf]
    %v386 = vld [vmem:[#allocation9 + $0x344] sm:$0xf]
    %v387 = vld [vmem:[#allocation9 + $0x348] sm:$0xf]
    %v388 = vld [vmem:[#allocation9 + $0x34c] sm:$0xf]
    %v389 = vld [vmem:[#allocation9 + $0x350] sm:$0xf]
    %v390 = vld [vmem:[#allocation9 + $0x354] sm:$0xf]
    %v391 = vld [vmem:[#allocation9 + $0x358] sm:$0xf]
    %v392 = vld [vmem:[#allocation9 + $0x35c] sm:$0xf]
    %v393 = vld [vmem:[#allocation9 + $0x360] sm:$0xf]
    %v394 = vld [vmem:[#allocation9 + $0x364] sm:$0xf]
    %v395 = vld [vmem:[#allocation9 + $0x368] sm:$0xf]
    %v396 = vld [vmem:[#allocation9 + $0x36c] sm:$0xf]
    %v397 = vld [vmem:[#allocation9 + $0x370] sm:$0xf]
    %v398 = vld [vmem:[#allocation9 + $0x374] sm:$0xf]
    %v399 = vld [vmem:[#allocation9 + $0x378] sm:$0xf]
    %v400 = vld [vmem:[#allocation9 + $0x37c] sm:$0xf]
    %v401 = vld [vmem:[#allocation9 + $0x380] sm:$0xf]
    %v402 = vld [vmem:[#allocation9 + $0x384] sm:$0xf]
    %v403 = vld [vmem:[#allocation9 + $0x388] sm:$0xf]
    %v404 = vld [vmem:[#allocation9 + $0x38c] sm:$0xf]
    %v405 = vld [vmem:[#allocation9 + $0x390] sm:$0xf]
    %v406 = vld [vmem:[#allocation9 + $0x394] sm:$0xf]
    %v407 = vld [vmem:[#allocation9 + $0x398] sm:$0xf]
    %v408 = vld [vmem:[#allocation9 + $0x39c] sm:$0xf]
    %v409 = vld [vmem:[#allocation9 + $0x3a0] sm:$0xf]
    %v410 = vld [vmem:[#allocation9 + $0x3a4] sm:$0xf]
    %v411 = vld [vmem:[#allocation9 + $0x3a8] sm:$0xf]
    %v412 = vld [vmem:[#allocation9 + $0x3ac] sm:$0xf]
    %v413 = vld [vmem:[#allocation9 + $0x3b0] sm:$0xf]
    %v414 = vld [vmem:[#allocation9 + $0x3b4] sm:$0xf]
    %v415 = vld [vmem:[#allocation9 + $0x3b8] sm:$0xf]
    %v416 = vld [vmem:[#allocation9 + $0x3bc] sm:$0xf]
    %v417 = vld [vmem:[#allocation9 + $0x3c0] sm:$0xf]
    %v418 = vld [vmem:[#allocation9 + $0x3c4] sm:$0xf]
    %v419 = vld [vmem:[#allocation9 + $0x3c8] sm:$0xf]
    %v420 = vld [vmem:[#allocation9 + $0x3cc] sm:$0xf]
    %v421 = vld [vmem:[#allocation9 + $0x3d0] sm:$0xf]
    %v422 = vld [vmem:[#allocation9 + $0x3d4] sm:$0xf]
    %v423 = vld [vmem:[#allocation9 + $0x3d8] sm:$0xf]
    %v424 = vld [vmem:[#allocation9 + $0x3dc] sm:$0xf]
    %v425 = vld [vmem:[#allocation9 + $0x3e0] sm:$0xf]
    %v426 = vld [vmem:[#allocation9 + $0x3e4] sm:$0xf]
    %v427 = vld [vmem:[#allocation9 + $0x3e8] sm:$0xf]
    %v428 = vld [vmem:[#allocation9 + $0x3ec] sm:$0xf]
    %v429 = vld [vmem:[#allocation9 + $0x3f0] sm:$0xf]
    %v430 = vld [vmem:[#allocation9 + $0x3f4] sm:$0xf]
    %v431 = vld [vmem:[#allocation9 + $0x3f8] sm:$0xf]
    %v432 = vld [vmem:[#allocation9 + $0x3fc] sm:$0xf]
    %v433 = vld [vmem:[#allocation3] sm:$0xff]
    %v434 = vld [vmem:[#allocation3 + $0x8] sm:$0xff]
    %v435 = vld [vmem:[#allocation3 + $0x10] sm:$0xff]
    %v436 = vld [vmem:[#allocation3 + $0x18] sm:$0xff]
    %v437 = vld [vmem:[#allocation3 + $0x20] sm:$0xff]
    %v438 = vld [vmem:[#allocation3 + $0x28] sm:$0xff]
    %v439 = vld [vmem:[#allocation3 + $0x30] sm:$0xff]
    %v440 = vld [vmem:[#allocation3 + $0x38] sm:$0xff]
    %v441 = vld [vmem:[#allocation3 + $0x40] sm:$0xff]
    %v442 = vld [vmem:[#allocation3 + $0x48] sm:$0xff]
    %v443 = vld [vmem:[#allocation3 + $0x50] sm:$0xff]
    %v444 = vld [vmem:[#allocation3 + $0x58] sm:$0xff]
    %v445 = vld [vmem:[#allocation3 + $0x60] sm:$0xff]
    %v446 = vld [vmem:[#allocation3 + $0x68] sm:$0xff]
    %v447 = vld [vmem:[#allocation3 + $0x70] sm:$0xff]
    %v448 = vld [vmem:[#allocation3 + $0x78] sm:$0xff]
    %v465 = vunpack.c.l.b16 %v433
    %v466 = vunpack.c.h.b16 %v433
    %v467 = vunpack.c.l.b16 %v434
    %v468 = vunpack.c.h.b16 %v434
    %v469 = vunpack.c.l.b16 %v435
    %v470 = vunpack.c.h.b16 %v435
    %v471 = vunpack.c.l.b16 %v436
    %v472 = vunpack.c.h.b16 %v436
    %v473 = vunpack.c.l.b16 %v437
    %v474 = vunpack.c.h.b16 %v437
    %v475 = vunpack.c.l.b16 %v438
    %v476 = vunpack.c.h.b16 %v438
    %v477 = vunpack.c.l.b16 %v439
    %v478 = vunpack.c.h.b16 %v439
    %v479 = vunpack.c.l.b16 %v440
    %v480 = vunpack.c.h.b16 %v440
    %v481 = vunpack.c.l.b16 %v441
    %v482 = vunpack.c.h.b16 %v441
    %v483 = vunpack.c.l.b16 %v442
    %v484 = vunpack.c.h.b16 %v442
    %v485 = vunpack.c.l.b16 %v443
    %v486 = vunpack.c.h.b16 %v443
    %v487 = vunpack.c.l.b16 %v444
    %v488 = vunpack.c.h.b16 %v444
    %v489 = vunpack.c.l.b16 %v445
    %v490 = vunpack.c.h.b16 %v445
    %v491 = vunpack.c.l.b16 %v446
    %v492 = vunpack.c.h.b16 %v446
    %v493 = vunpack.c.l.b16 %v447
    %v494 = vunpack.c.h.b16 %v447
    %v495 = vunpack.c.l.b16 %v448
    %v496 = vunpack.c.h.b16 %v448
    %v497 = vpack.c.b16 %v481, %v465
    %v498 = vpack.c.b16 %v482, %v466
    %v499 = vpack.c.b16 %v483, %v467
    %v500 = vpack.c.b16 %v484, %v468
    %v501 = vpack.c.b16 %v485, %v469
    %v502 = vpack.c.b16 %v486, %v470
    %v503 = vpack.c.b16 %v487, %v471
    %v504 = vpack.c.b16 %v488, %v472
    %v505 = vpack.c.b16 %v489, %v473
    %v506 = vpack.c.b16 %v490, %v474
    %v507 = vpack.c.b16 %v491, %v475
    %v508 = vpack.c.b16 %v492, %v476
    %v509 = vpack.c.b16 %v493, %v477
    %v510 = vpack.c.b16 %v494, %v478
    %v511 = vpack.c.b16 %v495, %v479
    %v512 = vpack.c.b16 %v496, %v480
    %v785 = vunpack.c.l.b16 %v177
    %v786 = vunpack.c.l.b16 %v178
    %v787 = vunpack.c.l.b16 %v179
    %v788 = vunpack.c.l.b16 %v180
    %v789 = vunpack.c.l.b16 %v181
    %v790 = vunpack.c.l.b16 %v182
    %v791 = vunpack.c.l.b16 %v183
    %v792 = vunpack.c.l.b16 %v184
    %v793 = vunpack.c.l.b16 %v185
    %v794 = vunpack.c.l.b16 %v186
    %v795 = vunpack.c.l.b16 %v187
    %v796 = vunpack.c.l.b16 %v188
    %v797 = vunpack.c.l.b16 %v189
    %v798 = vunpack.c.l.b16 %v190
    %v799 = vunpack.c.l.b16 %v191
    %v800 = vunpack.c.l.b16 %v192
    %v801 = vunpack.c.l.b16 %v193
    %v802 = vunpack.c.l.b16 %v194
    %v803 = vunpack.c.l.b16 %v195
    %v804 = vunpack.c.l.b16 %v196
    %v805 = vunpack.c.l.b16 %v197
    %v806 = vunpack.c.l.b16 %v198
    %v807 = vunpack.c.l.b16 %v199
    %v808 = vunpack.c.l.b16 %v200
    %v809 = vunpack.c.l.b16 %v201
    %v810 = vunpack.c.l.b16 %v202
    %v811 = vunpack.c.l.b16 %v203
    %v812 = vunpack.c.l.b16 %v204
    %v813 = vunpack.c.l.b16 %v205
    %v814 = vunpack.c.l.b16 %v206
    %v815 = vunpack.c.l.b16 %v207
    %v816 = vunpack.c.l.b16 %v208
    %v817 = vunpack.c.l.b16 %v209
    %v818 = vunpack.c.l.b16 %v210
    %v819 = vunpack.c.l.b16 %v211
    %v820 = vunpack.c.l.b16 %v212
    %v821 = vunpack.c.l.b16 %v213
    %v822 = vunpack.c.l.b16 %v214
    %v823 = vunpack.c.l.b16 %v215
    %v824 = vunpack.c.l.b16 %v216
    %v825 = vunpack.c.l.b16 %v217
    %v826 = vunpack.c.l.b16 %v218
    %v827 = vunpack.c.l.b16 %v219
    %v828 = vunpack.c.l.b16 %v220
    %v829 = vunpack.c.l.b16 %v221
    %v830 = vunpack.c.l.b16 %v222
    %v831 = vunpack.c.l.b16 %v223
    %v832 = vunpack.c.l.b16 %v224
    %v833 = vunpack.c.l.b16 %v225
    %v834 = vunpack.c.l.b16 %v226
    %v835 = vunpack.c.l.b16 %v227
    %v836 = vunpack.c.l.b16 %v228
    %v837 = vunpack.c.l.b16 %v229
    %v838 = vunpack.c.l.b16 %v230
    %v839 = vunpack.c.l.b16 %v231
    %v840 = vunpack.c.l.b16 %v232
    %v841 = vunpack.c.l.b16 %v233
    %v842 = vunpack.c.l.b16 %v234
    %v843 = vunpack.c.l.b16 %v235
    %v844 = vunpack.c.l.b16 %v236
    %v845 = vunpack.c.l.b16 %v237
    %v846 = vunpack.c.l.b16 %v238
    %v847 = vunpack.c.l.b16 %v239
    %v848 = vunpack.c.l.b16 %v240
    %v849 = vunpack.c.l.b16 %v241
    %v850 = vunpack.c.l.b16 %v242
    %v851 = vunpack.c.l.b16 %v243
    %v852 = vunpack.c.l.b16 %v244
    %v853 = vunpack.c.l.b16 %v245
    %v854 = vunpack.c.l.b16 %v246
    %v855 = vunpack.c.l.b16 %v247
    %v856 = vunpack.c.l.b16 %v248
    %v857 = vunpack.c.l.b16 %v249
    %v858 = vunpack.c.l.b16 %v250
    %v859 = vunpack.c.l.b16 %v251
    %v860 = vunpack.c.l.b16 %v252
    %v861 = vunpack.c.l.b16 %v253
    %v862 = vunpack.c.l.b16 %v254
    %v863 = vunpack.c.l.b16 %v255
    %v864 = vunpack.c.l.b16 %v256
    %v865 = vunpack.c.l.b16 %v257
    %v866 = vunpack.c.l.b16 %v258
    %v867 = vunpack.c.l.b16 %v259
    %v868 = vunpack.c.l.b16 %v260
    %v869 = vunpack.c.l.b16 %v261
    %v870 = vunpack.c.l.b16 %v262
    %v871 = vunpack.c.l.b16 %v263
    %v872 = vunpack.c.l.b16 %v264
    %v873 = vunpack.c.l.b16 %v265
    %v874 = vunpack.c.l.b16 %v266
    %v875 = vunpack.c.l.b16 %v267
    %v876 = vunpack.c.l.b16 %v268
    %v877 = vunpack.c.l.b16 %v269
    %v878 = vunpack.c.l.b16 %v270
    %v879 = vunpack.c.l.b16 %v271
    %v880 = vunpack.c.l.b16 %v272
    %v881 = vunpack.c.l.b16 %v273
    %v882 = vunpack.c.l.b16 %v274
    %v883 = vunpack.c.l.b16 %v275
    %v884 = vunpack.c.l.b16 %v276
    %v885 = vunpack.c.l.b16 %v277
    %v886 = vunpack.c.l.b16 %v278
    %v887 = vunpack.c.l.b16 %v279
    %v888 = vunpack.c.l.b16 %v280
    %v889 = vunpack.c.l.b16 %v281
    %v890 = vunpack.c.l.b16 %v282
    %v891 = vunpack.c.l.b16 %v283
    %v892 = vunpack.c.l.b16 %v284
    %v893 = vunpack.c.l.b16 %v285
    %v894 = vunpack.c.l.b16 %v286
    %v895 = vunpack.c.l.b16 %v287
    %v896 = vunpack.c.l.b16 %v288
    %v897 = vunpack.c.l.b16 %v289
    %v898 = vunpack.c.l.b16 %v290
    %v899 = vunpack.c.l.b16 %v291
    %v900 = vunpack.c.l.b16 %v292
    %v901 = vunpack.c.l.b16 %v293
    %v902 = vunpack.c.l.b16 %v294
    %v903 = vunpack.c.l.b16 %v295
    %v904 = vunpack.c.l.b16 %v296
    %v905 = vunpack.c.l.b16 %v297
    %v906 = vunpack.c.l.b16 %v298
    %v907 = vunpack.c.l.b16 %v299
    %v908 = vunpack.c.l.b16 %v300
    %v909 = vunpack.c.l.b16 %v301
    %v910 = vunpack.c.l.b16 %v302
    %v911 = vunpack.c.l.b16 %v303
    %v912 = vunpack.c.l.b16 %v304
    %v913 = vunpack.c.l.b16 %v305
    %v914 = vunpack.c.l.b16 %v306
    %v915 = vunpack.c.l.b16 %v307
    %v916 = vunpack.c.l.b16 %v308
    %v917 = vunpack.c.l.b16 %v309
    %v918 = vunpack.c.l.b16 %v310
    %v919 = vunpack.c.l.b16 %v311
    %v920 = vunpack.c.l.b16 %v312
    %v921 = vunpack.c.l.b16 %v313
    %v922 = vunpack.c.l.b16 %v314
    %v923 = vunpack.c.l.b16 %v315
    %v924 = vunpack.c.l.b16 %v316
    %v925 = vunpack.c.l.b16 %v317
    %v926 = vunpack.c.l.b16 %v318
    %v927 = vunpack.c.l.b16 %v319
    %v928 = vunpack.c.l.b16 %v320
    %v929 = vunpack.c.l.b16 %v321
    %v930 = vunpack.c.l.b16 %v322
    %v931 = vunpack.c.l.b16 %v323
    %v932 = vunpack.c.l.b16 %v324
    %v933 = vunpack.c.l.b16 %v325
    %v934 = vunpack.c.l.b16 %v326
    %v935 = vunpack.c.l.b16 %v327
    %v936 = vunpack.c.l.b16 %v328
    %v937 = vunpack.c.l.b16 %v329
    %v938 = vunpack.c.l.b16 %v330
    %v939 = vunpack.c.l.b16 %v331
    %v940 = vunpack.c.l.b16 %v332
    %v941 = vunpack.c.l.b16 %v333
    %v942 = vunpack.c.l.b16 %v334
    %v943 = vunpack.c.l.b16 %v335
    %v944 = vunpack.c.l.b16 %v336
    %v945 = vunpack.c.l.b16 %v337
    %v946 = vunpack.c.l.b16 %v338
    %v947 = vunpack.c.l.b16 %v339
    %v948 = vunpack.c.l.b16 %v340
    %v949 = vunpack.c.l.b16 %v341
    %v950 = vunpack.c.l.b16 %v342
    %v951 = vunpack.c.l.b16 %v343
    %v952 = vunpack.c.l.b16 %v344
    %v953 = vunpack.c.l.b16 %v345
    %v954 = vunpack.c.l.b16 %v346
    %v955 = vunpack.c.l.b16 %v347
    %v956 = vunpack.c.l.b16 %v348
    %v957 = vunpack.c.l.b16 %v349
    %v958 = vunpack.c.l.b16 %v350
    %v959 = vunpack.c.l.b16 %v351
    %v960 = vunpack.c.l.b16 %v352
    %v961 = vunpack.c.l.b16 %v353
    %v962 = vunpack.c.l.b16 %v354
    %v963 = vunpack.c.l.b16 %v355
    %v964 = vunpack.c.l.b16 %v356
    %v965 = vunpack.c.l.b16 %v357
    %v966 = vunpack.c.l.b16 %v358
    %v967 = vunpack.c.l.b16 %v359
    %v968 = vunpack.c.l.b16 %v360
    %v969 = vunpack.c.l.b16 %v361
    %v970 = vunpack.c.l.b16 %v362
    %v971 = vunpack.c.l.b16 %v363
    %v972 = vunpack.c.l.b16 %v364
    %v973 = vunpack.c.l.b16 %v365
    %v974 = vunpack.c.l.b16 %v366
    %v975 = vunpack.c.l.b16 %v367
    %v976 = vunpack.c.l.b16 %v368
    %v977 = vunpack.c.l.b16 %v369
    %v978 = vunpack.c.l.b16 %v370
    %v979 = vunpack.c.l.b16 %v371
    %v980 = vunpack.c.l.b16 %v372
    %v981 = vunpack.c.l.b16 %v373
    %v982 = vunpack.c.l.b16 %v374
    %v983 = vunpack.c.l.b16 %v375
    %v984 = vunpack.c.l.b16 %v376
    %v985 = vunpack.c.l.b16 %v377
    %v986 = vunpack.c.l.b16 %v378
    %v987 = vunpack.c.l.b16 %v379
    %v988 = vunpack.c.l.b16 %v380
    %v989 = vunpack.c.l.b16 %v381
    %v990 = vunpack.c.l.b16 %v382
    %v991 = vunpack.c.l.b16 %v383
    %v992 = vunpack.c.l.b16 %v384
    %v993 = vunpack.c.l.b16 %v385
    %v994 = vunpack.c.l.b16 %v386
    %v995 = vunpack.c.l.b16 %v387
    %v996 = vunpack.c.l.b16 %v388
    %v997 = vunpack.c.l.b16 %v389
    %v998 = vunpack.c.l.b16 %v390
    %v999 = vunpack.c.l.b16 %v391
    %v1000 = vunpack.c.l.b16 %v392
    %v1001 = vunpack.c.l.b16 %v393
    %v1002 = vunpack.c.l.b16 %v394
    %v1003 = vunpack.c.l.b16 %v395
    %v1004 = vunpack.c.l.b16 %v396
    %v1005 = vunpack.c.l.b16 %v397
    %v1006 = vunpack.c.l.b16 %v398
    %v1007 = vunpack.c.l.b16 %v399
    %v1008 = vunpack.c.l.b16 %v400
    %v1009 = vunpack.c.l.b16 %v401
    %v1010 = vunpack.c.l.b16 %v402
    %v1011 = vunpack.c.l.b16 %v403
    %v1012 = vunpack.c.l.b16 %v404
    %v1013 = vunpack.c.l.b16 %v405
    %v1014 = vunpack.c.l.b16 %v406
    %v1015 = vunpack.c.l.b16 %v407
    %v1016 = vunpack.c.l.b16 %v408
    %v1017 = vunpack.c.l.b16 %v409
    %v1018 = vunpack.c.l.b16 %v410
    %v1019 = vunpack.c.l.b16 %v411
    %v1020 = vunpack.c.l.b16 %v412
    %v1021 = vunpack.c.l.b16 %v413
    %v1022 = vunpack.c.l.b16 %v414
    %v1023 = vunpack.c.l.b16 %v415
    %v1024 = vunpack.c.l.b16 %v416
    %v1025 = vunpack.c.l.b16 %v417
    %v1026 = vunpack.c.l.b16 %v418
    %v1027 = vunpack.c.l.b16 %v419
    %v1028 = vunpack.c.l.b16 %v420
    %v1029 = vunpack.c.l.b16 %v421
    %v1030 = vunpack.c.l.b16 %v422
    %v1031 = vunpack.c.l.b16 %v423
    %v1032 = vunpack.c.l.b16 %v424
    %v1033 = vunpack.c.l.b16 %v425
    %v1034 = vunpack.c.l.b16 %v426
    %v1035 = vunpack.c.l.b16 %v427
    %v1036 = vunpack.c.l.b16 %v428
    %v1037 = vunpack.c.l.b16 %v429
    %v1038 = vunpack.c.l.b16 %v430
    %v1039 = vunpack.c.l.b16 %v431
    %v1040 = vunpack.c.l.b16 %v432
    %v1041 = vpack.c.b16 %v786, %v785
    %v1042 = vpack.c.b16 %v788, %v787
    %v1043 = vpack.c.b16 %v790, %v789
    %v1044 = vpack.c.b16 %v792, %v791
    %v1045 = vpack.c.b16 %v794, %v793
    %v1046 = vpack.c.b16 %v796, %v795
    %v1047 = vpack.c.b16 %v798, %v797
    %v1048 = vpack.c.b16 %v800, %v799
    %v1049 = vpack.c.b16 %v802, %v801
    %v1050 = vpack.c.b16 %v804, %v803
    %v1051 = vpack.c.b16 %v806, %v805
    %v1052 = vpack.c.b16 %v808, %v807
    %v1053 = vpack.c.b16 %v810, %v809
    %v1054 = vpack.c.b16 %v812, %v811
    %v1055 = vpack.c.b16 %v814, %v813
    %v1056 = vpack.c.b16 %v816, %v815
    %v1057 = vpack.c.b16 %v818, %v817
    %v1058 = vpack.c.b16 %v820, %v819
    %v1059 = vpack.c.b16 %v822, %v821
    %v1060 = vpack.c.b16 %v824, %v823
    %v1061 = vpack.c.b16 %v826, %v825
    %v1062 = vpack.c.b16 %v828, %v827
    %v1063 = vpack.c.b16 %v830, %v829
    %v1064 = vpack.c.b16 %v832, %v831
    %v1065 = vpack.c.b16 %v834, %v833
    %v1066 = vpack.c.b16 %v836, %v835
    %v1067 = vpack.c.b16 %v838, %v837
    %v1068 = vpack.c.b16 %v840, %v839
    %v1069 = vpack.c.b16 %v842, %v841
    %v1070 = vpack.c.b16 %v844, %v843
    %v1071 = vpack.c.b16 %v846, %v845
    %v1072 = vpack.c.b16 %v848, %v847
    %v1073 = vpack.c.b16 %v850, %v849
    %v1074 = vpack.c.b16 %v852, %v851
    %v1075 = vpack.c.b16 %v854, %v853
    %v1076 = vpack.c.b16 %v856, %v855
    %v1077 = vpack.c.b16 %v858, %v857
    %v1078 = vpack.c.b16 %v860, %v859
    %v1079 = vpack.c.b16 %v862, %v861
    %v1080 = vpack.c.b16 %v864, %v863
    %v1081 = vpack.c.b16 %v866, %v865
    %v1082 = vpack.c.b16 %v868, %v867
    %v1083 = vpack.c.b16 %v870, %v869
    %v1084 = vpack.c.b16 %v872, %v871
    %v1085 = vpack.c.b16 %v874, %v873
    %v1086 = vpack.c.b16 %v876, %v875
    %v1087 = vpack.c.b16 %v878, %v877
    %v1088 = vpack.c.b16 %v880, %v879
    %v1089 = vpack.c.b16 %v882, %v881
    %v1090 = vpack.c.b16 %v884, %v883
    %v1091 = vpack.c.b16 %v886, %v885
    %v1092 = vpack.c.b16 %v888, %v887
    %v1093 = vpack.c.b16 %v890, %v889
    %v1094 = vpack.c.b16 %v892, %v891
    %v1095 = vpack.c.b16 %v894, %v893
    %v1096 = vpack.c.b16 %v896, %v895
    %v1097 = vpack.c.b16 %v898, %v897
    %v1098 = vpack.c.b16 %v900, %v899
    %v1099 = vpack.c.b16 %v902, %v901
    %v1100 = vpack.c.b16 %v904, %v903
    %v1101 = vpack.c.b16 %v906, %v905
    %v1102 = vpack.c.b16 %v908, %v907
    %v1103 = vpack.c.b16 %v910, %v909
    %v1104 = vpack.c.b16 %v912, %v911
    %v1105 = vpack.c.b16 %v914, %v913
    %v1106 = vpack.c.b16 %v916, %v915
    %v1107 = vpack.c.b16 %v918, %v917
    %v1108 = vpack.c.b16 %v920, %v919
    %v1109 = vpack.c.b16 %v922, %v921
    %v1110 = vpack.c.b16 %v924, %v923
    %v1111 = vpack.c.b16 %v926, %v925
    %v1112 = vpack.c.b16 %v928, %v927
    %v1113 = vpack.c.b16 %v930, %v929
    %v1114 = vpack.c.b16 %v932, %v931
    %v1115 = vpack.c.b16 %v934, %v933
    %v1116 = vpack.c.b16 %v936, %v935
    %v1117 = vpack.c.b16 %v938, %v937
    %v1118 = vpack.c.b16 %v940, %v939
    %v1119 = vpack.c.b16 %v942, %v941
    %v1120 = vpack.c.b16 %v944, %v943
    %v1121 = vpack.c.b16 %v946, %v945
    %v1122 = vpack.c.b16 %v948, %v947
    %v1123 = vpack.c.b16 %v950, %v949
    %v1124 = vpack.c.b16 %v952, %v951
    %v1125 = vpack.c.b16 %v954, %v953
    %v1126 = vpack.c.b16 %v956, %v955
    %v1127 = vpack.c.b16 %v958, %v957
    %v1128 = vpack.c.b16 %v960, %v959
    %v1129 = vpack.c.b16 %v962, %v961
    %v1130 = vpack.c.b16 %v964, %v963
    %v1131 = vpack.c.b16 %v966, %v965
    %v1132 = vpack.c.b16 %v968, %v967
    %v1133 = vpack.c.b16 %v970, %v969
    %v1134 = vpack.c.b16 %v972, %v971
    %v1135 = vpack.c.b16 %v974, %v973
    %v1136 = vpack.c.b16 %v976, %v975
    %v1137 = vpack.c.b16 %v978, %v977
    %v1138 = vpack.c.b16 %v980, %v979
    %v1139 = vpack.c.b16 %v982, %v981
    %v1140 = vpack.c.b16 %v984, %v983
    %v1141 = vpack.c.b16 %v986, %v985
    %v1142 = vpack.c.b16 %v988, %v987
    %v1143 = vpack.c.b16 %v990, %v989
    %v1144 = vpack.c.b16 %v992, %v991
    %v1145 = vpack.c.b16 %v994, %v993
    %v1146 = vpack.c.b16 %v996, %v995
    %v1147 = vpack.c.b16 %v998, %v997
    %v1148 = vpack.c.b16 %v1000, %v999
    %v1149 = vpack.c.b16 %v1002, %v1001
    %v1150 = vpack.c.b16 %v1004, %v1003
    %v1151 = vpack.c.b16 %v1006, %v1005
    %v1152 = vpack.c.b16 %v1008, %v1007
    %v1153 = vpack.c.b16 %v1010, %v1009
    %v1154 = vpack.c.b16 %v1012, %v1011
    %v1155 = vpack.c.b16 %v1014, %v1013
    %v1156 = vpack.c.b16 %v1016, %v1015
    %v1157 = vpack.c.b16 %v1018, %v1017
    %v1158 = vpack.c.b16 %v1020, %v1019
    %v1159 = vpack.c.b16 %v1022, %v1021
    %v1160 = vpack.c.b16 %v1024, %v1023
    %v1161 = vpack.c.b16 %v1026, %v1025
    %v1162 = vpack.c.b16 %v1028, %v1027
    %v1163 = vpack.c.b16 %v1030, %v1029
    %v1164 = vpack.c.b16 %v1032, %v1031
    %v1165 = vpack.c.b16 %v1034, %v1033
    %v1166 = vpack.c.b16 %v1036, %v1035
    %v1167 = vpack.c.b16 %v1038, %v1037
    %v1168 = vpack.c.b16 %v1040, %v1039
    %1297 = vmatprep.subr.bf16.mxu0 0
    %1298 = vmatpush1.bf16.msra.mxu0 %v1041
    %1299 = vmatprep.subr.bf16.mxu0 0
    %1300 = vmatpush1.bf16.msra.mxu0 %v1042
    %1301 = vmatprep.subr.bf16.mxu0 0
    %1302 = vmatpush1.bf16.msra.mxu0 %v1043
    %1303 = vmatprep.subr.bf16.mxu0 0
    %1304 = vmatpush1.bf16.msra.mxu0 %v1044
    %1305 = vmatprep.subr.bf16.mxu0 0
    %1306 = vmatpush1.bf16.msra.mxu0 %v1045
    %1307 = vmatprep.subr.bf16.mxu0 0
    %1308 = vmatpush1.bf16.msra.mxu0 %v1046
    %1309 = vmatprep.subr.bf16.mxu0 0
    %1310 = vmatpush1.bf16.msra.mxu0 %v1047
    %1311 = vmatprep.subr.bf16.mxu0 0
    %1312 = vmatpush1.bf16.msra.mxu0 %v1048
    %1313 = vmatprep.subr.bf16.mxu0 0
    %1314 = vmatpush1.bf16.msra.mxu0 %v1049
    %1315 = vmatprep.subr.bf16.mxu0 0
    %1316 = vmatpush1.bf16.msra.mxu0 %v1050
    %1317 = vmatprep.subr.bf16.mxu0 0
    %1318 = vmatpush1.bf16.msra.mxu0 %v1051
    %1319 = vmatprep.subr.bf16.mxu0 0
    %1320 = vmatpush1.bf16.msra.mxu0 %v1052
    %1321 = vmatprep.subr.bf16.mxu0 0
    %1322 = vmatpush1.bf16.msra.mxu0 %v1053
    %1323 = vmatprep.subr.bf16.mxu0 0
    %1324 = vmatpush1.bf16.msra.mxu0 %v1054
    %1325 = vmatprep.subr.bf16.mxu0 0
    %1326 = vmatpush1.bf16.msra.mxu0 %v1055
    %1327 = vmatprep.subr.bf16.mxu0 0
    %1328 = vmatpush1.bf16.msra.mxu0 %v1056
    %1329 = vmatprep.mubr.bf16.mxu0 %v498
    %1330 = vmatmul.mubr.bf16.gmra.mrb[0].mxu0 %v497
    %v1331 = vpop.f32.mrb[0].mxu0
    %v1332 = vadd.f32 0.0, %v1331
    %v1333 = vpop.f32.mrb[0].mxu0
    %v1334 = vpop.f32.mrb[0].mxu0
    %v1335 = vadd.f32 0.0, %v1334
    %v1336 = vpop.f32.mrb[0].mxu0
    %1337 = vdwg.mxu0
    %1338 = vmatprep.subr.bf16.mxu0 0
    %1339 = vmatpush1.bf16.msra.mxu0 %v1057
    %1340 = vmatprep.subr.bf16.mxu0 0
    %1341 = vmatpush1.bf16.msra.mxu0 %v1058
    %1342 = vmatprep.subr.bf16.mxu0 0
    %1343 = vmatpush1.bf16.msra.mxu0 %v1059
    %1344 = vmatprep.subr.bf16.mxu0 0
    %1345 = vmatpush1.bf16.msra.mxu0 %v1060
    %1346 = vmatprep.subr.bf16.mxu0 0
    %1347 = vmatpush1.bf16.msra.mxu0 %v1061
    %1348 = vmatprep.subr.bf16.mxu0 0
    %1349 = vmatpush1.bf16.msra.mxu0 %v1062
    %1350 = vmatprep.subr.bf16.mxu0 0
    %1351 = vmatpush1.bf16.msra.mxu0 %v1063
    %1352 = vmatprep.subr.bf16.mxu0 0
    %1353 = vmatpush1.bf16.msra.mxu0 %v1064
    %1354 = vmatprep.subr.bf16.mxu0 0
    %1355 = vmatpush1.bf16.msra.mxu0 %v1065
    %1356 = vmatprep.subr.bf16.mxu0 0
    %1357 = vmatpush1.bf16.msra.mxu0 %v1066
    %1358 = vmatprep.subr.bf16.mxu0 0
    %1359 = vmatpush1.bf16.msra.mxu0 %v1067
    %1360 = vmatprep.subr.bf16.mxu0 0
    %1361 = vmatpush1.bf16.msra.mxu0 %v1068
    %1362 = vmatprep.subr.bf16.mxu0 0
    %1363 = vmatpush1.bf16.msra.mxu0 %v1069
    %1364 = vmatprep.subr.bf16.mxu0 0
    %1365 = vmatpush1.bf16.msra.mxu0 %v1070
    %1366 = vmatprep.subr.bf16.mxu0 0
    %1367 = vmatpush1.bf16.msra.mxu0 %v1071
    %1368 = vmatprep.subr.bf16.mxu0 0
    %1369 = vmatpush1.bf16.msra.mxu0 %v1072
    %1370 = vmatprep.mubr.bf16.mxu0 %v500
    %1371 = vmatmul.mubr.bf16.gmra.mrb[0].mxu0 %v499
    %v1372 = vpop.f32.mrb[0].mxu0
    %v1373 = vadd.f32 %v1332, %v1372
    %v1374 = vpop.f32.mrb[0].mxu0
    %v1375 = vpop.f32.mrb[0].mxu0
    %v1376 = vadd.f32 %v1335, %v1375
    %v1377 = vpop.f32.mrb[0].mxu0
    %1378 = vdwg.mxu0
    %1379 = vmatprep.subr.bf16.mxu0 0
    %1380 = vmatpush1.bf16.msra.mxu0 %v1073
    %1381 = vmatprep.subr.bf16.mxu0 0
    %1382 = vmatpush1.bf16.msra.mxu0 %v1074
    %1383 = vmatprep.subr.bf16.mxu0 0
    %1384 = vmatpush1.bf16.msra.mxu0 %v1075
    %1385 = vmatprep.subr.bf16.mxu0 0
    %1386 = vmatpush1.bf16.msra.mxu0 %v1076
    %1387 = vmatprep.subr.bf16.mxu0 0
    %1388 = vmatpush1.bf16.msra.mxu0 %v1077
    %1389 = vmatprep.subr.bf16.mxu0 0
    %1390 = vmatpush1.bf16.msra.mxu0 %v1078
    %1391 = vmatprep.subr.bf16.mxu0 0
    %1392 = vmatpush1.bf16.msra.mxu0 %v1079
    %1393 = vmatprep.subr.bf16.mxu0 0
    %1394 = vmatpush1.bf16.msra.mxu0 %v1080
    %1395 = vmatprep.subr.bf16.mxu0 0
    %1396 = vmatpush1.bf16.msra.mxu0 %v1081
    %1397 = vmatprep.subr.bf16.mxu0 0
    %1398 = vmatpush1.bf16.msra.mxu0 %v1082
    %1399 = vmatprep.subr.bf16.mxu0 0
    %1400 = vmatpush1.bf16.msra.mxu0 %v1083
    %1401 = vmatprep.subr.bf16.mxu0 0
    %1402 = vmatpush1.bf16.msra.mxu0 %v1084
    %1403 = vmatprep.subr.bf16.mxu0 0
    %1404 = vmatpush1.bf16.msra.mxu0 %v1085
    %1405 = vmatprep.subr.bf16.mxu0 0
    %1406 = vmatpush1.bf16.msra.mxu0 %v1086
    %1407 = vmatprep.subr.bf16.mxu0 0
    %1408 = vmatpush1.bf16.msra.mxu0 %v1087
    %1409 = vmatprep.subr.bf16.mxu0 0
    %1410 = vmatpush1.bf16.msra.mxu0 %v1088
    %1411 = vmatprep.mubr.bf16.mxu0 %v502
    %1412 = vmatmul.mubr.bf16.gmra.mrb[0].mxu0 %v501
    %v1413 = vpop.f32.mrb[0].mxu0
    %v1414 = vadd.f32 %v1373, %v1413
    %v1415 = vpop.f32.mrb[0].mxu0
    %v1416 = vpop.f32.mrb[0].mxu0
    %v1417 = vadd.f32 %v1376, %v1416
    %v1418 = vpop.f32.mrb[0].mxu0
    %1419 = vdwg.mxu0
    %1420 = vmatprep.subr.bf16.mxu0 0
    %1421 = vmatpush1.bf16.msra.mxu0 %v1089
    %1422 = vmatprep.subr.bf16.mxu0 0
    %1423 = vmatpush1.bf16.msra.mxu0 %v1090
    %1424 = vmatprep.subr.bf16.mxu0 0
    %1425 = vmatpush1.bf16.msra.mxu0 %v1091
    %1426 = vmatprep.subr.bf16.mxu0 0
    %1427 = vmatpush1.bf16.msra.mxu0 %v1092
    %1428 = vmatprep.subr.bf16.mxu0 0
    %1429 = vmatpush1.bf16.msra.mxu0 %v1093
    %1430 = vmatprep.subr.bf16.mxu0 0
    %1431 = vmatpush1.bf16.msra.mxu0 %v1094
    %1432 = vmatprep.subr.bf16.mxu0 0
    %1433 = vmatpush1.bf16.msra.mxu0 %v1095
    %1434 = vmatprep.subr.bf16.mxu0 0
    %1435 = vmatpush1.bf16.msra.mxu0 %v1096
    %1436 = vmatprep.subr.bf16.mxu0 0
    %1437 = vmatpush1.bf16.msra.mxu0 %v1097
    %1438 = vmatprep.subr.bf16.mxu0 0
    %1439 = vmatpush1.bf16.msra.mxu0 %v1098
    %1440 = vmatprep.subr.bf16.mxu0 0
    %1441 = vmatpush1.bf16.msra.mxu0 %v1099
    %1442 = vmatprep.subr.bf16.mxu0 0
    %1443 = vmatpush1.bf16.msra.mxu0 %v1100
    %1444 = vmatprep.subr.bf16.mxu0 0
    %1445 = vmatpush1.bf16.msra.mxu0 %v1101
    %1446 = vmatprep.subr.bf16.mxu0 0
    %1447 = vmatpush1.bf16.msra.mxu0 %v1102
    %1448 = vmatprep.subr.bf16.mxu0 0
    %1449 = vmatpush1.bf16.msra.mxu0 %v1103
    %1450 = vmatprep.subr.bf16.mxu0 0
    %1451 = vmatpush1.bf16.msra.mxu0 %v1104
    %1452 = vmatprep.mubr.bf16.mxu0 %v504
    %1453 = vmatmul.mubr.bf16.gmra.mrb[0].mxu0 %v503
    %v1454 = vpop.f32.mrb[0].mxu0
    %v1455 = vadd.f32 %v1414, %v1454
    %v1456 = vpop.f32.mrb[0].mxu0
    %v1457 = vpop.f32.mrb[0].mxu0
    %v1458 = vadd.f32 %v1417, %v1457
    %v1459 = vpop.f32.mrb[0].mxu0
    %1460 = vdwg.mxu0
    %1461 = vmatprep.subr.bf16.mxu0 0
    %1462 = vmatpush1.bf16.msra.mxu0 %v1105
    %1463 = vmatprep.subr.bf16.mxu0 0
    %1464 = vmatpush1.bf16.msra.mxu0 %v1106
    %1465 = vmatprep.subr.bf16.mxu0 0
    %1466 = vmatpush1.bf16.msra.mxu0 %v1107
    %1467 = vmatprep.subr.bf16.mxu0 0
    %1468 = vmatpush1.bf16.msra.mxu0 %v1108
    %1469 = vmatprep.subr.bf16.mxu0 0
    %1470 = vmatpush1.bf16.msra.mxu0 %v1109
    %1471 = vmatprep.subr.bf16.mxu0 0
    %1472 = vmatpush1.bf16.msra.mxu0 %v1110
    %1473 = vmatprep.subr.bf16.mxu0 0
    %1474 = vmatpush1.bf16.msra.mxu0 %v1111
    %1475 = vmatprep.subr.bf16.mxu0 0
    %1476 = vmatpush1.bf16.msra.mxu0 %v1112
    %1477 = vmatprep.subr.bf16.mxu0 0
    %1478 = vmatpush1.bf16.msra.mxu0 %v1113
    %1479 = vmatprep.subr.bf16.mxu0 0
    %1480 = vmatpush1.bf16.msra.mxu0 %v1114
    %1481 = vmatprep.subr.bf16.mxu0 0
    %1482 = vmatpush1.bf16.msra.mxu0 %v1115
    %1483 = vmatprep.subr.bf16.mxu0 0
    %1484 = vmatpush1.bf16.msra.mxu0 %v1116
    %1485 = vmatprep.subr.bf16.mxu0 0
    %1486 = vmatpush1.bf16.msra.mxu0 %v1117
    %1487 = vmatprep.subr.bf16.mxu0 0
    %1488 = vmatpush1.bf16.msra.mxu0 %v1118
    %1489 = vmatprep.subr.bf16.mxu0 0
    %1490 = vmatpush1.bf16.msra.mxu0 %v1119
    %1491 = vmatprep.subr.bf16.mxu0 0
    %1492 = vmatpush1.bf16.msra.mxu0 %v1120
    %1493 = vmatprep.mubr.bf16.mxu0 %v506
    %1494 = vmatmul.mubr.bf16.gmra.mrb[0].mxu0 %v505
    %v1495 = vpop.f32.mrb[0].mxu0
    %v1496 = vadd.f32 %v1455, %v1495
    %v1497 = vpop.f32.mrb[0].mxu0
    %v1498 = vpop.f32.mrb[0].mxu0
    %v1499 = vadd.f32 %v1458, %v1498
    %v1500 = vpop.f32.mrb[0].mxu0
    %1501 = vdwg.mxu0
    %1502 = vmatprep.subr.bf16.mxu0 0
    %1503 = vmatpush1.bf16.msra.mxu0 %v1121
    %1504 = vmatprep.subr.bf16.mxu0 0
    %1505 = vmatpush1.bf16.msra.mxu0 %v1122
    %1506 = vmatprep.subr.bf16.mxu0 0
    %1507 = vmatpush1.bf16.msra.mxu0 %v1123
    %1508 = vmatprep.subr.bf16.mxu0 0
    %1509 = vmatpush1.bf16.msra.mxu0 %v1124
    %1510 = vmatprep.subr.bf16.mxu0 0
    %1511 = vmatpush1.bf16.msra.mxu0 %v1125
    %1512 = vmatprep.subr.bf16.mxu0 0
    %1513 = vmatpush1.bf16.msra.mxu0 %v1126
    %1514 = vmatprep.subr.bf16.mxu0 0
    %1515 = vmatpush1.bf16.msra.mxu0 %v1127
    %1516 = vmatprep.subr.bf16.mxu0 0
    %1517 = vmatpush1.bf16.msra.mxu0 %v1128
    %1518 = vmatprep.subr.bf16.mxu0 0
    %1519 = vmatpush1.bf16.msra.mxu0 %v1129
    %1520 = vmatprep.subr.bf16.mxu0 0
    %1521 = vmatpush1.bf16.msra.mxu0 %v1130
    %1522 = vmatprep.subr.bf16.mxu0 0
    %1523 = vmatpush1.bf16.msra.mxu0 %v1131
    %1524 = vmatprep.subr.bf16.mxu0 0
    %1525 = vmatpush1.bf16.msra.mxu0 %v1132
    %1526 = vmatprep.subr.bf16.mxu0 0
    %1527 = vmatpush1.bf16.msra.mxu0 %v1133
    %1528 = vmatprep.subr.bf16.mxu0 0
    %1529 = vmatpush1.bf16.msra.mxu0 %v1134
    %1530 = vmatprep.subr.bf16.mxu0 0
    %1531 = vmatpush1.bf16.msra.mxu0 %v1135
    %1532 = vmatprep.subr.bf16.mxu0 0
    %1533 = vmatpush1.bf16.msra.mxu0 %v1136
    %1534 = vmatprep.mubr.bf16.mxu0 %v508
    %1535 = vmatmul.mubr.bf16.gmra.mrb[0].mxu0 %v507
    %v1536 = vpop.f32.mrb[0].mxu0
    %v1537 = vadd.f32 %v1496, %v1536
    %v1538 = vpop.f32.mrb[0].mxu0
    %v1539 = vpop.f32.mrb[0].mxu0
    %v1540 = vadd.f32 %v1499, %v1539
    %v1541 = vpop.f32.mrb[0].mxu0
    %1542 = vdwg.mxu0
    %1543 = vmatprep.subr.bf16.mxu0 0
    %1544 = vmatpush1.bf16.msra.mxu0 %v1137
    %1545 = vmatprep.subr.bf16.mxu0 0
    %1546 = vmatpush1.bf16.msra.mxu0 %v1138
    %1547 = vmatprep.subr.bf16.mxu0 0
    %1548 = vmatpush1.bf16.msra.mxu0 %v1139
    %1549 = vmatprep.subr.bf16.mxu0 0
    %1550 = vmatpush1.bf16.msra.mxu0 %v1140
    %1551 = vmatprep.subr.bf16.mxu0 0
    %1552 = vmatpush1.bf16.msra.mxu0 %v1141
    %1553 = vmatprep.subr.bf16.mxu0 0
    %1554 = vmatpush1.bf16.msra.mxu0 %v1142
    %1555 = vmatprep.subr.bf16.mxu0 0
    %1556 = vmatpush1.bf16.msra.mxu0 %v1143
    %1557 = vmatprep.subr.bf16.mxu0 0
    %1558 = vmatpush1.bf16.msra.mxu0 %v1144
    %1559 = vmatprep.subr.bf16.mxu0 0
    %1560 = vmatpush1.bf16.msra.mxu0 %v1145
    %1561 = vmatprep.subr.bf16.mxu0 0
    %1562 = vmatpush1.bf16.msra.mxu0 %v1146
    %1563 = vmatprep.subr.bf16.mxu0 0
    %1564 = vmatpush1.bf16.msra.mxu0 %v1147
    %1565 = vmatprep.subr.bf16.mxu0 0
    %1566 = vmatpush1.bf16.msra.mxu0 %v1148
    %1567 = vmatprep.subr.bf16.mxu0 0
    %1568 = vmatpush1.bf16.msra.mxu0 %v1149
    %1569 = vmatprep.subr.bf16.mxu0 0
    %1570 = vmatpush1.bf16.msra.mxu0 %v1150
    %1571 = vmatprep.subr.bf16.mxu0 0
    %1572 = vmatpush1.bf16.msra.mxu0 %v1151
    %1573 = vmatprep.subr.bf16.mxu0 0
    %1574 = vmatpush1.bf16.msra.mxu0 %v1152
    %1575 = vmatprep.mubr.bf16.mxu0 %v510
    %1576 = vmatmul.mubr.bf16.gmra.mrb[0].mxu0 %v509
    %v1577 = vpop.f32.mrb[0].mxu0
    %v1578 = vadd.f32 %v1537, %v1577
    %v1579 = vpop.f32.mrb[0].mxu0
    %v1580 = vpop.f32.mrb[0].mxu0
    %v1581 = vadd.f32 %v1540, %v1580
    %v1582 = vpop.f32.mrb[0].mxu0
    %1583 = vdwg.mxu0
    %1584 = vmatprep.subr.bf16.mxu0 0
    %1585 = vmatpush1.bf16.msra.mxu0 %v1153
    %1586 = vmatprep.subr.bf16.mxu0 0
    %1587 = vmatpush1.bf16.msra.mxu0 %v1154
    %1588 = vmatprep.subr.bf16.mxu0 0
    %1589 = vmatpush1.bf16.msra.mxu0 %v1155
    %1590 = vmatprep.subr.bf16.mxu0 0
    %1591 = vmatpush1.bf16.msra.mxu0 %v1156
    %1592 = vmatprep.subr.bf16.mxu0 0
    %1593 = vmatpush1.bf16.msra.mxu0 %v1157
    %1594 = vmatprep.subr.bf16.mxu0 0
    %1595 = vmatpush1.bf16.msra.mxu0 %v1158
    %1596 = vmatprep.subr.bf16.mxu0 0
    %1597 = vmatpush1.bf16.msra.mxu0 %v1159
    %1598 = vmatprep.subr.bf16.mxu0 0
    %1599 = vmatpush1.bf16.msra.mxu0 %v1160
    %1600 = vmatprep.subr.bf16.mxu0 0
    %1601 = vmatpush1.bf16.msra.mxu0 %v1161
    %1602 = vmatprep.subr.bf16.mxu0 0
    %1603 = vmatpush1.bf16.msra.mxu0 %v1162
    %1604 = vmatprep.subr.bf16.mxu0 0
    %1605 = vmatpush1.bf16.msra.mxu0 %v1163
    %1606 = vmatprep.subr.bf16.mxu0 0
    %1607 = vmatpush1.bf16.msra.mxu0 %v1164
    %1608 = vmatprep.subr.bf16.mxu0 0
    %1609 = vmatpush1.bf16.msra.mxu0 %v1165
    %1610 = vmatprep.subr.bf16.mxu0 0
    %1611 = vmatpush1.bf16.msra.mxu0 %v1166
    %1612 = vmatprep.subr.bf16.mxu0 0
    %1613 = vmatpush1.bf16.msra.mxu0 %v1167
    %1614 = vmatprep.subr.bf16.mxu0 0
    %1615 = vmatpush1.bf16.msra.mxu0 %v1168
    %1616 = vmatprep.mubr.bf16.mxu0 %v512
    %1617 = vmatmul.mubr.bf16.gmra.mrb[0].mxu0 %v511
    %v1618 = vpop.f32.mrb[0].mxu0
    %v1619 = vadd.f32 %v1578, %v1618
    %v1620 = vpop.f32.mrb[0].mxu0
    %v1621 = vpop.f32.mrb[0].mxu0
    %v1622 = vadd.f32 %v1581, %v1621
    %v1623 = vpop.f32.mrb[0].mxu0
    %1624 = vdwg.mxu0
    %v1625 = vld [vmem:[#allocation6] sm:$0xff]
    %v1626 = vld [vmem:[#allocation6 + $0x8] sm:$0xff]
    %v1627 = vld [vmem:[#allocation6 + $0x10] sm:$0xff]
    %v1628 = vld [vmem:[#allocation6 + $0x18] sm:$0xff]
    %v1629 = vld [vmem:[#allocation6 + $0x20] sm:$0xff]
    %v1630 = vld [vmem:[#allocation6 + $0x28] sm:$0xff]
    %v1631 = vld [vmem:[#allocation6 + $0x30] sm:$0xff]
    %v1632 = vld [vmem:[#allocation6 + $0x38] sm:$0xff]
    %v1633 = vld [vmem:[#allocation6 + $0x40] sm:$0xff]
    %v1634 = vld [vmem:[#allocation6 + $0x48] sm:$0xff]
    %v1635 = vld [vmem:[#allocation6 + $0x50] sm:$0xff]
    %v1636 = vld [vmem:[#allocation6 + $0x58] sm:$0xff]
    %v1637 = vld [vmem:[#allocation6 + $0x60] sm:$0xff]
    %v1638 = vld [vmem:[#allocation6 + $0x68] sm:$0xff]
    %v1639 = vld [vmem:[#allocation6 + $0x70] sm:$0xff]
    %v1640 = vld [vmem:[#allocation6 + $0x78] sm:$0xff]
    %v1657 = vunpack.c.l.b16 %v1625
    %v1658 = vunpack.c.h.b16 %v1625
    %v1659 = vunpack.c.l.b16 %v1626
    %v1660 = vunpack.c.h.b16 %v1626
    %v1661 = vunpack.c.l.b16 %v1627
    %v1662 = vunpack.c.h.b16 %v1627
    %v1663 = vunpack.c.l.b16 %v1628
    %v1664 = vunpack.c.h.b16 %v1628
    %v1665 = vunpack.c.l.b16 %v1629
    %v1666 = vunpack.c.h.b16 %v1629
    %v1667 = vunpack.c.l.b16 %v1630
    %v1668 = vunpack.c.h.b16 %v1630
    %v1669 = vunpack.c.l.b16 %v1631
    %v1670 = vunpack.c.h.b16 %v1631
    %v1671 = vunpack.c.l.b16 %v1632
    %v1672 = vunpack.c.h.b16 %v1632
    %v1673 = vunpack.c.l.b16 %v1633
    %v1674 = vunpack.c.h.b16 %v1633
    %v1675 = vunpack.c.l.b16 %v1634
    %v1676 = vunpack.c.h.b16 %v1634
    %v1677 = vunpack.c.l.b16 %v1635
    %v1678 = vunpack.c.h.b16 %v1635
    %v1679 = vunpack.c.l.b16 %v1636
    %v1680 = vunpack.c.h.b16 %v1636
    %v1681 = vunpack.c.l.b16 %v1637
    %v1682 = vunpack.c.h.b16 %v1637
    %v1683 = vunpack.c.l.b16 %v1638
    %v1684 = vunpack.c.h.b16 %v1638
    %v1685 = vunpack.c.l.b16 %v1639
    %v1686 = vunpack.c.h.b16 %v1639
    %v1687 = vunpack.c.l.b16 %v1640
    %v1688 = vunpack.c.h.b16 %v1640
    %v1689 = vpack.c.b16 %v1673, %v1657
    %v1690 = vpack.c.b16 %v1674, %v1658
    %v1691 = vpack.c.b16 %v1675, %v1659
    %v1692 = vpack.c.b16 %v1676, %v1660
    %v1693 = vpack.c.b16 %v1677, %v1661
    %v1694 = vpack.c.b16 %v1678, %v1662
    %v1695 = vpack.c.b16 %v1679, %v1663
    %v1696 = vpack.c.b16 %v1680, %v1664
    %v1697 = vpack.c.b16 %v1681, %v1665
    %v1698 = vpack.c.b16 %v1682, %v1666
    %v1699 = vpack.c.b16 %v1683, %v1667
    %v1700 = vpack.c.b16 %v1684, %v1668
    %v1701 = vpack.c.b16 %v1685, %v1669
    %v1702 = vpack.c.b16 %v1686, %v1670
    %v1703 = vpack.c.b16 %v1687, %v1671
    %v1704 = vpack.c.b16 %v1688, %v1672
    %1721 = vmatprep.subr.bf16.mxu0 0
    %1722 = vmatpush1.bf16.msra.mxu0 %v1041
    %1723 = vmatprep.subr.bf16.mxu0 0
    %1724 = vmatpush1.bf16.msra.mxu0 %v1042
    %1725 = vmatprep.subr.bf16.mxu0 0
    %1726 = vmatpush1.bf16.msra.mxu0 %v1043
    %1727 = vmatprep.subr.bf16.mxu0 0
    %1728 = vmatpush1.bf16.msra.mxu0 %v1044
    %1729 = vmatprep.subr.bf16.mxu0 0
    %1730 = vmatpush1.bf16.msra.mxu0 %v1045
    %1731 = vmatprep.subr.bf16.mxu0 0
    %1732 = vmatpush1.bf16.msra.mxu0 %v1046
    %1733 = vmatprep.subr.bf16.mxu0 0
    %1734 = vmatpush1.bf16.msra.mxu0 %v1047
    %1735 = vmatprep.subr.bf16.mxu0 0
    %1736 = vmatpush1.bf16.msra.mxu0 %v1048
    %1737 = vmatprep.subr.bf16.mxu0 0
    %1738 = vmatpush1.bf16.msra.mxu0 %v1049
    %1739 = vmatprep.subr.bf16.mxu0 0
    %1740 = vmatpush1.bf16.msra.mxu0 %v1050
    %1741 = vmatprep.subr.bf16.mxu0 0
    %1742 = vmatpush1.bf16.msra.mxu0 %v1051
    %1743 = vmatprep.subr.bf16.mxu0 0
    %1744 = vmatpush1.bf16.msra.mxu0 %v1052
    %1745 = vmatprep.subr.bf16.mxu0 0
    %1746 = vmatpush1.bf16.msra.mxu0 %v1053
    %1747 = vmatprep.subr.bf16.mxu0 0
    %1748 = vmatpush1.bf16.msra.mxu0 %v1054
    %1749 = vmatprep.subr.bf16.mxu0 0
    %1750 = vmatpush1.bf16.msra.mxu0 %v1055
    %1751 = vmatprep.subr.bf16.mxu0 0
    %1752 = vmatpush1.bf16.msra.mxu0 %v1056
    %1753 = vmatprep.mubr.bf16.mxu0 %v1690
    %1754 = vmatmul.mubr.bf16.gmra.mrb[0].mxu0 %v1689
    %v1755 = vpop.f32.mrb[0].mxu0
    %v1756 = vadd.f32 0.0, %v1755
    %v1757 = vpop.f32.mrb[0].mxu0
    %v1758 = vpop.f32.mrb[0].mxu0
    %v1759 = vadd.f32 0.0, %v1758
    %v1760 = vpop.f32.mrb[0].mxu0
    %1761 = vdwg.mxu0
    %1762 = vmatprep.subr.bf16.mxu0 0
    %1763 = vmatpush1.bf16.msra.mxu0 %v1057
    %1764 = vmatprep.subr.bf16.mxu0 0
    %1765 = vmatpush1.bf16.msra.mxu0 %v1058
    %1766 = vmatprep.subr.bf16.mxu0 0
    %1767 = vmatpush1.bf16.msra.mxu0 %v1059
    %1768 = vmatprep.subr.bf16.mxu0 0
    %1769 = vmatpush1.bf16.msra.mxu0 %v1060
    %1770 = vmatprep.subr.bf16.mxu0 0
    %1771 = vmatpush1.bf16.msra.mxu0 %v1061
    %1772 = vmatprep.subr.bf16.mxu0 0
    %1773 = vmatpush1.bf16.msra.mxu0 %v1062
    %1774 = vmatprep.subr.bf16.mxu0 0
    %1775 = vmatpush1.bf16.msra.mxu0 %v1063
    %1776 = vmatprep.subr.bf16.mxu0 0
    %1777 = vmatpush1.bf16.msra.mxu0 %v1064
    %1778 = vmatprep.subr.bf16.mxu0 0
    %1779 = vmatpush1.bf16.msra.mxu0 %v1065
    %1780 = vmatprep.subr.bf16.mxu0 0
    %1781 = vmatpush1.bf16.msra.mxu0 %v1066
    %1782 = vmatprep.subr.bf16.mxu0 0
    %1783 = vmatpush1.bf16.msra.mxu0 %v1067
    %1784 = vmatprep.subr.bf16.mxu0 0
    %1785 = vmatpush1.bf16.msra.mxu0 %v1068
    %1786 = vmatprep.subr.bf16.mxu0 0
    %1787 = vmatpush1.bf16.msra.mxu0 %v1069
    %1788 = vmatprep.subr.bf16.mxu0 0
    %1789 = vmatpush1.bf16.msra.mxu0 %v1070
    %1790 = vmatprep.subr.bf16.mxu0 0
    %1791 = vmatpush1.bf16.msra.mxu0 %v1071
    %1792 = vmatprep.subr.bf16.mxu0 0
    %1793 = vmatpush1.bf16.msra.mxu0 %v1072
    %1794 = vmatprep.mubr.bf16.mxu0 %v1692
    %1795 = vmatmul.mubr.bf16.gmra.mrb[0].mxu0 %v1691
    %v1796 = vpop.f32.mrb[0].mxu0
    %v1797 = vadd.f32 %v1756, %v1796
    %v1798 = vpop.f32.mrb[0].mxu0
    %v1799 = vpop.f32.mrb[0].mxu0
    %v1800 = vadd.f32 %v1759, %v1799
    %v1801 = vpop.f32.mrb[0].mxu0
    %1802 = vdwg.mxu0
    %1803 = vmatprep.subr.bf16.mxu0 0
    %1804 = vmatpush1.bf16.msra.mxu0 %v1073
    %1805 = vmatprep.subr.bf16.mxu0 0
    %1806 = vmatpush1.bf16.msra.mxu0 %v1074
    %1807 = vmatprep.subr.bf16.mxu0 0
    %1808 = vmatpush1.bf16.msra.mxu0 %v1075
    %1809 = vmatprep.subr.bf16.mxu0 0
    %1810 = vmatpush1.bf16.msra.mxu0 %v1076
    %1811 = vmatprep.subr.bf16.mxu0 0
    %1812 = vmatpush1.bf16.msra.mxu0 %v1077
    %1813 = vmatprep.subr.bf16.mxu0 0
    %1814 = vmatpush1.bf16.msra.mxu0 %v1078
    %1815 = vmatprep.subr.bf16.mxu0 0
    %1816 = vmatpush1.bf16.msra.mxu0 %v1079
    %1817 = vmatprep.subr.bf16.mxu0 0
    %1818 = vmatpush1.bf16.msra.mxu0 %v1080
    %1819 = vmatprep.subr.bf16.mxu0 0
    %1820 = vmatpush1.bf16.msra.mxu0 %v1081
    %1821 = vmatprep.subr.bf16.mxu0 0
    %1822 = vmatpush1.bf16.msra.mxu0 %v1082
    %1823 = vmatprep.subr.bf16.mxu0 0
    %1824 = vmatpush1.bf16.msra.mxu0 %v1083
    %1825 = vmatprep.subr.bf16.mxu0 0
    %1826 = vmatpush1.bf16.msra.mxu0 %v1084
    %1827 = vmatprep.subr.bf16.mxu0 0
    %1828 = vmatpush1.bf16.msra.mxu0 %v1085
    %1829 = vmatprep.subr.bf16.mxu0 0
    %1830 = vmatpush1.bf16.msra.mxu0 %v1086
    %1831 = vmatprep.subr.bf16.mxu0 0
    %1832 = vmatpush1.bf16.msra.mxu0 %v1087
    %1833 = vmatprep.subr.bf16.mxu0 0
    %1834 = vmatpush1.bf16.msra.mxu0 %v1088
    %1835 = vmatprep.mubr.bf16.mxu0 %v1694
    %1836 = vmatmul.mubr.bf16.gmra.mrb[0].mxu0 %v1693
    %v1837 = vpop.f32.mrb[0].mxu0
    %v1838 = vadd.f32 %v1797, %v1837
    %v1839 = vpop.f32.mrb[0].mxu0
    %v1840 = vpop.f32.mrb[0].mxu0
    %v1841 = vadd.f32 %v1800, %v1840
    %v1842 = vpop.f32.mrb[0].mxu0
    %1843 = vdwg.mxu0
    %1844 = vmatprep.subr.bf16.mxu0 0
    %1845 = vmatpush1.bf16.msra.mxu0 %v1089
    %1846 = vmatprep.subr.bf16.mxu0 0
    %1847 = vmatpush1.bf16.msra.mxu0 %v1090
    %1848 = vmatprep.subr.bf16.mxu0 0
    %1849 = vmatpush1.bf16.msra.mxu0 %v1091
    %1850 = vmatprep.subr.bf16.mxu0 0
    %1851 = vmatpush1.bf16.msra.mxu0 %v1092
    %1852 = vmatprep.subr.bf16.mxu0 0
    %1853 = vmatpush1.bf16.msra.mxu0 %v1093
    %1854 = vmatprep.subr.bf16.mxu0 0
    %1855 = vmatpush1.bf16.msra.mxu0 %v1094
    %1856 = vmatprep.subr.bf16.mxu0 0
    %1857 = vmatpush1.bf16.msra.mxu0 %v1095
    %1858 = vmatprep.subr.bf16.mxu0 0
    %1859 = vmatpush1.bf16.msra.mxu0 %v1096
    %1860 = vmatprep.subr.bf16.mxu0 0
    %1861 = vmatpush1.bf16.msra.mxu0 %v1097
    %1862 = vmatprep.subr.bf16.mxu0 0
    %1863 = vmatpush1.bf16.msra.mxu0 %v1098
    %1864 = vmatprep.subr.bf16.mxu0 0
    %1865 = vmatpush1.bf16.msra.mxu0 %v1099
    %1866 = vmatprep.subr.bf16.mxu0 0
    %1867 = vmatpush1.bf16.msra.mxu0 %v1100
    %1868 = vmatprep.subr.bf16.mxu0 0
    %1869 = vmatpush1.bf16.msra.mxu0 %v1101
    %1870 = vmatprep.subr.bf16.mxu0 0
    %1871 = vmatpush1.bf16.msra.mxu0 %v1102
    %1872 = vmatprep.subr.bf16.mxu0 0
    %1873 = vmatpush1.bf16.msra.mxu0 %v1103
    %1874 = vmatprep.subr.bf16.mxu0 0
    %1875 = vmatpush1.bf16.msra.mxu0 %v1104
    %1876 = vmatprep.mubr.bf16.mxu0 %v1696
    %1877 = vmatmul.mubr.bf16.gmra.mrb[0].mxu0 %v1695
    %v1878 = vpop.f32.mrb[0].mxu0
    %v1879 = vadd.f32 %v1838, %v1878
    %v1880 = vpop.f32.mrb[0].mxu0
    %v1881 = vpop.f32.mrb[0].mxu0
    %v1882 = vadd.f32 %v1841, %v1881
    %v1883 = vpop.f32.mrb[0].mxu0
    %1884 = vdwg.mxu0
    %1885 = vmatprep.subr.bf16.mxu0 0
    %1886 = vmatpush1.bf16.msra.mxu0 %v1105
    %1887 = vmatprep.subr.bf16.mxu0 0
    %1888 = vmatpush1.bf16.msra.mxu0 %v1106
    %1889 = vmatprep.subr.bf16.mxu0 0
    %1890 = vmatpush1.bf16.msra.mxu0 %v1107
    %1891 = vmatprep.subr.bf16.mxu0 0
    %1892 = vmatpush1.bf16.msra.mxu0 %v1108
    %1893 = vmatprep.subr.bf16.mxu0 0
    %1894 = vmatpush1.bf16.msra.mxu0 %v1109
    %1895 = vmatprep.subr.bf16.mxu0 0
    %1896 = vmatpush1.bf16.msra.mxu0 %v1110
    %1897 = vmatprep.subr.bf16.mxu0 0
    %1898 = vmatpush1.bf16.msra.mxu0 %v1111
    %1899 = vmatprep.subr.bf16.mxu0 0
    %1900 = vmatpush1.bf16.msra.mxu0 %v1112
    %1901 = vmatprep.subr.bf16.mxu0 0
    %1902 = vmatpush1.bf16.msra.mxu0 %v1113
    %1903 = vmatprep.subr.bf16.mxu0 0
    %1904 = vmatpush1.bf16.msra.mxu0 %v1114
    %1905 = vmatprep.subr.bf16.mxu0 0
    %1906 = vmatpush1.bf16.msra.mxu0 %v1115
    %1907 = vmatprep.subr.bf16.mxu0 0
    %1908 = vmatpush1.bf16.msra.mxu0 %v1116
    %1909 = vmatprep.subr.bf16.mxu0 0
    %1910 = vmatpush1.bf16.msra.mxu0 %v1117
    %1911 = vmatprep.subr.bf16.mxu0 0
    %1912 = vmatpush1.bf16.msra.mxu0 %v1118
    %1913 = vmatprep.subr.bf16.mxu0 0
    %1914 = vmatpush1.bf16.msra.mxu0 %v1119
    %1915 = vmatprep.subr.bf16.mxu0 0
    %1916 = vmatpush1.bf16.msra.mxu0 %v1120
    %1917 = vmatprep.mubr.bf16.mxu0 %v1698
    %1918 = vmatmul.mubr.bf16.gmra.mrb[0].mxu0 %v1697
    %v1919 = vpop.f32.mrb[0].mxu0
    %v1920 = vadd.f32 %v1879, %v1919
    %v1921 = vpop.f32.mrb[0].mxu0
    %v1922 = vpop.f32.mrb[0].mxu0
    %v1923 = vadd.f32 %v1882, %v1922
    %v1924 = vpop.f32.mrb[0].mxu0
    %1925 = vdwg.mxu0
    %1926 = vmatprep.subr.bf16.mxu0 0
    %1927 = vmatpush1.bf16.msra.mxu0 %v1121
    %1928 = vmatprep.subr.bf16.mxu0 0
    %1929 = vmatpush1.bf16.msra.mxu0 %v1122
    %1930 = vmatprep.subr.bf16.mxu0 0
    %1931 = vmatpush1.bf16.msra.mxu0 %v1123
    %1932 = vmatprep.subr.bf16.mxu0 0
    %1933 = vmatpush1.bf16.msra.mxu0 %v1124
    %1934 = vmatprep.subr.bf16.mxu0 0
    %1935 = vmatpush1.bf16.msra.mxu0 %v1125
    %1936 = vmatprep.subr.bf16.mxu0 0
    %1937 = vmatpush1.bf16.msra.mxu0 %v1126
    %1938 = vmatprep.subr.bf16.mxu0 0
    %1939 = vmatpush1.bf16.msra.mxu0 %v1127
    %1940 = vmatprep.subr.bf16.mxu0 0
    %1941 = vmatpush1.bf16.msra.mxu0 %v1128
    %1942 = vmatprep.subr.bf16.mxu0 0
    %1943 = vmatpush1.bf16.msra.mxu0 %v1129
    %1944 = vmatprep.subr.bf16.mxu0 0
    %1945 = vmatpush1.bf16.msra.mxu0 %v1130
    %1946 = vmatprep.subr.bf16.mxu0 0
    %1947 = vmatpush1.bf16.msra.mxu0 %v1131
    %1948 = vmatprep.subr.bf16.mxu0 0
    %1949 = vmatpush1.bf16.msra.mxu0 %v1132
    %1950 = vmatprep.subr.bf16.mxu0 0
    %1951 = vmatpush1.bf16.msra.mxu0 %v1133
    %1952 = vmatprep.subr.bf16.mxu0 0
    %1953 = vmatpush1.bf16.msra.mxu0 %v1134
    %1954 = vmatprep.subr.bf16.mxu0 0
    %1955 = vmatpush1.bf16.msra.mxu0 %v1135
    %1956 = vmatprep.subr.bf16.mxu0 0
    %1957 = vmatpush1.bf16.msra.mxu0 %v1136
    %1958 = vmatprep.mubr.bf16.mxu0 %v1700
    %1959 = vmatmul.mubr.bf16.gmra.mrb[0].mxu0 %v1699
    %v1960 = vpop.f32.mrb[0].mxu0
    %v1961 = vadd.f32 %v1920, %v1960
    %v1962 = vpop.f32.mrb[0].mxu0
    %v1963 = vpop.f32.mrb[0].mxu0
    %v1964 = vadd.f32 %v1923, %v1963
    %v1965 = vpop.f32.mrb[0].mxu0
    %1966 = vdwg.mxu0
    %1967 = vmatprep.subr.bf16.mxu0 0
    %1968 = vmatpush1.bf16.msra.mxu0 %v1137
    %1969 = vmatprep.subr.bf16.mxu0 0
    %1970 = vmatpush1.bf16.msra.mxu0 %v1138
    %1971 = vmatprep.subr.bf16.mxu0 0
    %1972 = vmatpush1.bf16.msra.mxu0 %v1139
    %1973 = vmatprep.subr.bf16.mxu0 0
    %1974 = vmatpush1.bf16.msra.mxu0 %v1140
    %1975 = vmatprep.subr.bf16.mxu0 0
    %1976 = vmatpush1.bf16.msra.mxu0 %v1141
    %1977 = vmatprep.subr.bf16.mxu0 0
    %1978 = vmatpush1.bf16.msra.mxu0 %v1142
    %1979 = vmatprep.subr.bf16.mxu0 0
    %1980 = vmatpush1.bf16.msra.mxu0 %v1143
    %1981 = vmatprep.subr.bf16.mxu0 0
    %1982 = vmatpush1.bf16.msra.mxu0 %v1144
    %1983 = vmatprep.subr.bf16.mxu0 0
    %1984 = vmatpush1.bf16.msra.mxu0 %v1145
    %1985 = vmatprep.subr.bf16.mxu0 0
    %1986 = vmatpush1.bf16.msra.mxu0 %v1146
    %1987 = vmatprep.subr.bf16.mxu0 0
    %1988 = vmatpush1.bf16.msra.mxu0 %v1147
    %1989 = vmatprep.subr.bf16.mxu0 0
    %1990 = vmatpush1.bf16.msra.mxu0 %v1148
    %1991 = vmatprep.subr.bf16.mxu0 0
    %1992 = vmatpush1.bf16.msra.mxu0 %v1149
    %1993 = vmatprep.subr.bf16.mxu0 0
    %1994 = vmatpush1.bf16.msra.mxu0 %v1150
    %1995 = vmatprep.subr.bf16.mxu0 0
    %1996 = vmatpush1.bf16.msra.mxu0 %v1151
    %1997 = vmatprep.subr.bf16.mxu0 0
    %1998 = vmatpush1.bf16.msra.mxu0 %v1152
    %1999 = vmatprep.mubr.bf16.mxu0 %v1702
    %2000 = vmatmul.mubr.bf16.gmra.mrb[0].mxu0 %v1701
    %v2001 = vpop.f32.mrb[0].mxu0
    %v2002 = vadd.f32 %v1961, %v2001
    %v2003 = vpop.f32.mrb[0].mxu0
    %v2004 = vpop.f32.mrb[0].mxu0
    %v2005 = vadd.f32 %v1964, %v2004
    %v2006 = vpop.f32.mrb[0].mxu0
    %2007 = vdwg.mxu0
    %2008 = vmatprep.subr.bf16.mxu0 0
    %2009 = vmatpush1.bf16.msra.mxu0 %v1153
    %2010 = vmatprep.subr.bf16.mxu0 0
    %2011 = vmatpush1.bf16.msra.mxu0 %v1154
    %2012 = vmatprep.subr.bf16.mxu0 0
    %2013 = vmatpush1.bf16.msra.mxu0 %v1155
    %2014 = vmatprep.subr.bf16.mxu0 0
    %2015 = vmatpush1.bf16.msra.mxu0 %v1156
    %2016 = vmatprep.subr.bf16.mxu0 0
    %2017 = vmatpush1.bf16.msra.mxu0 %v1157
    %2018 = vmatprep.subr.bf16.mxu0 0
    %2019 = vmatpush1.bf16.msra.mxu0 %v1158
    %2020 = vmatprep.subr.bf16.mxu0 0
    %2021 = vmatpush1.bf16.msra.mxu0 %v1159
    %2022 = vmatprep.subr.bf16.mxu0 0
    %2023 = vmatpush1.bf16.msra.mxu0 %v1160
    %2024 = vmatprep.subr.bf16.mxu0 0
    %2025 = vmatpush1.bf16.msra.mxu0 %v1161
    %2026 = vmatprep.subr.bf16.mxu0 0
    %2027 = vmatpush1.bf16.msra.mxu0 %v1162
    %2028 = vmatprep.subr.bf16.mxu0 0
    %2029 = vmatpush1.bf16.msra.mxu0 %v1163
    %2030 = vmatprep.subr.bf16.mxu0 0
    %2031 = vmatpush1.bf16.msra.mxu0 %v1164
    %2032 = vmatprep.subr.bf16.mxu0 0
    %2033 = vmatpush1.bf16.msra.mxu0 %v1165
    %2034 = vmatprep.subr.bf16.mxu0 0
    %2035 = vmatpush1.bf16.msra.mxu0 %v1166
    %2036 = vmatprep.subr.bf16.mxu0 0
    %2037 = vmatpush1.bf16.msra.mxu0 %v1167
    %2038 = vmatprep.subr.bf16.mxu0 0
    %2039 = vmatpush1.bf16.msra.mxu0 %v1168
    %2040 = vmatprep.mubr.bf16.mxu0 %v1704
    %2041 = vmatmul.mubr.bf16.gmra.mrb[0].mxu0 %v1703
    %v2042 = vpop.f32.mrb[0].mxu0
    %v2043 = vadd.f32 %v2002, %v2042
    %v2044 = vpop.f32.mrb[0].mxu0
    %v2045 = vpop.f32.mrb[0].mxu0
    %v2046 = vadd.f32 %v2005, %v2045
    %v2047 = vpop.f32.mrb[0].mxu0
    %2048 = vdwg.mxu0
    %v2049 = vld [vmem:[#allocation8] sm:$0xff]
    %v2050 = vld [vmem:[#allocation8 + $0x8] sm:$0xff]
    %v2051 = vld [vmem:[#allocation8 + $0x10] sm:$0xff]
    %v2052 = vld [vmem:[#allocation8 + $0x18] sm:$0xff]
    %v2053 = vld [vmem:[#allocation8 + $0x20] sm:$0xff]
    %v2054 = vld [vmem:[#allocation8 + $0x28] sm:$0xff]
    %v2055 = vld [vmem:[#allocation11] sm:$0xf]
    %v2056 = vld [vmem:[#allocation11 + $0x4] sm:$0xf]
    %v2057 = vld [vmem:[#allocation11 + $0x8] sm:$0xf]
    %v2058 = vld [vmem:[#allocation11 + $0xc] sm:$0xf]
    %v2059 = vld [vmem:[#allocation11 + $0x10] sm:$0xf]
    %v2060 = vld [vmem:[#allocation11 + $0x14] sm:$0xf]
    %v2061 = vld [vmem:[#allocation11 + $0x18] sm:$0xf]
    %v2062 = vld [vmem:[#allocation11 + $0x1c] sm:$0xf]
    %v2063 = vld [vmem:[#allocation11 + $0x20] sm:$0xf]
    %v2064 = vld [vmem:[#allocation11 + $0x24] sm:$0xf]
    %v2065 = vld [vmem:[#allocation11 + $0x28] sm:$0xf]
    %v2066 = vld [vmem:[#allocation11 + $0x2c] sm:$0xf]
    %v2067 = vld [vmem:[#allocation11 + $0x30] sm:$0xf]
    %v2068 = vld [vmem:[#allocation11 + $0x34] sm:$0xf]
    %v2069 = vld [vmem:[#allocation11 + $0x38] sm:$0xf]
    %v2070 = vld [vmem:[#allocation11 + $0x3c] sm:$0xf]
    %v2071 = vld [vmem:[#allocation11 + $0x40] sm:$0xf]
    %v2072 = vld [vmem:[#allocation11 + $0x44] sm:$0xf]
    %v2073 = vld [vmem:[#allocation11 + $0x48] sm:$0xf]
    %v2074 = vld [vmem:[#allocation11 + $0x4c] sm:$0xf]
    %v2075 = vld [vmem:[#allocation11 + $0x50] sm:$0xf]
    %v2076 = vld [vmem:[#allocation11 + $0x54] sm:$0xf]
    %v2077 = vld [vmem:[#allocation11 + $0x58] sm:$0xf]
    %v2078 = vld [vmem:[#allocation11 + $0x5c] sm:$0xf]
    %v2079 = vld [vmem:[#allocation11 + $0x60] sm:$0xf]
    %v2080 = vld [vmem:[#allocation11 + $0x64] sm:$0xf]
    %v2081 = vld [vmem:[#allocation11 + $0x68] sm:$0xf]
    %v2082 = vld [vmem:[#allocation11 + $0x6c] sm:$0xf]
    %v2083 = vld [vmem:[#allocation11 + $0x70] sm:$0xf]
    %v2084 = vld [vmem:[#allocation11 + $0x74] sm:$0xf]
    %v2085 = vld [vmem:[#allocation11 + $0x78] sm:$0xf]
    %v2086 = vld [vmem:[#allocation11 + $0x7c] sm:$0xf]
    %v2087 = vld [vmem:[#allocation11 + $0x80] sm:$0xf]
    %v2088 = vld [vmem:[#allocation11 + $0x84] sm:$0xf]
    %v2089 = vld [vmem:[#allocation11 + $0x88] sm:$0xf]
    %v2090 = vld [vmem:[#allocation11 + $0x8c] sm:$0xf]
    %v2091 = vld [vmem:[#allocation11 + $0x90] sm:$0xf]
    %v2092 = vld [vmem:[#allocation11 + $0x94] sm:$0xf]
    %v2093 = vld [vmem:[#allocation11 + $0x98] sm:$0xf]
    %v2094 = vld [vmem:[#allocation11 + $0x9c] sm:$0xf]
    %v2095 = vld [vmem:[#allocation11 + $0xa0] sm:$0xf]
    %v2096 = vld [vmem:[#allocation11 + $0xa4] sm:$0xf]
    %v2097 = vld [vmem:[#allocation11 + $0xa8] sm:$0xf]
    %v2098 = vld [vmem:[#allocation11 + $0xac] sm:$0xf]
    %v2099 = vld [vmem:[#allocation11 + $0xb0] sm:$0xf]
    %v2100 = vld [vmem:[#allocation11 + $0xb4] sm:$0xf]
    %v2101 = vld [vmem:[#allocation11 + $0xb8] sm:$0xf]
    %v2102 = vld [vmem:[#allocation11 + $0xbc] sm:$0xf]
    %v2103 = vld [vmem:[#allocation11 + $0xc0] sm:$0xf]
    %v2104 = vld [vmem:[#allocation11 + $0xc4] sm:$0xf]
    %v2105 = vld [vmem:[#allocation11 + $0xc8] sm:$0xf]
    %v2106 = vld [vmem:[#allocation11 + $0xcc] sm:$0xf]
    %v2107 = vld [vmem:[#allocation11 + $0xd0] sm:$0xf]
    %v2108 = vld [vmem:[#allocation11 + $0xd4] sm:$0xf]
    %v2109 = vld [vmem:[#allocation11 + $0xd8] sm:$0xf]
    %v2110 = vld [vmem:[#allocation11 + $0xdc] sm:$0xf]
    %v2111 = vld [vmem:[#allocation11 + $0xe0] sm:$0xf]
    %v2112 = vld [vmem:[#allocation11 + $0xe4] sm:$0xf]
    %v2113 = vld [vmem:[#allocation11 + $0xe8] sm:$0xf]
    %v2114 = vld [vmem:[#allocation11 + $0xec] sm:$0xf]
    %v2115 = vld [vmem:[#allocation11 + $0xf0] sm:$0xf]
    %v2116 = vld [vmem:[#allocation11 + $0xf4] sm:$0xf]
    %v2117 = vld [vmem:[#allocation11 + $0xf8] sm:$0xf]
    %v2118 = vld [vmem:[#allocation11 + $0xfc] sm:$0xf]
    %v2119 = vld [vmem:[#allocation11 + $0x100] sm:$0xf]
    %v2120 = vld [vmem:[#allocation11 + $0x104] sm:$0xf]
    %v2121 = vld [vmem:[#allocation11 + $0x108] sm:$0xf]
    %v2122 = vld [vmem:[#allocation11 + $0x10c] sm:$0xf]
    %v2123 = vld [vmem:[#allocation11 + $0x110] sm:$0xf]
    %v2124 = vld [vmem:[#allocation11 + $0x114] sm:$0xf]
    %v2125 = vld [vmem:[#allocation11 + $0x118] sm:$0xf]
    %v2126 = vld [vmem:[#allocation11 + $0x11c] sm:$0xf]
    %v2127 = vld [vmem:[#allocation11 + $0x120] sm:$0xf]
    %v2128 = vld [vmem:[#allocation11 + $0x124] sm:$0xf]
    %v2129 = vld [vmem:[#allocation11 + $0x128] sm:$0xf]
    %v2130 = vld [vmem:[#allocation11 + $0x12c] sm:$0xf]
    %v2131 = vld [vmem:[#allocation11 + $0x130] sm:$0xf]
    %v2132 = vld [vmem:[#allocation11 + $0x134] sm:$0xf]
    %v2133 = vld [vmem:[#allocation11 + $0x138] sm:$0xf]
    %v2134 = vld [vmem:[#allocation11 + $0x13c] sm:$0xf]
    %v2135 = vld [vmem:[#allocation11 + $0x140] sm:$0xf]
    %v2136 = vld [vmem:[#allocation11 + $0x144] sm:$0xf]
    %v2137 = vld [vmem:[#allocation11 + $0x148] sm:$0xf]
    %v2138 = vld [vmem:[#allocation11 + $0x14c] sm:$0xf]
    %v2139 = vld [vmem:[#allocation11 + $0x150] sm:$0xf]
    %v2140 = vld [vmem:[#allocation11 + $0x154] sm:$0xf]
    %v2141 = vld [vmem:[#allocation11 + $0x158] sm:$0xf]
    %v2142 = vld [vmem:[#allocation11 + $0x15c] sm:$0xf]
    %v2143 = vld [vmem:[#allocation11 + $0x160] sm:$0xf]
    %v2144 = vld [vmem:[#allocation11 + $0x164] sm:$0xf]
    %v2145 = vld [vmem:[#allocation11 + $0x168] sm:$0xf]
    %v2146 = vld [vmem:[#allocation11 + $0x16c] sm:$0xf]
    %v2147 = vld [vmem:[#allocation11 + $0x170] sm:$0xf]
    %v2148 = vld [vmem:[#allocation11 + $0x174] sm:$0xf]
    %v2149 = vld [vmem:[#allocation11 + $0x178] sm:$0xf]
    %v2150 = vld [vmem:[#allocation11 + $0x17c] sm:$0xf]
    %v2157 = vunpack.c.l.b16 %v2049
    %v2158 = vunpack.c.h.b16 %v2049
    %v2159 = vunpack.c.l.b16 %v2050
    %v2160 = vunpack.c.h.b16 %v2050
    %v2161 = vunpack.c.l.b16 %v2051
    %v2162 = vunpack.c.h.b16 %v2051
    %v2163 = vunpack.c.l.b16 %v2052
    %v2164 = vunpack.c.h.b16 %v2052
    %v2165 = vunpack.c.l.b16 %v2053
    %v2166 = vunpack.c.h.b16 %v2053
    %v2167 = vunpack.c.l.b16 %v2054
    %v2168 = vunpack.c.h.b16 %v2054
    %v2169 = vpack.c.b16 %v2163, %v2157
    %v2170 = vpack.c.b16 %v2164, %v2158
    %v2171 = vpack.c.b16 %v2165, %v2159
    %v2172 = vpack.c.b16 %v2166, %v2160
    %v2173 = vpack.c.b16 %v2167, %v2161
    %v2174 = vpack.c.b16 %v2168, %v2162
    %v2277 = vunpack.c.l.b16 %v2055
    %v2278 = vunpack.c.l.b16 %v2056
    %v2279 = vunpack.c.l.b16 %v2057
    %v2280 = vunpack.c.l.b16 %v2058
    %v2281 = vunpack.c.l.b16 %v2059
    %v2282 = vunpack.c.l.b16 %v2060
    %v2283 = vunpack.c.l.b16 %v2061
    %v2284 = vunpack.c.l.b16 %v2062
    %v2285 = vunpack.c.l.b16 %v2063
    %v2286 = vunpack.c.l.b16 %v2064
    %v2287 = vunpack.c.l.b16 %v2065
    %v2288 = vunpack.c.l.b16 %v2066
    %v2289 = vunpack.c.l.b16 %v2067
    %v2290 = vunpack.c.l.b16 %v2068
    %v2291 = vunpack.c.l.b16 %v2069
    %v2292 = vunpack.c.l.b16 %v2070
    %v2293 = vunpack.c.l.b16 %v2071
    %v2294 = vunpack.c.l.b16 %v2072
    %v2295 = vunpack.c.l.b16 %v2073
    %v2296 = vunpack.c.l.b16 %v2074
    %v2297 = vunpack.c.l.b16 %v2075
    %v2298 = vunpack.c.l.b16 %v2076
    %v2299 = vunpack.c.l.b16 %v2077
    %v2300 = vunpack.c.l.b16 %v2078
    %v2301 = vunpack.c.l.b16 %v2079
    %v2302 = vunpack.c.l.b16 %v2080
    %v2303 = vunpack.c.l.b16 %v2081
    %v2304 = vunpack.c.l.b16 %v2082
    %v2305 = vunpack.c.l.b16 %v2083
    %v2306 = vunpack.c.l.b16 %v2084
    %v2307 = vunpack.c.l.b16 %v2085
    %v2308 = vunpack.c.l.b16 %v2086
    %v2309 = vunpack.c.l.b16 %v2087
    %v2310 = vunpack.c.l.b16 %v2088
    %v2311 = vunpack.c.l.b16 %v2089
    %v2312 = vunpack.c.l.b16 %v2090
    %v2313 = vunpack.c.l.b16 %v2091
    %v2314 = vunpack.c.l.b16 %v2092
    %v2315 = vunpack.c.l.b16 %v2093
    %v2316 = vunpack.c.l.b16 %v2094
    %v2317 = vunpack.c.l.b16 %v2095
    %v2318 = vunpack.c.l.b16 %v2096
    %v2319 = vunpack.c.l.b16 %v2097
    %v2320 = vunpack.c.l.b16 %v2098
    %v2321 = vunpack.c.l.b16 %v2099
    %v2322 = vunpack.c.l.b16 %v2100
    %v2323 = vunpack.c.l.b16 %v2101
    %v2324 = vunpack.c.l.b16 %v2102
    %v2325 = vunpack.c.l.b16 %v2103
    %v2326 = vunpack.c.l.b16 %v2104
    %v2327 = vunpack.c.l.b16 %v2105
    %v2328 = vunpack.c.l.b16 %v2106
    %v2329 = vunpack.c.l.b16 %v2107
    %v2330 = vunpack.c.l.b16 %v2108
    %v2331 = vunpack.c.l.b16 %v2109
    %v2332 = vunpack.c.l.b16 %v2110
    %v2333 = vunpack.c.l.b16 %v2111
    %v2334 = vunpack.c.l.b16 %v2112
    %v2335 = vunpack.c.l.b16 %v2113
    %v2336 = vunpack.c.l.b16 %v2114
    %v2337 = vunpack.c.l.b16 %v2115
    %v2338 = vunpack.c.l.b16 %v2116
    %v2339 = vunpack.c.l.b16 %v2117
    %v2340 = vunpack.c.l.b16 %v2118
    %v2341 = vunpack.c.l.b16 %v2119
    %v2342 = vunpack.c.l.b16 %v2120
    %v2343 = vunpack.c.l.b16 %v2121
    %v2344 = vunpack.c.l.b16 %v2122
    %v2345 = vunpack.c.l.b16 %v2123
    %v2346 = vunpack.c.l.b16 %v2124
    %v2347 = vunpack.c.l.b16 %v2125
    %v2348 = vunpack.c.l.b16 %v2126
    %v2349 = vunpack.c.l.b16 %v2127
    %v2350 = vunpack.c.l.b16 %v2128
    %v2351 = vunpack.c.l.b16 %v2129
    %v2352 = vunpack.c.l.b16 %v2130
    %v2353 = vunpack.c.l.b16 %v2131
    %v2354 = vunpack.c.l.b16 %v2132
    %v2355 = vunpack.c.l.b16 %v2133
    %v2356 = vunpack.c.l.b16 %v2134
    %v2357 = vunpack.c.l.b16 %v2135
    %v2358 = vunpack.c.l.b16 %v2136
    %v2359 = vunpack.c.l.b16 %v2137
    %v2360 = vunpack.c.l.b16 %v2138
    %v2361 = vunpack.c.l.b16 %v2139
    %v2362 = vunpack.c.l.b16 %v2140
    %v2363 = vunpack.c.l.b16 %v2141
    %v2364 = vunpack.c.l.b16 %v2142
    %v2365 = vunpack.c.l.b16 %v2143
    %v2366 = vunpack.c.l.b16 %v2144
    %v2367 = vunpack.c.l.b16 %v2145
    %v2368 = vunpack.c.l.b16 %v2146
    %v2369 = vunpack.c.l.b16 %v2147
    %v2370 = vunpack.c.l.b16 %v2148
    %v2371 = vunpack.c.l.b16 %v2149
    %v2372 = vunpack.c.l.b16 %v2150
    %v2373 = vpack.c.b16 %v2278, %v2277
    %v2374 = vpack.c.b16 %v2280, %v2279
    %v2375 = vpack.c.b16 %v2282, %v2281
    %v2376 = vpack.c.b16 %v2284, %v2283
    %v2377 = vpack.c.b16 %v2286, %v2285
    %v2378 = vpack.c.b16 %v2288, %v2287
    %v2379 = vpack.c.b16 %v2290, %v2289
    %v2380 = vpack.c.b16 %v2292, %v2291
    %v2381 = vpack.c.b16 %v2294, %v2293
    %v2382 = vpack.c.b16 %v2296, %v2295
    %v2383 = vpack.c.b16 %v2298, %v2297
    %v2384 = vpack.c.b16 %v2300, %v2299
    %v2385 = vpack.c.b16 %v2302, %v2301
    %v2386 = vpack.c.b16 %v2304, %v2303
    %v2387 = vpack.c.b16 %v2306, %v2305
    %v2388 = vpack.c.b16 %v2308, %v2307
    %v2389 = vpack.c.b16 %v2310, %v2309
    %v2390 = vpack.c.b16 %v2312, %v2311
    %v2391 = vpack.c.b16 %v2314, %v2313
    %v2392 = vpack.c.b16 %v2316, %v2315
    %v2393 = vpack.c.b16 %v2318, %v2317
    %v2394 = vpack.c.b16 %v2320, %v2319
    %v2395 = vpack.c.b16 %v2322, %v2321
    %v2396 = vpack.c.b16 %v2324, %v2323
    %v2397 = vpack.c.b16 %v2326, %v2325
    %v2398 = vpack.c.b16 %v2328, %v2327
    %v2399 = vpack.c.b16 %v2330, %v2329
    %v2400 = vpack.c.b16 %v2332, %v2331
    %v2401 = vpack.c.b16 %v2334, %v2333
    %v2402 = vpack.c.b16 %v2336, %v2335
    %v2403 = vpack.c.b16 %v2338, %v2337
    %v2404 = vpack.c.b16 %v2340, %v2339
    %v2405 = vpack.c.b16 %v2342, %v2341
    %v2406 = vpack.c.b16 %v2344, %v2343
    %v2407 = vpack.c.b16 %v2346, %v2345
    %v2408 = vpack.c.b16 %v2348, %v2347
    %v2409 = vpack.c.b16 %v2350, %v2349
    %v2410 = vpack.c.b16 %v2352, %v2351
    %v2411 = vpack.c.b16 %v2354, %v2353
    %v2412 = vpack.c.b16 %v2356, %v2355
    %v2413 = vpack.c.b16 %v2358, %v2357
    %v2414 = vpack.c.b16 %v2360, %v2359
    %v2415 = vpack.c.b16 %v2362, %v2361
    %v2416 = vpack.c.b16 %v2364, %v2363
    %v2417 = vpack.c.b16 %v2366, %v2365
    %v2418 = vpack.c.b16 %v2368, %v2367
    %v2419 = vpack.c.b16 %v2370, %v2369
    %v2420 = vpack.c.b16 %v2372, %v2371
    %2469 = vmatprep.subr.bf16.mxu0 0
    %2470 = vmatpush1.bf16.msra.mxu0 %v2373
    %2471 = vmatprep.subr.bf16.mxu0 0
    %2472 = vmatpush1.bf16.msra.mxu0 %v2374
    %2473 = vmatprep.subr.bf16.mxu0 0
    %2474 = vmatpush1.bf16.msra.mxu0 %v2375
    %2475 = vmatprep.subr.bf16.mxu0 0
    %2476 = vmatpush1.bf16.msra.mxu0 %v2376
    %2477 = vmatprep.subr.bf16.mxu0 0
    %2478 = vmatpush1.bf16.msra.mxu0 %v2377
    %2479 = vmatprep.subr.bf16.mxu0 0
    %2480 = vmatpush1.bf16.msra.mxu0 %v2378
    %2481 = vmatprep.subr.bf16.mxu0 0
    %2482 = vmatpush1.bf16.msra.mxu0 %v2379
    %2483 = vmatprep.subr.bf16.mxu0 0
    %2484 = vmatpush1.bf16.msra.mxu0 %v2380
    %2485 = vmatprep.subr.bf16.mxu0 0
    %2486 = vmatpush1.bf16.msra.mxu0 %v2381
    %2487 = vmatprep.subr.bf16.mxu0 0
    %2488 = vmatpush1.bf16.msra.mxu0 %v2382
    %2489 = vmatprep.subr.bf16.mxu0 0
    %2490 = vmatpush1.bf16.msra.mxu0 %v2383
    %2491 = vmatprep.subr.bf16.mxu0 0
    %2492 = vmatpush1.bf16.msra.mxu0 %v2384
    %2493 = vmatprep.subr.bf16.mxu0 0
    %2494 = vmatpush1.bf16.msra.mxu0 %v2385
    %2495 = vmatprep.subr.bf16.mxu0 0
    %2496 = vmatpush1.bf16.msra.mxu0 %v2386
    %2497 = vmatprep.subr.bf16.mxu0 0
    %2498 = vmatpush1.bf16.msra.mxu0 %v2387
    %2499 = vmatprep.subr.bf16.mxu0 0
    %2500 = vmatpush1.bf16.msra.mxu0 %v2388
    %2501 = vmatprep.mubr.bf16.mxu0 %v2170
    %2502 = vmatmul.mubr.bf16.gmra.mrb[0].mxu0 %v2169
    %v2503 = vpop.f32.mrb[0].mxu0
    %v2504 = vadd.f32 0.0, %v2503
    %v2505 = vpop.f32.mrb[0].mxu0
    %v2506 = vpop.f32.mrb[0].mxu0
    %v2507 = vadd.f32 0.0, %v2506
    %v2508 = vpop.f32.mrb[0].mxu0
    %2509 = vdwg.mxu0
    %2510 = vmatprep.subr.bf16.mxu0 0
    %2511 = vmatpush1.bf16.msra.mxu0 %v2389
    %2512 = vmatprep.subr.bf16.mxu0 0
    %2513 = vmatpush1.bf16.msra.mxu0 %v2390
    %2514 = vmatprep.subr.bf16.mxu0 0
    %2515 = vmatpush1.bf16.msra.mxu0 %v2391
    %2516 = vmatprep.subr.bf16.mxu0 0
    %2517 = vmatpush1.bf16.msra.mxu0 %v2392
    %2518 = vmatprep.subr.bf16.mxu0 0
    %2519 = vmatpush1.bf16.msra.mxu0 %v2393
    %2520 = vmatprep.subr.bf16.mxu0 0
    %2521 = vmatpush1.bf16.msra.mxu0 %v2394
    %2522 = vmatprep.subr.bf16.mxu0 0
    %2523 = vmatpush1.bf16.msra.mxu0 %v2395
    %2524 = vmatprep.subr.bf16.mxu0 0
    %2525 = vmatpush1.bf16.msra.mxu0 %v2396
    %2526 = vmatprep.subr.bf16.mxu0 0
    %2527 = vmatpush1.bf16.msra.mxu0 %v2397
    %2528 = vmatprep.subr.bf16.mxu0 0
    %2529 = vmatpush1.bf16.msra.mxu0 %v2398
    %2530 = vmatprep.subr.bf16.mxu0 0
    %2531 = vmatpush1.bf16.msra.mxu0 %v2399
    %2532 = vmatprep.subr.bf16.mxu0 0
    %2533 = vmatpush1.bf16.msra.mxu0 %v2400
    %2534 = vmatprep.subr.bf16.mxu0 0
    %2535 = vmatpush1.bf16.msra.mxu0 %v2401
    %2536 = vmatprep.subr.bf16.mxu0 0
    %2537 = vmatpush1.bf16.msra.mxu0 %v2402
    %2538 = vmatprep.subr.bf16.mxu0 0
    %2539 = vmatpush1.bf16.msra.mxu0 %v2403
    %2540 = vmatprep.subr.bf16.mxu0 0
    %2541 = vmatpush1.bf16.msra.mxu0 %v2404
    %2542 = vmatprep.mubr.bf16.mxu0 %v2172
    %2543 = vmatmul.mubr.bf16.gmra.mrb[0].mxu0 %v2171
    %v2544 = vpop.f32.mrb[0].mxu0
    %v2545 = vadd.f32 %v2504, %v2544
    %v2546 = vpop.f32.mrb[0].mxu0
    %v2547 = vpop.f32.mrb[0].mxu0
    %v2548 = vadd.f32 %v2507, %v2547
    %v2549 = vpop.f32.mrb[0].mxu0
    %2550 = vdwg.mxu0
    %2551 = vmatprep.subr.bf16.mxu0 0
    %2552 = vmatpush1.bf16.msra.mxu0 %v2405
    %2553 = vmatprep.subr.bf16.mxu0 0
    %2554 = vmatpush1.bf16.msra.mxu0 %v2406
    %2555 = vmatprep.subr.bf16.mxu0 0
    %2556 = vmatpush1.bf16.msra.mxu0 %v2407
    %2557 = vmatprep.subr.bf16.mxu0 0
    %2558 = vmatpush1.bf16.msra.mxu0 %v2408
    %2559 = vmatprep.subr.bf16.mxu0 0
    %2560 = vmatpush1.bf16.msra.mxu0 %v2409
    %2561 = vmatprep.subr.bf16.mxu0 0
    %2562 = vmatpush1.bf16.msra.mxu0 %v2410
    %2563 = vmatprep.subr.bf16.mxu0 0
    %2564 = vmatpush1.bf16.msra.mxu0 %v2411
    %2565 = vmatprep.subr.bf16.mxu0 0
    %2566 = vmatpush1.bf16.msra.mxu0 %v2412
    %2567 = vmatprep.subr.bf16.mxu0 0
    %2568 = vmatpush1.bf16.msra.mxu0 %v2413
    %2569 = vmatprep.subr.bf16.mxu0 0
    %2570 = vmatpush1.bf16.msra.mxu0 %v2414
    %2571 = vmatprep.subr.bf16.mxu0 0
    %2572 = vmatpush1.bf16.msra.mxu0 %v2415
    %2573 = vmatprep.subr.bf16.mxu0 0
    %2574 = vmatpush1.bf16.msra.mxu0 %v2416
    %2575 = vmatprep.subr.bf16.mxu0 0
    %2576 = vmatpush1.bf16.msra.mxu0 %v2417
    %2577 = vmatprep.subr.bf16.mxu0 0
    %2578 = vmatpush1.bf16.msra.mxu0 %v2418
    %2579 = vmatprep.subr.bf16.mxu0 0
    %2580 = vmatpush1.bf16.msra.mxu0 %v2419
    %2581 = vmatprep.subr.bf16.mxu0 0
    %2582 = vmatpush1.bf16.msra.mxu0 %v2420
    %2583 = vmatprep.mubr.bf16.mxu0 %v2174
    %2584 = vmatmul.mubr.bf16.gmra.mrb[0].mxu0 %v2173
    %v2585 = vpop.f32.mrb[0].mxu0
    %v2586 = vadd.f32 %v2545, %v2585
    %v2587 = vpop.f32.mrb[0].mxu0
    %v2588 = vpop.f32.mrb[0].mxu0
    %v2589 = vadd.f32 %v2548, %v2588
    %v2590 = vpop.f32.mrb[0].mxu0
    %2591 = vdwg.mxu0
    %v2592 = vpack.c.bf16 %v1622, %v1619
    %s2593 = smul.u32 0, 16
    %s2594 = sshra.s32 %s2593, 4
    %s2595 = sand.u32 %s2593, 15
    %s2596 = smul.addr %s2594, 8
    %s2597 = scalar_lea.vmem [#allocation2], %s2596
    %2598 = vst [vmem:[%s2597] sm:$0xff] %v2592
    %v2599 = vpack.c.bf16 %v2046, %v2043
    %s2600 = sadd.s32 %s2593, 16
    %s2601 = sshra.s32 %s2600, 4
    %s2602 = sand.u32 %s2600, 15
    %s2603 = smul.addr %s2601, 8
    %s2604 = scalar_lea.vmem [#allocation2], %s2603
    %2605 = vst [vmem:[%s2604] sm:$0xff] %v2599
    %v2606 = vpack.c.bf16 %v2589, %v2586
    %s2607 = sadd.s32 %s2593, 32
    %s2608 = sshra.s32 %s2607, 4
    %s2609 = sand.u32 %s2607, 15
    %s2610 = smul.addr %s2608, 8
    %s2611 = scalar_lea.vmem [#allocation2], %s2610
    %2612 = vst [vmem:[%s2611] sm:$0xff] %v2606
    %p2613 = scmp.eq.s32.totalorder 0, 0
    // Predicated region
    $region98: #{tpu_custom_call.1} parent=1 // pred_check
      %p2614 = pneg %p2613
    $region99: #{tpu_custom_call.1} parent=1 // pred_check_branch
      %2616 = sbr.rel (%p2614) target = $region101
    $region100: #{tpu_custom_call.1} parent=1 // pred_region
      %v2617 = vlaneseq
      %v2618 = vshrl.u32 %v2617, 7
      %v2619 = vadd.s32 %v2618, 8
      %vm2620 = vcmp.lt.s32.totalorder %v2618, 2
      %vm2621 = vcmp.lt.s32.totalorder %v2619, 2
      %v2622 = vsel %vm2620, 1, 0
      %v2623 = vsel %vm2621, 1, 0
      %v2624 = vcvt.s32.f32 %v2622
      %v2625 = vcvt.s32.f32 %v2623
      %v2626 = vld [vmem:[%s3] sm:$0xf]
      %v2627 = vld [vmem:[%s3 + $0x4] sm:$0xf]
      %v2628 = vld [vmem:[#allocation12] sm:$0xff]
      %v2629 = vld [vmem:[#allocation12 + $0x8] sm:$0xff]
      %v2630 = vld [vmem:[#allocation12 + $0x10] sm:$0xff]
      %v2631 = vld [vmem:[#allocation12 + $0x18] sm:$0xff]
      %v2632 = vld [vmem:[#allocation12 + $0x20] sm:$0xff]
      %v2633 = vld [vmem:[#allocation12 + $0x28] sm:$0xff]
      %v2634 = vld [vmem:[#allocation12 + $0x30] sm:$0xff]
      %v2635 = vld [vmem:[#allocation12 + $0x38] sm:$0xff]
      %v2636 = vld [vmem:[#allocation12 + $0x40] sm:$0xff]
      %v2637 = vld [vmem:[#allocation12 + $0x48] sm:$0xff]
      %v2638 = vld [vmem:[#allocation12 + $0x50] sm:$0xff]
      %v2639 = vld [vmem:[#allocation12 + $0x58] sm:$0xff]
      %v2640 = vld [vmem:[#allocation12 + $0x60] sm:$0xff]
      %v2641 = vld [vmem:[#allocation12 + $0x68] sm:$0xff]
      %v2642 = vld [vmem:[#allocation12 + $0x70] sm:$0xff]
      %v2643 = vld [vmem:[#allocation12 + $0x78] sm:$0xff]
      %v2644 = vld [vmem:[#allocation12 + $0x80] sm:$0xff]
      %v2645 = vld [vmem:[#allocation12 + $0x88] sm:$0xff]
      %v2646 = vld [vmem:[#allocation12 + $0x90] sm:$0xff]
      %v2647 = vld [vmem:[#allocation12 + $0x98] sm:$0xff]
      %v2648 = vld [vmem:[#allocation12 + $0xa0] sm:$0xff]
      %v2649 = vld [vmem:[#allocation12 + $0xa8] sm:$0xff]
      %v2650 = vld [vmem:[#allocation12 + $0xb0] sm:$0xff]
      %v2651 = vld [vmem:[#allocation12 + $0xb8] sm:$0xff]
      %v2652 = vld [vmem:[#allocation12 + $0xc0] sm:$0xff]
      %v2653 = vld [vmem:[#allocation12 + $0xc8] sm:$0xff]
      %v2654 = vld [vmem:[#allocation12 + $0xd0] sm:$0xff]
      %v2655 = vld [vmem:[#allocation12 + $0xd8] sm:$0xff]
      %v2656 = vld [vmem:[#allocation12 + $0xe0] sm:$0xff]
      %v2657 = vld [vmem:[#allocation12 + $0xe8] sm:$0xff]
      %v2658 = vld [vmem:[#allocation12 + $0xf0] sm:$0xff]
      %v2659 = vld [vmem:[#allocation12 + $0xf8] sm:$0xff]
      %v2660 = vld [vmem:[%s7] sm:$0xf]
      %v2662 = vlaneseq
      %v2663 = vshrl.u32 %v2662, 7
      %v2664 = vsub.s32 0, %v2663
      %v2665 = vrot.slane %v2660, %v2664
      %v2666 = vlaneseq
      %v2667 = vshrl.u32 %v2666, 7
      %v2668 = vsub.s32 1, %v2667
      %v2669 = vrot.slane %v2660, %v2668
      %v2670 = vlaneseq
      %v2671 = vshrl.u32 %v2670, 7
      %v2672 = vsub.s32 2, %v2671
      %v2673 = vrot.slane %v2660, %v2672
      %v2674 = vlaneseq
      %v2675 = vshrl.u32 %v2674, 7
      %v2676 = vsub.s32 3, %v2675
      %v2677 = vrot.slane %v2660, %v2676
      %v2684 = vunpack.c.l.b16 %v2626
      %v2685 = vunpack.c.l.b16 %v2627
      %v2686 = vpack.c.b16 %v2685, %v2684
      %v2720 = vunpack.c.l.b16 %v2628
      %v2721 = vunpack.c.h.b16 %v2628
      %v2722 = vunpack.c.l.b16 %v2629
      %v2723 = vunpack.c.h.b16 %v2629
      %v2724 = vunpack.c.l.b16 %v2630
      %v2725 = vunpack.c.h.b16 %v2630
      %v2726 = vunpack.c.l.b16 %v2631
      %v2727 = vunpack.c.h.b16 %v2631
      %v2728 = vunpack.c.l.b16 %v2632
      %v2729 = vunpack.c.h.b16 %v2632
      %v2730 = vunpack.c.l.b16 %v2633
      %v2731 = vunpack.c.h.b16 %v2633
      %v2732 = vunpack.c.l.b16 %v2634
      %v2733 = vunpack.c.h.b16 %v2634
      %v2734 = vunpack.c.l.b16 %v2635
      %v2735 = vunpack.c.h.b16 %v2635
      %v2736 = vunpack.c.l.b16 %v2636
      %v2737 = vunpack.c.h.b16 %v2636
      %v2738 = vunpack.c.l.b16 %v2637
      %v2739 = vunpack.c.h.b16 %v2637
      %v2740 = vunpack.c.l.b16 %v2638
      %v2741 = vunpack.c.h.b16 %v2638
      %v2742 = vunpack.c.l.b16 %v2639
      %v2743 = vunpack.c.h.b16 %v2639
      %v2744 = vunpack.c.l.b16 %v2640
      %v2745 = vunpack.c.h.b16 %v2640
      %v2746 = vunpack.c.l.b16 %v2641
      %v2747 = vunpack.c.h.b16 %v2641
      %v2748 = vunpack.c.l.b16 %v2642
      %v2749 = vunpack.c.h.b16 %v2642
      %v2750 = vunpack.c.l.b16 %v2643
      %v2751 = vunpack.c.h.b16 %v2643
      %v2752 = vunpack.c.l.b16 %v2644
      %v2753 = vunpack.c.h.b16 %v2644
      %v2754 = vunpack.c.l.b16 %v2645
      %v2755 = vunpack.c.h.b16 %v2645
      %v2756 = vunpack.c.l.b16 %v2646
      %v2757 = vunpack.c.h.b16 %v2646
      %v2758 = vunpack.c.l.b16 %v2647
      %v2759 = vunpack.c.h.b16 %v2647
      %v2760 = vunpack.c.l.b16 %v2648
      %v2761 = vunpack.c.h.b16 %v2648
      %v2762 = vunpack.c.l.b16 %v2649
      %v2763 = vunpack.c.h.b16 %v2649
      %v2764 = vunpack.c.l.b16 %v2650
      %v2765 = vunpack.c.h.b16 %v2650
      %v2766 = vunpack.c.l.b16 %v2651
      %v2767 = vunpack.c.h.b16 %v2651
      %v2768 = vunpack.c.l.b16 %v2652
      %v2769 = vunpack.c.h.b16 %v2652
      %v2770 = vunpack.c.l.b16 %v2653
      %v2771 = vunpack.c.h.b16 %v2653
      %v2772 = vunpack.c.l.b16 %v2654
      %v2773 = vunpack.c.h.b16 %v2654
      %v2774 = vunpack.c.l.b16 %v2655
      %v2775 = vunpack.c.h.b16 %v2655
      %v2776 = vunpack.c.l.b16 %v2656
      %v2777 = vunpack.c.h.b16 %v2656
      %v2778 = vunpack.c.l.b16 %v2657
      %v2779 = vunpack.c.h.b16 %v2657
      %v2780 = vunpack.c.l.b16 %v2658
      %v2781 = vunpack.c.h.b16 %v2658
      %v2782 = vunpack.c.l.b16 %v2659
      %v2783 = vunpack.c.h.b16 %v2659
      %v2784 = vpack.c.b16 %v2724, %v2720
      %v2785 = vpack.c.b16 %v2725, %v2721
      %v2786 = vpack.c.b16 %v2726, %v2722
      %v2787 = vpack.c.b16 %v2727, %v2723
      %v2788 = vpack.c.b16 %v2732, %v2728
      %v2789 = vpack.c.b16 %v2733, %v2729
      %v2790 = vpack.c.b16 %v2734, %v2730
      %v2791 = vpack.c.b16 %v2735, %v2731
      %v2792 = vpack.c.b16 %v2740, %v2736
      %v2793 = vpack.c.b16 %v2741, %v2737
      %v2794 = vpack.c.b16 %v2742, %v2738
      %v2795 = vpack.c.b16 %v2743, %v2739
      %v2796 = vpack.c.b16 %v2748, %v2744
      %v2797 = vpack.c.b16 %v2749, %v2745
      %v2798 = vpack.c.b16 %v2750, %v2746
      %v2799 = vpack.c.b16 %v2751, %v2747
      %v2800 = vpack.c.b16 %v2756, %v2752
      %v2801 = vpack.c.b16 %v2757, %v2753
      %v2802 = vpack.c.b16 %v2758, %v2754
      %v2803 = vpack.c.b16 %v2759, %v2755
      %v2804 = vpack.c.b16 %v2764, %v2760
      %v2805 = vpack.c.b16 %v2765, %v2761
      %v2806 = vpack.c.b16 %v2766, %v2762
      %v2807 = vpack.c.b16 %v2767, %v2763
      %v2808 = vpack.c.b16 %v2772, %v2768
      %v2809 = vpack.c.b16 %v2773, %v2769
      %v2810 = vpack.c.b16 %v2774, %v2770
      %v2811 = vpack.c.b16 %v2775, %v2771
      %v2812 = vpack.c.b16 %v2780, %v2776
      %v2813 = vpack.c.b16 %v2781, %v2777
      %v2814 = vpack.c.b16 %v2782, %v2778
      %v2815 = vpack.c.b16 %v2783, %v2779
      %2848 = vmatprep.subr.bf16.mxu0 %v2785
      %2849 = vmatpush1.bf16.msra.mxu0 %v2784
      %2850 = vmatprep.subr.bf16.mxu0 %v2789
      %2851 = vmatpush1.bf16.msra.mxu0 %v2788
      %2852 = vmatprep.subr.bf16.mxu0 %v2793
      %2853 = vmatpush1.bf16.msra.mxu0 %v2792
      %2854 = vmatprep.subr.bf16.mxu0 %v2797
      %2855 = vmatpush1.bf16.msra.mxu0 %v2796
      %2856 = vmatprep.subr.bf16.mxu0 %v2801
      %2857 = vmatpush1.bf16.msra.mxu0 %v2800
      %2858 = vmatprep.subr.bf16.mxu0 %v2805
      %2859 = vmatpush1.bf16.msra.mxu0 %v2804
      %2860 = vmatprep.subr.bf16.mxu0 %v2809
      %2861 = vmatpush1.bf16.msra.mxu0 %v2808
      %2862 = vmatprep.subr.bf16.mxu0 %v2813
      %2863 = vmatpush1.bf16.msra.mxu0 %v2812
      %2864 = vmatprep.subr.bf16.mxu0 0
      %2865 = vmatpush1.bf16.msra.mxu0 0
      %2866 = vmatprep.subr.bf16.mxu0 0
      %2867 = vmatpush1.bf16.msra.mxu0 0
      %2868 = vmatprep.subr.bf16.mxu0 0
      %2869 = vmatpush1.bf16.msra.mxu0 0
      %2870 = vmatprep.subr.bf16.mxu0 0
      %2871 = vmatpush1.bf16.msra.mxu0 0
      %2872 = vmatprep.subr.bf16.mxu0 0
      %2873 = vmatpush1.bf16.msra.mxu0 0
      %2874 = vmatprep.subr.bf16.mxu0 0
      %2875 = vmatpush1.bf16.msra.mxu0 0
      %2876 = vmatprep.subr.bf16.mxu0 0
      %2877 = vmatpush1.bf16.msra.mxu0 0
      %2878 = vmatprep.subr.bf16.mxu0 0
      %2879 = vmatpush1.bf16.msra.mxu0 0
      %2880 = vmatprep.mubr.bf16.mxu0 0
      %2881 = vmatmul.mubr.bf16.gmra.mrb[0].mxu0 %v2686
      %v2882 = vpop.f32.mrb[0].mxu0
      %v2883 = vadd.f32 %v2665, %v2882
      %v2884 = vpop.f32.mrb[0].mxu0
      %v2885 = vadd.f32 %v2669, %v2884
      %v2886 = vpop.f32.mrb[0].mxu0
      %v2887 = vadd.f32 %v2665, %v2886
      %v2888 = vpop.f32.mrb[0].mxu0
      %v2889 = vadd.f32 %v2669, %v2888
      %2890 = vdwg.mxu0
      %2891 = vmatprep.subr.bf16.mxu0 %v2787
      %2892 = vmatpush1.bf16.msra.mxu0 %v2786
      %2893 = vmatprep.subr.bf16.mxu0 %v2791
      %2894 = vmatpush1.bf16.msra.mxu0 %v2790
      %2895 = vmatprep.subr.bf16.mxu0 %v2795
      %2896 = vmatpush1.bf16.msra.mxu0 %v2794
      %2897 = vmatprep.subr.bf16.mxu0 %v2799
      %2898 = vmatpush1.bf16.msra.mxu0 %v2798
      %2899 = vmatprep.subr.bf16.mxu0 %v2803
      %2900 = vmatpush1.bf16.msra.mxu0 %v2802
      %2901 = vmatprep.subr.bf16.mxu0 %v2807
      %2902 = vmatpush1.bf16.msra.mxu0 %v2806
      %2903 = vmatprep.subr.bf16.mxu0 %v2811
      %2904 = vmatpush1.bf16.msra.mxu0 %v2810
      %2905 = vmatprep.subr.bf16.mxu0 %v2815
      %2906 = vmatpush1.bf16.msra.mxu0 %v2814
      %2907 = vmatprep.subr.bf16.mxu0 0
      %2908 = vmatpush1.bf16.msra.mxu0 0
      %2909 = vmatprep.subr.bf16.mxu0 0
      %2910 = vmatpush1.bf16.msra.mxu0 0
      %2911 = vmatprep.subr.bf16.mxu0 0
      %2912 = vmatpush1.bf16.msra.mxu0 0
      %2913 = vmatprep.subr.bf16.mxu0 0
      %2914 = vmatpush1.bf16.msra.mxu0 0
      %2915 = vmatprep.subr.bf16.mxu0 0
      %2916 = vmatpush1.bf16.msra.mxu0 0
      %2917 = vmatprep.subr.bf16.mxu0 0
      %2918 = vmatpush1.bf16.msra.mxu0 0
      %2919 = vmatprep.subr.bf16.mxu0 0
      %2920 = vmatpush1.bf16.msra.mxu0 0
      %2921 = vmatprep.subr.bf16.mxu0 0
      %2922 = vmatpush1.bf16.msra.mxu0 0
      %2923 = vmatprep.mubr.bf16.mxu0 0
      %2924 = vmatmul.mubr.bf16.gmra.mrb[0].mxu0 %v2686
      %v2925 = vpop.f32.mrb[0].mxu0
      %v2926 = vadd.f32 %v2673, %v2925
      %v2927 = vpop.f32.mrb[0].mxu0
      %v2928 = vadd.f32 %v2677, %v2927
      %v2929 = vpop.f32.mrb[0].mxu0
      %v2930 = vadd.f32 %v2673, %v2929
      %v2931 = vpop.f32.mrb[0].mxu0
      %v2932 = vadd.f32 %v2677, %v2931
      %2933 = vdwg.mxu0
      %v2934 = vld [vmem:[%s8] sm:$0xf]
      %v2935 = vld [vmem:[%s9] sm:$0xf]
      %v2936 = vmul.f32 %v2883, %v2624
      %v2937 = vmul.f32 %v2885, %v2624
      %v2938 = vmul.f32 %v2926, %v2624
      %v2939 = vmul.f32 %v2928, %v2624
      %v2940 = vmul.f32 %v2887, %v2625
      %v2941 = vmul.f32 %v2889, %v2625
      %v2942 = vmul.f32 %v2930, %v2625
      %v2943 = vmul.f32 %v2932, %v2625
      %v2944 = vadd.f32 %v2936, %v2940
      %v2945 = vrot.slane %v2944, 4
      %v2946 = vadd.f32 %v2944, %v2945
      %v2947 = vrot.slane %v2946, 2
      %v2948 = vadd.f32 %v2946, %v2947
      %v2949 = vrot.slane %v2948, 1
      %v2950 = vadd.f32 %v2948, %v2949
      %v2951 = vadd.f32 %v2937, %v2941
      %v2952 = vrot.slane %v2951, 4
      %v2953 = vadd.f32 %v2951, %v2952
      %v2954 = vrot.slane %v2953, 2
      %v2955 = vadd.f32 %v2953, %v2954
      %v2956 = vrot.slane %v2955, 1
      %v2957 = vadd.f32 %v2955, %v2956
      %v2958 = vadd.f32 %v2938, %v2942
      %v2959 = vrot.slane %v2958, 4
      %v2960 = vadd.f32 %v2958, %v2959
      %v2961 = vrot.slane %v2960, 2
      %v2962 = vadd.f32 %v2960, %v2961
      %v2963 = vrot.slane %v2962, 1
      %v2964 = vadd.f32 %v2962, %v2963
      %v2965 = vadd.f32 %v2939, %v2943
      %v2966 = vrot.slane %v2965, 4
      %v2967 = vadd.f32 %v2965, %v2966
      %v2968 = vrot.slane %v2967, 2
      %v2969 = vadd.f32 %v2967, %v2968
      %v2970 = vrot.slane %v2969, 1
      %v2971 = vadd.f32 %v2969, %v2970
      %v2972 = vmul.f32 %v2950, 0.5
      %v2973 = vmul.f32 %v2957, 0.5
      %v2974 = vmul.f32 %v2964, 0.5
      %v2975 = vmul.f32 %v2971, 0.5
      %v2976 = vsub.f32 %v2883, %v2972
      %v2977 = vsub.f32 %v2885, %v2973
      %v2978 = vsub.f32 %v2926, %v2974
      %v2979 = vsub.f32 %v2928, %v2975
      %v2980 = vsub.f32 %v2887, %v2972
      %v2981 = vsub.f32 %v2889, %v2973
      %v2982 = vsub.f32 %v2930, %v2974
      %v2983 = vsub.f32 %v2932, %v2975
      %v2984 = vmul.f32 %v2976, %v2976
      %v2985 = vmul.f32 %v2977, %v2977
      %v2986 = vmul.f32 %v2978, %v2978
      %v2987 = vmul.f32 %v2979, %v2979
      %v2988 = vmul.f32 %v2980, %v2980
      %v2989 = vmul.f32 %v2981, %v2981
      %v2990 = vmul.f32 %v2982, %v2982
      %v2991 = vmul.f32 %v2983, %v2983
      %v2992 = vmul.f32 %v2984, %v2624
      %v2993 = vmul.f32 %v2985, %v2624
      %v2994 = vmul.f32 %v2986, %v2624
      %v2995 = vmul.f32 %v2987, %v2624
      %v2996 = vmul.f32 %v2988, %v2625
      %v2997 = vmul.f32 %v2989, %v2625
      %v2998 = vmul.f32 %v2990, %v2625
      %v2999 = vmul.f32 %v2991, %v2625
      %v3000 = vadd.f32 %v2992, %v2996
      %v3001 = vrot.slane %v3000, 4
      %v3002 = vadd.f32 %v3000, %v3001
      %v3003 = vrot.slane %v3002, 2
      %v3004 = vadd.f32 %v3002, %v3003
      %v3005 = vrot.slane %v3004, 1
      %v3006 = vadd.f32 %v3004, %v3005
      %v3007 = vadd.f32 %v2993, %v2997
      %v3008 = vrot.slane %v3007, 4
      %v3009 = vadd.f32 %v3007, %v3008
      %v3010 = vrot.slane %v3009, 2
      %v3011 = vadd.f32 %v3009, %v3010
      %v3012 = vrot.slane %v3011, 1
      %v3013 = vadd.f32 %v3011, %v3012
      %v3014 = vadd.f32 %v2994, %v2998
      %v3015 = vrot.slane %v3014, 4
      %v3016 = vadd.f32 %v3014, %v3015
      %v3017 = vrot.slane %v3016, 2
      %v3018 = vadd.f32 %v3016, %v3017
      %v3019 = vrot.slane %v3018, 1
      %v3020 = vadd.f32 %v3018, %v3019
      %v3021 = vadd.f32 %v2995, %v2999
      %v3022 = vrot.slane %v3021, 4
      %v3023 = vadd.f32 %v3021, %v3022
      %v3024 = vrot.slane %v3023, 2
      %v3025 = vadd.f32 %v3023, %v3024
      %v3026 = vrot.slane %v3025, 1
      %v3027 = vadd.f32 %v3025, %v3026
      %v3028 = vmul.f32 %v3006, 0.5
      %v3029 = vmul.f32 %v3013, 0.5
      %v3030 = vmul.f32 %v3020, 0.5
      %v3031 = vmul.f32 %v3027, 0.5
      %v3032 = vadd.f32 %v3028, 1e-05
      %v3033 = vadd.f32 %v3029, 1e-05
      %v3034 = vadd.f32 %v3030, 1e-05
      %v3035 = vadd.f32 %v3031, 1e-05
      %v3036 = vrsqrt.pop %v3032
      %v3037 = vrsqrt.pop %v3033
      %v3038 = vrsqrt.pop %v3034
      %v3039 = vrsqrt.pop %v3035
      %v3040 = vmul.f32 %v2976, %v3036
      %v3041 = vmul.f32 %v2977, %v3037
      %v3042 = vmul.f32 %v2978, %v3038
      %v3043 = vmul.f32 %v2979, %v3039
      %v3044 = vmul.f32 %v2980, %v3036
      %v3045 = vmul.f32 %v2981, %v3037
      %v3046 = vmul.f32 %v2982, %v3038
      %v3047 = vmul.f32 %v2983, %v3039
      %v3049 = vlaneseq
      %v3050 = vshrl.u32 %v3049, 7
      %v3051 = vsub.s32 0, %v3050
      %v3052 = vrot.slane %v2934, %v3051
      %v3053 = vlaneseq
      %v3054 = vshrl.u32 %v3053, 7
      %v3055 = vsub.s32 1, %v3054
      %v3056 = vrot.slane %v2934, %v3055
      %v3057 = vlaneseq
      %v3058 = vshrl.u32 %v3057, 7
      %v3059 = vsub.s32 2, %v3058
      %v3060 = vrot.slane %v2934, %v3059
      %v3061 = vlaneseq
      %v3062 = vshrl.u32 %v3061, 7
      %v3063 = vsub.s32 3, %v3062
      %v3064 = vrot.slane %v2934, %v3063
      %v3069 = vmul.f32 %v3040, %v3052
      %v3070 = vmul.f32 %v3041, %v3056
      %v3071 = vmul.f32 %v3042, %v3060
      %v3072 = vmul.f32 %v3043, %v3064
      %v3073 = vmul.f32 %v3044, %v3052
      %v3074 = vmul.f32 %v3045, %v3056
      %v3075 = vmul.f32 %v3046, %v3060
      %v3076 = vmul.f32 %v3047, %v3064
      %v3078 = vlaneseq
      %v3079 = vshrl.u32 %v3078, 7
      %v3080 = vsub.s32 0, %v3079
      %v3081 = vrot.slane %v2935, %v3080
      %v3082 = vlaneseq
      %v3083 = vshrl.u32 %v3082, 7
      %v3084 = vsub.s32 1, %v3083
      %v3085 = vrot.slane %v2935, %v3084
      %v3086 = vlaneseq
      %v3087 = vshrl.u32 %v3086, 7
      %v3088 = vsub.s32 2, %v3087
      %v3089 = vrot.slane %v2935, %v3088
      %v3090 = vlaneseq
      %v3091 = vshrl.u32 %v3090, 7
      %v3092 = vsub.s32 3, %v3091
      %v3093 = vrot.slane %v2935, %v3092
      %v3098 = vadd.f32 %v3069, %v3081
      %v3099 = vadd.f32 %v3070, %v3085
      %v3100 = vadd.f32 %v3071, %v3089
      %v3101 = vadd.f32 %v3072, %v3093
      %v3102 = vadd.f32 %v3073, %v3081
      %v3103 = vadd.f32 %v3074, %v3085
      %v3104 = vadd.f32 %v3075, %v3089
      %v3105 = vadd.f32 %v3076, %v3093
      %v3106 = vmax.f32 %v3098, 0.0
      %v3107 = vmax.f32 %v3099, 0.0
      %v3108 = vmax.f32 %v3100, 0.0
      %v3109 = vmax.f32 %v3101, 0.0
      %v3110 = vmax.f32 %v3102, 0.0
      %v3111 = vmax.f32 %v3103, 0.0
      %v3112 = vmax.f32 %v3104, 0.0
      %v3113 = vmax.f32 %v3105, 0.0
      %3114 = vst [vmem:[#allocation18] sm:$0xff] %v3106
      %3115 = vst [vmem:[#allocation18 + $0x8] sm:$0xff] %v3107
      %3116 = vst [vmem:[#allocation18 + $0x10] sm:$0xff] %v3108
      %3117 = vst [vmem:[#allocation18 + $0x18] sm:$0xff] %v3109
      %3118 = vst [vmem:[#allocation18 + $0x20] sm:$0xff] %v3110
      %3119 = vst [vmem:[#allocation18 + $0x28] sm:$0xff] %v3111
      %3120 = vst [vmem:[#allocation18 + $0x30] sm:$0xff] %v3112
      %3121 = vst [vmem:[#allocation18 + $0x38] sm:$0xff] %v3113
      %v3122 = vmul.f32 %v3106, %v2624
      %v3123 = vmul.f32 %v3107, %v2624
      %v3124 = vmul.f32 %v3108, %v2624
      %v3125 = vmul.f32 %v3109, %v2624
      %v3126 = vmul.f32 %v3110, %v2625
      %v3127 = vmul.f32 %v3111, %v2625
      %v3128 = vmul.f32 %v3112, %v2625
      %v3129 = vmul.f32 %v3113, %v2625
      %v3130 = vpack.c.bf16 %v3126, %v3122
      %v3131 = vpack.c.bf16 %v3127, %v3123
      %v3132 = vpack.c.bf16 %v3128, %v3124
      %v3133 = vpack.c.bf16 %v3129, %v3125
      %v3134 = vld [vmem:[#allocation14] sm:$0xf]
      %v3135 = vld [vmem:[#allocation14 + $0x4] sm:$0xf]
      %v3136 = vld [vmem:[#allocation14 + $0x8] sm:$0xf]
      %v3137 = vld [vmem:[#allocation14 + $0xc] sm:$0xf]
      %v3138 = vld [vmem:[#allocation14 + $0x10] sm:$0xf]
      %v3139 = vld [vmem:[#allocation14 + $0x14] sm:$0xf]
      %v3140 = vld [vmem:[#allocation14 + $0x18] sm:$0xf]
      %v3141 = vld [vmem:[#allocation14 + $0x1c] sm:$0xf]
      %v3142 = vld [vmem:[#allocation14 + $0x20] sm:$0xf]
      %v3143 = vld [vmem:[#allocation14 + $0x24] sm:$0xf]
      %v3144 = vld [vmem:[#allocation14 + $0x28] sm:$0xf]
      %v3145 = vld [vmem:[#allocation14 + $0x2c] sm:$0xf]
      %v3146 = vld [vmem:[#allocation14 + $0x30] sm:$0xf]
      %v3147 = vld [vmem:[#allocation14 + $0x34] sm:$0xf]
      %v3148 = vld [vmem:[#allocation14 + $0x38] sm:$0xf]
      %v3149 = vld [vmem:[#allocation14 + $0x3c] sm:$0xf]
      %v3150 = vld [vmem:[#allocation14 + $0x40] sm:$0xf]
      %v3151 = vld [vmem:[#allocation14 + $0x44] sm:$0xf]
      %v3152 = vld [vmem:[#allocation14 + $0x48] sm:$0xf]
      %v3153 = vld [vmem:[#allocation14 + $0x4c] sm:$0xf]
      %v3154 = vld [vmem:[#allocation14 + $0x50] sm:$0xf]
      %v3155 = vld [vmem:[#allocation14 + $0x54] sm:$0xf]
      %v3156 = vld [vmem:[#allocation14 + $0x58] sm:$0xf]
      %v3157 = vld [vmem:[#allocation14 + $0x5c] sm:$0xf]
      %v3158 = vld [vmem:[#allocation14 + $0x60] sm:$0xf]
      %v3159 = vld [vmem:[#allocation14 + $0x64] sm:$0xf]
      %v3160 = vld [vmem:[#allocation14 + $0x68] sm:$0xf]
      %v3161 = vld [vmem:[#allocation14 + $0x6c] sm:$0xf]
      %v3162 = vld [vmem:[#allocation14 + $0x70] sm:$0xf]
      %v3163 = vld [vmem:[#allocation14 + $0x74] sm:$0xf]
      %v3164 = vld [vmem:[#allocation14 + $0x78] sm:$0xf]
      %v3165 = vld [vmem:[#allocation14 + $0x7c] sm:$0xf]
      %v3166 = vld [vmem:[#allocation14 + $0x80] sm:$0xf]
      %v3167 = vld [vmem:[#allocation14 + $0x84] sm:$0xf]
      %v3168 = vld [vmem:[#allocation14 + $0x88] sm:$0xf]
      %v3169 = vld [vmem:[#allocation14 + $0x8c] sm:$0xf]
      %v3170 = vld [vmem:[#allocation14 + $0x90] sm:$0xf]
      %v3171 = vld [vmem:[#allocation14 + $0x94] sm:$0xf]
      %v3172 = vld [vmem:[#allocation14 + $0x98] sm:$0xf]
      %v3173 = vld [vmem:[#allocation14 + $0x9c] sm:$0xf]
      %v3174 = vld [vmem:[#allocation14 + $0xa0] sm:$0xf]
      %v3175 = vld [vmem:[#allocation14 + $0xa4] sm:$0xf]
      %v3176 = vld [vmem:[#allocation14 + $0xa8] sm:$0xf]
      %v3177 = vld [vmem:[#allocation14 + $0xac] sm:$0xf]
      %v3178 = vld [vmem:[#allocation14 + $0xb0] sm:$0xf]
      %v3179 = vld [vmem:[#allocation14 + $0xb4] sm:$0xf]
      %v3180 = vld [vmem:[#allocation14 + $0xb8] sm:$0xf]
      %v3181 = vld [vmem:[#allocation14 + $0xbc] sm:$0xf]
      %v3182 = vld [vmem:[#allocation14 + $0xc0] sm:$0xf]
      %v3183 = vld [vmem:[#allocation14 + $0xc4] sm:$0xf]
      %v3184 = vld [vmem:[#allocation14 + $0xc8] sm:$0xf]
      %v3185 = vld [vmem:[#allocation14 + $0xcc] sm:$0xf]
      %v3186 = vld [vmem:[#allocation14 + $0xd0] sm:$0xf]
      %v3187 = vld [vmem:[#allocation14 + $0xd4] sm:$0xf]
      %v3188 = vld [vmem:[#allocation14 + $0xd8] sm:$0xf]
      %v3189 = vld [vmem:[#allocation14 + $0xdc] sm:$0xf]
      %v3190 = vld [vmem:[#allocation14 + $0xe0] sm:$0xf]
      %v3191 = vld [vmem:[#allocation14 + $0xe4] sm:$0xf]
      %v3192 = vld [vmem:[#allocation14 + $0xe8] sm:$0xf]
      %v3193 = vld [vmem:[#allocation14 + $0xec] sm:$0xf]
      %v3194 = vld [vmem:[#allocation14 + $0xf0] sm:$0xf]
      %v3195 = vld [vmem:[#allocation14 + $0xf4] sm:$0xf]
      %v3196 = vld [vmem:[#allocation14 + $0xf8] sm:$0xf]
      %v3197 = vld [vmem:[#allocation14 + $0xfc] sm:$0xf]
      %v3262 = vunpack.c.l.b16 %v3134
      %v3263 = vunpack.c.l.b16 %v3135
      %v3264 = vunpack.c.l.b16 %v3136
      %v3265 = vunpack.c.l.b16 %v3137
      %v3266 = vunpack.c.l.b16 %v3138
      %v3267 = vunpack.c.l.b16 %v3139
      %v3268 = vunpack.c.l.b16 %v3140
      %v3269 = vunpack.c.l.b16 %v3141
      %v3270 = vunpack.c.l.b16 %v3142
      %v3271 = vunpack.c.l.b16 %v3143
      %v3272 = vunpack.c.l.b16 %v3144
      %v3273 = vunpack.c.l.b16 %v3145
      %v3274 = vunpack.c.l.b16 %v3146
      %v3275 = vunpack.c.l.b16 %v3147
      %v3276 = vunpack.c.l.b16 %v3148
      %v3277 = vunpack.c.l.b16 %v3149
      %v3278 = vunpack.c.l.b16 %v3150
      %v3279 = vunpack.c.l.b16 %v3151
      %v3280 = vunpack.c.l.b16 %v3152
      %v3281 = vunpack.c.l.b16 %v3153
      %v3282 = vunpack.c.l.b16 %v3154
      %v3283 = vunpack.c.l.b16 %v3155
      %v3284 = vunpack.c.l.b16 %v3156
      %v3285 = vunpack.c.l.b16 %v3157
      %v3286 = vunpack.c.l.b16 %v3158
      %v3287 = vunpack.c.l.b16 %v3159
      %v3288 = vunpack.c.l.b16 %v3160
      %v3289 = vunpack.c.l.b16 %v3161
      %v3290 = vunpack.c.l.b16 %v3162
      %v3291 = vunpack.c.l.b16 %v3163
      %v3292 = vunpack.c.l.b16 %v3164
      %v3293 = vunpack.c.l.b16 %v3165
      %v3294 = vunpack.c.l.b16 %v3166
      %v3295 = vunpack.c.l.b16 %v3167
      %v3296 = vunpack.c.l.b16 %v3168
      %v3297 = vunpack.c.l.b16 %v3169
      %v3298 = vunpack.c.l.b16 %v3170
      %v3299 = vunpack.c.l.b16 %v3171
      %v3300 = vunpack.c.l.b16 %v3172
      %v3301 = vunpack.c.l.b16 %v3173
      %v3302 = vunpack.c.l.b16 %v3174
      %v3303 = vunpack.c.l.b16 %v3175
      %v3304 = vunpack.c.l.b16 %v3176
      %v3305 = vunpack.c.l.b16 %v3177
      %v3306 = vunpack.c.l.b16 %v3178
      %v3307 = vunpack.c.l.b16 %v3179
      %v3308 = vunpack.c.l.b16 %v3180
      %v3309 = vunpack.c.l.b16 %v3181
      %v3310 = vunpack.c.l.b16 %v3182
      %v3311 = vunpack.c.l.b16 %v3183
      %v3312 = vunpack.c.l.b16 %v3184
      %v3313 = vunpack.c.l.b16 %v3185
      %v3314 = vunpack.c.l.b16 %v3186
      %v3315 = vunpack.c.l.b16 %v3187
      %v3316 = vunpack.c.l.b16 %v3188
      %v3317 = vunpack.c.l.b16 %v3189
      %v3318 = vunpack.c.l.b16 %v3190
      %v3319 = vunpack.c.l.b16 %v3191
      %v3320 = vunpack.c.l.b16 %v3192
      %v3321 = vunpack.c.l.b16 %v3193
      %v3322 = vunpack.c.l.b16 %v3194
      %v3323 = vunpack.c.l.b16 %v3195
      %v3324 = vunpack.c.l.b16 %v3196
      %v3325 = vunpack.c.l.b16 %v3197
      %v3326 = vpack.c.b16 %v3263, %v3262
      %v3327 = vpack.c.b16 %v3265, %v3264
      %v3328 = vpack.c.b16 %v3267, %v3266
      %v3329 = vpack.c.b16 %v3269, %v3268
      %v3330 = vpack.c.b16 %v3271, %v3270
      %v3331 = vpack.c.b16 %v3273, %v3272
      %v3332 = vpack.c.b16 %v3275, %v3274
      %v3333 = vpack.c.b16 %v3277, %v3276
      %v3334 = vpack.c.b16 %v3279, %v3278
      %v3335 = vpack.c.b16 %v3281, %v3280
      %v3336 = vpack.c.b16 %v3283, %v3282
      %v3337 = vpack.c.b16 %v3285, %v3284
      %v3338 = vpack.c.b16 %v3287, %v3286
      %v3339 = vpack.c.b16 %v3289, %v3288
      %v3340 = vpack.c.b16 %v3291, %v3290
      %v3341 = vpack.c.b16 %v3293, %v3292
      %v3342 = vpack.c.b16 %v3295, %v3294
      %v3343 = vpack.c.b16 %v3297, %v3296
      %v3344 = vpack.c.b16 %v3299, %v3298
      %v3345 = vpack.c.b16 %v3301, %v3300
      %v3346 = vpack.c.b16 %v3303, %v3302
      %v3347 = vpack.c.b16 %v3305, %v3304
      %v3348 = vpack.c.b16 %v3307, %v3306
      %v3349 = vpack.c.b16 %v3309, %v3308
      %v3350 = vpack.c.b16 %v3311, %v3310
      %v3351 = vpack.c.b16 %v3313, %v3312
      %v3352 = vpack.c.b16 %v3315, %v3314
      %v3353 = vpack.c.b16 %v3317, %v3316
      %v3354 = vpack.c.b16 %v3319, %v3318
      %v3355 = vpack.c.b16 %v3321, %v3320
      %v3356 = vpack.c.b16 %v3323, %v3322
      %v3357 = vpack.c.b16 %v3325, %v3324
      %3390 = vmatprep.subr.bf16.mxu0 0
      %3391 = vmatpush1.bf16.msra.mxu0 %v3326
      %3392 = vmatprep.subr.bf16.mxu0 0
      %3393 = vmatpush1.bf16.msra.mxu0 %v3327
      %3394 = vmatprep.subr.bf16.mxu0 0
      %3395 = vmatpush1.bf16.msra.mxu0 %v3328
      %3396 = vmatprep.subr.bf16.mxu0 0
      %3397 = vmatpush1.bf16.msra.mxu0 %v3329
      %3398 = vmatprep.subr.bf16.mxu0 0
      %3399 = vmatpush1.bf16.msra.mxu0 %v3330
      %3400 = vmatprep.subr.bf16.mxu0 0
      %3401 = vmatpush1.bf16.msra.mxu0 %v3331
      %3402 = vmatprep.subr.bf16.mxu0 0
      %3403 = vmatpush1.bf16.msra.mxu0 %v3332
      %3404 = vmatprep.subr.bf16.mxu0 0
      %3405 = vmatpush1.bf16.msra.mxu0 %v3333
      %3406 = vmatprep.subr.bf16.mxu0 0
      %3407 = vmatpush1.bf16.msra.mxu0 %v3334
      %3408 = vmatprep.subr.bf16.mxu0 0
      %3409 = vmatpush1.bf16.msra.mxu0 %v3335
      %3410 = vmatprep.subr.bf16.mxu0 0
      %3411 = vmatpush1.bf16.msra.mxu0 %v3336
      %3412 = vmatprep.subr.bf16.mxu0 0
      %3413 = vmatpush1.bf16.msra.mxu0 %v3337
      %3414 = vmatprep.subr.bf16.mxu0 0
      %3415 = vmatpush1.bf16.msra.mxu0 %v3338
      %3416 = vmatprep.subr.bf16.mxu0 0
      %3417 = vmatpush1.bf16.msra.mxu0 %v3339
      %3418 = vmatprep.subr.bf16.mxu0 0
      %3419 = vmatpush1.bf16.msra.mxu0 %v3340
      %3420 = vmatprep.subr.bf16.mxu0 0
      %3421 = vmatpush1.bf16.msra.mxu0 %v3341
      %3422 = vmatprep.mubr.bf16.mxu0 %v3131
      %3423 = vmatmul.mubr.bf16.gmra.mrb[0].mxu0 %v3130
      %v3424 = vpop.f32.mrb[0].mxu0
      %v3425 = vadd.f32 0.0, %v3424
      %v3426 = vpop.f32.mrb[0].mxu0
      %v3427 = vpop.f32.mrb[0].mxu0
      %v3428 = vadd.f32 0.0, %v3427
      %v3429 = vpop.f32.mrb[0].mxu0
      %3430 = vdwg.mxu0
      %3431 = vmatprep.subr.bf16.mxu0 0
      %3432 = vmatpush1.bf16.msra.mxu0 %v3342
      %3433 = vmatprep.subr.bf16.mxu0 0
      %3434 = vmatpush1.bf16.msra.mxu0 %v3343
      %3435 = vmatprep.subr.bf16.mxu0 0
      %3436 = vmatpush1.bf16.msra.mxu0 %v3344
      %3437 = vmatprep.subr.bf16.mxu0 0
      %3438 = vmatpush1.bf16.msra.mxu0 %v3345
      %3439 = vmatprep.subr.bf16.mxu0 0
      %3440 = vmatpush1.bf16.msra.mxu0 %v3346
      %3441 = vmatprep.subr.bf16.mxu0 0
      %3442 = vmatpush1.bf16.msra.mxu0 %v3347
      %3443 = vmatprep.subr.bf16.mxu0 0
      %3444 = vmatpush1.bf16.msra.mxu0 %v3348
      %3445 = vmatprep.subr.bf16.mxu0 0
      %3446 = vmatpush1.bf16.msra.mxu0 %v3349
      %3447 = vmatprep.subr.bf16.mxu0 0
      %3448 = vmatpush1.bf16.msra.mxu0 %v3350
      %3449 = vmatprep.subr.bf16.mxu0 0
      %3450 = vmatpush1.bf16.msra.mxu0 %v3351
      %3451 = vmatprep.subr.bf16.mxu0 0
      %3452 = vmatpush1.bf16.msra.mxu0 %v3352
      %3453 = vmatprep.subr.bf16.mxu0 0
      %3454 = vmatpush1.bf16.msra.mxu0 %v3353
      %3455 = vmatprep.subr.bf16.mxu0 0
      %3456 = vmatpush1.bf16.msra.mxu0 %v3354
      %3457 = vmatprep.subr.bf16.mxu0 0
      %3458 = vmatpush1.bf16.msra.mxu0 %v3355
      %3459 = vmatprep.subr.bf16.mxu0 0
      %3460 = vmatpush1.bf16.msra.mxu0 %v3356
      %3461 = vmatprep.subr.bf16.mxu0 0
      %3462 = vmatpush1.bf16.msra.mxu0 %v3357
      %3463 = vmatprep.mubr.bf16.mxu0 %v3133
      %3464 = vmatmul.mubr.bf16.gmra.mrb[0].mxu0 %v3132
      %v3465 = vpop.f32.mrb[0].mxu0
      %v3466 = vadd.f32 %v3425, %v3465
      %v3467 = vpop.f32.mrb[0].mxu0
      %v3468 = vpop.f32.mrb[0].mxu0
      %v3469 = vadd.f32 %v3428, %v3468
      %v3470 = vpop.f32.mrb[0].mxu0
      %3471 = vdwg.mxu0
      %v3472 = vpack.c.bf16 %v3469, %v3466
      %3473 = vst [vmem:[#allocation2 + $0x18] sm:$0xff] %v3472
      %v3474 = vadd.s32 %v2618, 16
      %v3475 = vadd.s32 %v2618, 24
      %v3476 = vadd.s32 %v2618, 32
      %v3477 = vadd.s32 %v2618, 40
      %v3478 = vadd.s32 %v2618, 48
      %v3479 = vadd.s32 %v2618, 56
      %vm3480 = vcmp.lt.s32.totalorder %v3474, 2
      %vm3481 = vcmp.lt.s32.totalorder %v3475, 2
      %vm3482 = vcmp.lt.s32.totalorder %v3476, 2
      %vm3483 = vcmp.lt.s32.totalorder %v3477, 2
      %vm3484 = vcmp.lt.s32.totalorder %v3478, 2
      %vm3485 = vcmp.lt.s32.totalorder %v3479, 2
      %vm3486 = vcmp.ge.s32.totalorder %v2618, 16
      %vm3487 = vcmp.ge.s32.totalorder %v2619, 16
      %vm3488 = vcmp.ge.s32.totalorder %v3474, 16
      %vm3489 = vcmp.ge.s32.totalorder %v3475, 16
      %vm3490 = vcmp.ge.s32.totalorder %v3476, 16
      %vm3491 = vcmp.ge.s32.totalorder %v3477, 16
      %vm3492 = vcmp.ge.s32.totalorder %v3478, 16
      %vm3493 = vcmp.ge.s32.totalorder %v3479, 16
      %vm3494 = vcmp.lt.s32.totalorder %v2618, 18
      %vm3495 = vcmp.lt.s32.totalorder %v2619, 18
      %vm3496 = vcmp.lt.s32.totalorder %v3474, 18
      %vm3497 = vcmp.lt.s32.totalorder %v3475, 18
      %vm3498 = vcmp.lt.s32.totalorder %v3476, 18
      %vm3499 = vcmp.lt.s32.totalorder %v3477, 18
      %vm3500 = vcmp.lt.s32.totalorder %v3478, 18
      %vm3501 = vcmp.lt.s32.totalorder %v3479, 18
      %vm3502 = vmand %vm3486, %vm3494
      %vm3503 = vmand %vm3487, %vm3495
      %vm3504 = vmand %vm3488, %vm3496
      %vm3505 = vmand %vm3489, %vm3497
      %vm3506 = vmand %vm3490, %vm3498
      %vm3507 = vmand %vm3491, %vm3499
      %vm3508 = vmand %vm3492, %vm3500
      %vm3509 = vmand %vm3493, %vm3501
      %vm3510 = vmor %vm2620, %vm3502
      %vm3511 = vmor %vm2621, %vm3503
      %vm3512 = vmor %vm3480, %vm3504
      %vm3513 = vmor %vm3481, %vm3505
      %vm3514 = vmor %vm3482, %vm3506
      %vm3515 = vmor %vm3483, %vm3507
      %vm3516 = vmor %vm3484, %vm3508
      %vm3517 = vmor %vm3485, %vm3509
      %vm3518 = vcmp.ge.s32.totalorder %v2618, 32
      %vm3519 = vcmp.ge.s32.totalorder %v2619, 32
      %vm3520 = vcmp.ge.s32.totalorder %v3474, 32
      %vm3521 = vcmp.ge.s32.totalorder %v3475, 32
      %vm3522 = vcmp.ge.s32.totalorder %v3476, 32
      %vm3523 = vcmp.ge.s32.totalorder %v3477, 32
      %vm3524 = vcmp.ge.s32.totalorder %v3478, 32
      %vm3525 = vcmp.ge.s32.totalorder %v3479, 32
      %vm3526 = vcmp.lt.s32.totalorder %v2618, 34
      %vm3527 = vcmp.lt.s32.totalorder %v2619, 34
      %vm3528 = vcmp.lt.s32.totalorder %v3474, 34
      %vm3529 = vcmp.lt.s32.totalorder %v3475, 34
      %vm3530 = vcmp.lt.s32.totalorder %v3476, 34
      %vm3531 = vcmp.lt.s32.totalorder %v3477, 34
      %vm3532 = vcmp.lt.s32.totalorder %v3478, 34
      %vm3533 = vcmp.lt.s32.totalorder %v3479, 34
      %vm3534 = vmand %vm3518, %vm3526
      %vm3535 = vmand %vm3519, %vm3527
      %vm3536 = vmand %vm3520, %vm3528
      %vm3537 = vmand %vm3521, %vm3529
      %vm3538 = vmand %vm3522, %vm3530
      %vm3539 = vmand %vm3523, %vm3531
      %vm3540 = vmand %vm3524, %vm3532
      %vm3541 = vmand %vm3525, %vm3533
      %vm3542 = vmor %vm3510, %vm3534
      %vm3543 = vmor %vm3511, %vm3535
      %vm3544 = vmor %vm3512, %vm3536
      %vm3545 = vmor %vm3513, %vm3537
      %vm3546 = vmor %vm3514, %vm3538
      %vm3547 = vmor %vm3515, %vm3539
      %vm3548 = vmor %vm3516, %vm3540
      %vm3549 = vmor %vm3517, %vm3541
      %vm3550 = vcmp.ge.s32.totalorder %v2618, 48
      %vm3551 = vcmp.ge.s32.totalorder %v2619, 48
      %vm3552 = vcmp.ge.s32.totalorder %v3474, 48
      %vm3553 = vcmp.ge.s32.totalorder %v3475, 48
      %vm3554 = vcmp.ge.s32.totalorder %v3476, 48
      %vm3555 = vcmp.ge.s32.totalorder %v3477, 48
      %vm3556 = vcmp.ge.s32.totalorder %v3478, 48
      %vm3557 = vcmp.ge.s32.totalorder %v3479, 48
      %vm3558 = vcmp.lt.s32.totalorder %v2618, 50
      %vm3559 = vcmp.lt.s32.totalorder %v2619, 50
      %vm3560 = vcmp.lt.s32.totalorder %v3474, 50
      %vm3561 = vcmp.lt.s32.totalorder %v3475, 50
      %vm3562 = vcmp.lt.s32.totalorder %v3476, 50
      %vm3563 = vcmp.lt.s32.totalorder %v3477, 50
      %vm3564 = vcmp.lt.s32.totalorder %v3478, 50
      %vm3565 = vcmp.lt.s32.totalorder %v3479, 50
      %vm3566 = vmand %vm3550, %vm3558
      %vm3567 = vmand %vm3551, %vm3559
      %vm3568 = vmand %vm3552, %vm3560
      %vm3569 = vmand %vm3553, %vm3561
      %vm3570 = vmand %vm3554, %vm3562
      %vm3571 = vmand %vm3555, %vm3563
      %vm3572 = vmand %vm3556, %vm3564
      %vm3573 = vmand %vm3557, %vm3565
      %vm3574 = vmor %vm3542, %vm3566
      %vm3575 = vmor %vm3543, %vm3567
      %vm3576 = vmor %vm3544, %vm3568
      %vm3577 = vmor %vm3545, %vm3569
      %vm3578 = vmor %vm3546, %vm3570
      %vm3579 = vmor %vm3547, %vm3571
      %vm3580 = vmor %vm3548, %vm3572
      %vm3581 = vmor %vm3549, %vm3573
      %v3582 = vsel %vm3574, 1, 0
      %v3583 = vsel %vm3575, 1, 0
      %v3584 = vsel %vm3576, 1, 0
      %v3585 = vsel %vm3577, 1, 0
      %v3586 = vsel %vm3578, 1, 0
      %v3587 = vsel %vm3579, 1, 0
      %v3588 = vsel %vm3580, 1, 0
      %v3589 = vsel %vm3581, 1, 0
      %v3590 = vcvt.s32.f32 %v3582
      %v3591 = vcvt.s32.f32 %v3583
      %v3592 = vcvt.s32.f32 %v3584
      %v3593 = vcvt.s32.f32 %v3585
      %v3594 = vcvt.s32.f32 %v3586
      %v3595 = vcvt.s32.f32 %v3587
      %v3596 = vcvt.s32.f32 %v3588
      %v3597 = vcvt.s32.f32 %v3589
      %v3598 = vld [vmem:[#allocation2] sm:$0xff]
      %v3599 = vld [vmem:[#allocation2 + $0x8] sm:$0xff]
      %v3600 = vld [vmem:[#allocation2 + $0x10] sm:$0xff]
      %v3601 = vld [vmem:[#allocation2 + $0x18] sm:$0xff]
      %v3602 = vld [vmem:[#allocation15] sm:$0xf]
      %v3603 = vld [vmem:[#allocation15 + $0x4] sm:$0xf]
      %v3604 = vld [vmem:[#allocation15 + $0x8] sm:$0xf]
      %v3605 = vld [vmem:[#allocation15 + $0xc] sm:$0xf]
      %v3606 = vld [vmem:[#allocation15 + $0x10] sm:$0xf]
      %v3607 = vld [vmem:[#allocation15 + $0x14] sm:$0xf]
      %v3608 = vld [vmem:[#allocation15 + $0x18] sm:$0xf]
      %v3609 = vld [vmem:[#allocation15 + $0x1c] sm:$0xf]
      %v3610 = vld [vmem:[#allocation15 + $0x20] sm:$0xf]
      %v3611 = vld [vmem:[#allocation15 + $0x24] sm:$0xf]
      %v3612 = vld [vmem:[#allocation15 + $0x28] sm:$0xf]
      %v3613 = vld [vmem:[#allocation15 + $0x2c] sm:$0xf]
      %v3614 = vld [vmem:[#allocation15 + $0x30] sm:$0xf]
      %v3615 = vld [vmem:[#allocation15 + $0x34] sm:$0xf]
      %v3616 = vld [vmem:[#allocation15 + $0x38] sm:$0xf]
      %v3617 = vld [vmem:[#allocation15 + $0x3c] sm:$0xf]
      %v3634 = vunpack.c.l.b16 %v3602
      %v3635 = vunpack.c.l.b16 %v3603
      %v3636 = vunpack.c.l.b16 %v3604
      %v3637 = vunpack.c.l.b16 %v3605
      %v3638 = vunpack.c.l.b16 %v3606
      %v3639 = vunpack.c.l.b16 %v3607
      %v3640 = vunpack.c.l.b16 %v3608
      %v3641 = vunpack.c.l.b16 %v3609
      %v3642 = vunpack.c.l.b16 %v3610
      %v3643 = vunpack.c.l.b16 %v3611
      %v3644 = vunpack.c.l.b16 %v3612
      %v3645 = vunpack.c.l.b16 %v3613
      %v3646 = vunpack.c.l.b16 %v3614
      %v3647 = vunpack.c.l.b16 %v3615
      %v3648 = vunpack.c.l.b16 %v3616
      %v3649 = vunpack.c.l.b16 %v3617
      %v3650 = vpack.c.b16 %v3635, %v3634
      %v3651 = vpack.c.b16 %v3637, %v3636
      %v3652 = vpack.c.b16 %v3639, %v3638
      %v3653 = vpack.c.b16 %v3641, %v3640
      %v3654 = vpack.c.b16 %v3643, %v3642
      %v3655 = vpack.c.b16 %v3645, %v3644
      %v3656 = vpack.c.b16 %v3647, %v3646
      %v3657 = vpack.c.b16 %v3649, %v3648
      %3666 = vmatprep.subr.bf16.mxu0 0
      %3667 = vmatpush1.bf16.msra.mxu0 %v3650
      %3668 = vmatprep.subr.bf16.mxu0 0
      %3669 = vmatpush1.bf16.msra.mxu0 %v3651
      %3670 = vmatprep.subr.bf16.mxu0 0
      %3671 = vmatpush1.bf16.msra.mxu0 %v3652
      %3672 = vmatprep.subr.bf16.mxu0 0
      %3673 = vmatpush1.bf16.msra.mxu0 %v3653
      %3674 = vmatprep.subr.bf16.mxu0 0
      %3675 = vmatpush1.bf16.msra.mxu0 %v3654
      %3676 = vmatprep.subr.bf16.mxu0 0
      %3677 = vmatpush1.bf16.msra.mxu0 %v3655
      %3678 = vmatprep.subr.bf16.mxu0 0
      %3679 = vmatpush1.bf16.msra.mxu0 %v3656
      %3680 = vmatprep.subr.bf16.mxu0 0
      %3681 = vmatpush1.bf16.msra.mxu0 %v3657
      %3682 = vmatprep.subr.bf16.mxu0 0
      %3683 = vmatpush1.bf16.msra.mxu0 0
      %3684 = vmatprep.subr.bf16.mxu0 0
      %3685 = vmatpush1.bf16.msra.mxu0 0
      %3686 = vmatprep.subr.bf16.mxu0 0
      %3687 = vmatpush1.bf16.msra.mxu0 0
      %3688 = vmatprep.subr.bf16.mxu0 0
      %3689 = vmatpush1.bf16.msra.mxu0 0
      %3690 = vmatprep.subr.bf16.mxu0 0
      %3691 = vmatpush1.bf16.msra.mxu0 0
      %3692 = vmatprep.subr.bf16.mxu0 0
      %3693 = vmatpush1.bf16.msra.mxu0 0
      %3694 = vmatprep.subr.bf16.mxu0 0
      %3695 = vmatpush1.bf16.msra.mxu0 0
      %3696 = vmatprep.subr.bf16.mxu0 0
      %3697 = vmatpush1.bf16.msra.mxu0 0
      %3698 = vmatprep.mubr.bf16.mxu0 0
      %3699 = vmatmul.mubr.bf16.gmra.mrb[0].mxu0 %v3598
      %v3700 = vpop.f32.mrb[0].mxu0
      %v3701 = vadd.f32 0.0, %v3700
      %v3702 = vpop.f32.mrb[0].mxu0
      %v3703 = vpop.f32.mrb[0].mxu0
      %v3704 = vadd.f32 0.0, %v3703
      %v3705 = vpop.f32.mrb[0].mxu0
      %3706 = vmatprep.mubr.bf16.mxu0 0
      %3707 = vmatmul.mubr.bf16.gmra.mrb[0].mxu0 %v3599
      %v3708 = vpop.f32.mrb[0].mxu0
      %v3709 = vadd.f32 0.0, %v3708
      %v3710 = vpop.f32.mrb[0].mxu0
      %v3711 = vpop.f32.mrb[0].mxu0
      %v3712 = vadd.f32 0.0, %v3711
      %v3713 = vpop.f32.mrb[0].mxu0
      %3714 = vmatprep.mubr.bf16.mxu0 0
      %3715 = vmatmul.mubr.bf16.gmra.mrb[0].mxu0 %v3600
      %v3716 = vpop.f32.mrb[0].mxu0
      %v3717 = vadd.f32 0.0, %v3716
      %v3718 = vpop.f32.mrb[0].mxu0
      %v3719 = vpop.f32.mrb[0].mxu0
      %v3720 = vadd.f32 0.0, %v3719
      %v3721 = vpop.f32.mrb[0].mxu0
      %3722 = vmatprep.mubr.bf16.mxu0 0
      %3723 = vmatmul.mubr.bf16.gmra.mrb[0].mxu0 %v3601
      %v3724 = vpop.f32.mrb[0].mxu0
      %v3725 = vadd.f32 0.0, %v3724
      %v3726 = vpop.f32.mrb[0].mxu0
      %v3727 = vpop.f32.mrb[0].mxu0
      %v3728 = vadd.f32 0.0, %v3727
      %v3729 = vpop.f32.mrb[0].mxu0
      %3730 = vdwg.mxu0
      %v3731 = vld [vmem:[%s12] sm:$0x1]
      %v3732 = vld [vmem:[%s13] sm:$0x1]
      %v3733 = vmul.f32 %v3701, %v3590
      %v3734 = vmul.f32 %v3704, %v3591
      %v3735 = vmul.f32 %v3709, %v3592
      %v3736 = vmul.f32 %v3712, %v3593
      %v3737 = vmul.f32 %v3717, %v3594
      %v3738 = vmul.f32 %v3720, %v3595
      %v3739 = vmul.f32 %v3725, %v3596
      %v3740 = vmul.f32 %v3728, %v3597
      %v3741 = vadd.f32 %v3733, %v3734
      %v3742 = vadd.f32 %v3741, %v3735
      %v3743 = vadd.f32 %v3742, %v3736
      %v3744 = vadd.f32 %v3743, %v3737
      %v3745 = vadd.f32 %v3744, %v3738
      %v3746 = vadd.f32 %v3745, %v3739
      %v3747 = vadd.f32 %v3746, %v3740
      %v3748 = vrot.slane %v3747, 4
      %v3749 = vadd.f32 %v3747, %v3748
      %v3750 = vrot.slane %v3749, 2
      %v3751 = vadd.f32 %v3749, %v3750
      %v3752 = vrot.slane %v3751, 1
      %v3753 = vadd.f32 %v3751, %v3752
      %v3754 = vmul.f32 %v3753, 0.125
      %v3755 = vsub.f32 %v3701, %v3754
      %v3756 = vsub.f32 %v3704, %v3754
      %v3757 = vsub.f32 %v3709, %v3754
      %v3758 = vsub.f32 %v3712, %v3754
      %v3759 = vsub.f32 %v3717, %v3754
      %v3760 = vsub.f32 %v3720, %v3754
      %v3761 = vsub.f32 %v3725, %v3754
      %v3762 = vsub.f32 %v3728, %v3754
      %v3763 = vmul.f32 %v3755, %v3755
      %v3764 = vmul.f32 %v3756, %v3756
      %v3765 = vmul.f32 %v3757, %v3757
      %v3766 = vmul.f32 %v3758, %v3758
      %v3767 = vmul.f32 %v3759, %v3759
      %v3768 = vmul.f32 %v3760, %v3760
      %v3769 = vmul.f32 %v3761, %v3761
      %v3770 = vmul.f32 %v3762, %v3762
      %v3771 = vmul.f32 %v3763, %v3590
      %v3772 = vmul.f32 %v3764, %v3591
      %v3773 = vmul.f32 %v3765, %v3592
      %v3774 = vmul.f32 %v3766, %v3593
      %v3775 = vmul.f32 %v3767, %v3594
      %v3776 = vmul.f32 %v3768, %v3595
      %v3777 = vmul.f32 %v3769, %v3596
      %v3778 = vmul.f32 %v3770, %v3597
      %v3779 = vadd.f32 %v3771, %v3772
      %v3780 = vadd.f32 %v3779, %v3773
      %v3781 = vadd.f32 %v3780, %v3774
      %v3782 = vadd.f32 %v3781, %v3775
      %v3783 = vadd.f32 %v3782, %v3776
      %v3784 = vadd.f32 %v3783, %v3777
      %v3785 = vadd.f32 %v3784, %v3778
      %v3786 = vrot.slane %v3785, 4
      %v3787 = vadd.f32 %v3785, %v3786
      %v3788 = vrot.slane %v3787, 2
      %v3789 = vadd.f32 %v3787, %v3788
      %v3790 = vrot.slane %v3789, 1
      %v3791 = vadd.f32 %v3789, %v3790
      %v3792 = vmul.f32 %v3791, 0.125
      %v3793 = vadd.f32 %v3792, 1e-05
      %v3794 = vrsqrt.pop %v3793
      %v3795 = vmul.f32 %v3755, %v3794
      %v3796 = vmul.f32 %v3756, %v3794
      %v3797 = vmul.f32 %v3757, %v3794
      %v3798 = vmul.f32 %v3758, %v3794
      %v3799 = vmul.f32 %v3759, %v3794
      %v3800 = vmul.f32 %v3760, %v3794
      %v3801 = vmul.f32 %v3761, %v3794
      %v3802 = vmul.f32 %v3762, %v3794
      %v3804 = vlaneseq
      %v3805 = vshrl.u32 %v3804, 7
      %v3806 = vsub.s32 0, %v3805
      %v3807 = vrot.slane %v3731, %v3806
      %v3809 = vmul.f32 %v3795, %v3807
      %v3810 = vmul.f32 %v3796, %v3807
      %v3811 = vmul.f32 %v3797, %v3807
      %v3812 = vmul.f32 %v3798, %v3807
      %v3813 = vmul.f32 %v3799, %v3807
      %v3814 = vmul.f32 %v3800, %v3807
      %v3815 = vmul.f32 %v3801, %v3807
      %v3816 = vmul.f32 %v3802, %v3807
      %v3818 = vlaneseq
      %v3819 = vshrl.u32 %v3818, 7
      %v3820 = vsub.s32 0, %v3819
      %v3821 = vrot.slane %v3732, %v3820
      %v3823 = vadd.f32 %v3809, %v3821
      %v3824 = vadd.f32 %v3810, %v3821
      %v3825 = vadd.f32 %v3811, %v3821
      %v3826 = vadd.f32 %v3812, %v3821
      %v3827 = vadd.f32 %v3813, %v3821
      %v3828 = vadd.f32 %v3814, %v3821
      %v3829 = vadd.f32 %v3815, %v3821
      %v3830 = vadd.f32 %v3816, %v3821
      %v3831 = vmax.f32 %v3823, 0.0
      %v3832 = vmax.f32 %v3824, 0.0
      %v3833 = vmax.f32 %v3825, 0.0
      %v3834 = vmax.f32 %v3826, 0.0
      %v3835 = vmax.f32 %v3827, 0.0
      %v3836 = vmax.f32 %v3828, 0.0
      %v3837 = vmax.f32 %v3829, 0.0
      %v3838 = vmax.f32 %v3830, 0.0
      %v3839 = vpack.c.bf16 %v3832, %v3831
      %v3840 = vpack.c.bf16 %v3834, %v3833
      %v3841 = vpack.c.bf16 %v3836, %v3835
      %v3842 = vpack.c.bf16 %v3838, %v3837
      %v3843 = vld [vmem:[#allocation17] sm:$0xf]
      %v3844 = vld [vmem:[#allocation17 + $0x4] sm:$0xf]
      %v3845 = vld [vmem:[#allocation17 + $0x8] sm:$0xf]
      %v3846 = vld [vmem:[#allocation17 + $0xc] sm:$0xf]
      %v3847 = vld [vmem:[#allocation17 + $0x10] sm:$0xf]
      %v3848 = vld [vmem:[#allocation17 + $0x14] sm:$0xf]
      %v3849 = vld [vmem:[#allocation17 + $0x18] sm:$0xf]
      %v3850 = vld [vmem:[#allocation17 + $0x1c] sm:$0xf]
      %v3851 = vld [vmem:[#allocation17 + $0x20] sm:$0xf]
      %v3852 = vld [vmem:[#allocation17 + $0x24] sm:$0xf]
      %v3853 = vld [vmem:[#allocation17 + $0x28] sm:$0xf]
      %v3854 = vld [vmem:[#allocation17 + $0x2c] sm:$0xf]
      %v3855 = vld [vmem:[#allocation17 + $0x30] sm:$0xf]
      %v3856 = vld [vmem:[#allocation17 + $0x34] sm:$0xf]
      %v3857 = vld [vmem:[#allocation17 + $0x38] sm:$0xf]
      %v3858 = vld [vmem:[#allocation17 + $0x3c] sm:$0xf]
      %v3875 = vunpack.c.l.b16 %v3843
      %v3876 = vunpack.c.l.b16 %v3844
      %v3877 = vunpack.c.l.b16 %v3845
      %v3878 = vunpack.c.l.b16 %v3846
      %v3879 = vunpack.c.l.b16 %v3847
      %v3880 = vunpack.c.l.b16 %v3848
      %v3881 = vunpack.c.l.b16 %v3849
      %v3882 = vunpack.c.l.b16 %v3850
      %v3883 = vunpack.c.l.b16 %v3851
      %v3884 = vunpack.c.l.b16 %v3852
      %v3885 = vunpack.c.l.b16 %v3853
      %v3886 = vunpack.c.l.b16 %v3854
      %v3887 = vunpack.c.l.b16 %v3855
      %v3888 = vunpack.c.l.b16 %v3856
      %v3889 = vunpack.c.l.b16 %v3857
      %v3890 = vunpack.c.l.b16 %v3858
      %v3891 = vpack.c.b16 %v3876, %v3875
      %v3892 = vpack.c.b16 %v3878, %v3877
      %v3893 = vpack.c.b16 %v3880, %v3879
      %v3894 = vpack.c.b16 %v3882, %v3881
      %v3895 = vpack.c.b16 %v3884, %v3883
      %v3896 = vpack.c.b16 %v3886, %v3885
      %v3897 = vpack.c.b16 %v3888, %v3887
      %v3898 = vpack.c.b16 %v3890, %v3889
      %3907 = vmatprep.subr.bf16.mxu0 0
      %3908 = vmatpush1.bf16.msra.mxu0 %v3891
      %3909 = vmatprep.subr.bf16.mxu0 0
      %3910 = vmatpush1.bf16.msra.mxu0 %v3892
      %3911 = vmatprep.subr.bf16.mxu0 0
      %3912 = vmatpush1.bf16.msra.mxu0 %v3893
      %3913 = vmatprep.subr.bf16.mxu0 0
      %3914 = vmatpush1.bf16.msra.mxu0 %v3894
      %3915 = vmatprep.subr.bf16.mxu0 0
      %3916 = vmatpush1.bf16.msra.mxu0 %v3895
      %3917 = vmatprep.subr.bf16.mxu0 0
      %3918 = vmatpush1.bf16.msra.mxu0 %v3896
      %3919 = vmatprep.subr.bf16.mxu0 0
      %3920 = vmatpush1.bf16.msra.mxu0 %v3897
      %3921 = vmatprep.subr.bf16.mxu0 0
      %3922 = vmatpush1.bf16.msra.mxu0 %v3898
      %3923 = vmatprep.subr.bf16.mxu0 0
      %3924 = vmatpush1.bf16.msra.mxu0 0
      %3925 = vmatprep.subr.bf16.mxu0 0
      %3926 = vmatpush1.bf16.msra.mxu0 0
      %3927 = vmatprep.subr.bf16.mxu0 0
      %3928 = vmatpush1.bf16.msra.mxu0 0
      %3929 = vmatprep.subr.bf16.mxu0 0
      %3930 = vmatpush1.bf16.msra.mxu0 0
      %3931 = vmatprep.subr.bf16.mxu0 0
      %3932 = vmatpush1.bf16.msra.mxu0 0
      %3933 = vmatprep.subr.bf16.mxu0 0
      %3934 = vmatpush1.bf16.msra.mxu0 0
      %3935 = vmatprep.subr.bf16.mxu0 0
      %3936 = vmatpush1.bf16.msra.mxu0 0
      %3937 = vmatprep.subr.bf16.mxu0 0
      %3938 = vmatpush1.bf16.msra.mxu0 0
      %3939 = vmatprep.mubr.bf16.mxu0 0
      %3940 = vmatmul.mubr.bf16.gmra.mrb[0].mxu0 %v3839
      %v3941 = vpop.f32.mrb[0].mxu0
      %v3942 = vadd.f32 0.0, %v3941
      %v3943 = vpop.f32.mrb[0].mxu0
      %v3944 = vpop.f32.mrb[0].mxu0
      %v3945 = vadd.f32 0.0, %v3944
      %v3946 = vpop.f32.mrb[0].mxu0
      %3947 = vmatprep.mubr.bf16.mxu0 0
      %3948 = vmatmul.mubr.bf16.gmra.mrb[0].mxu0 %v3840
      %v3949 = vpop.f32.mrb[0].mxu0
      %v3950 = vadd.f32 0.0, %v3949
      %v3951 = vpop.f32.mrb[0].mxu0
      %v3952 = vpop.f32.mrb[0].mxu0
      %v3953 = vadd.f32 0.0, %v3952
      %v3954 = vpop.f32.mrb[0].mxu0
      %3955 = vmatprep.mubr.bf16.mxu0 0
      %3956 = vmatmul.mubr.bf16.gmra.mrb[0].mxu0 %v3841
      %v3957 = vpop.f32.mrb[0].mxu0
      %v3958 = vadd.f32 0.0, %v3957
      %v3959 = vpop.f32.mrb[0].mxu0
      %v3960 = vpop.f32.mrb[0].mxu0
      %v3961 = vadd.f32 0.0, %v3960
      %v3962 = vpop.f32.mrb[0].mxu0
      %3963 = vmatprep.mubr.bf16.mxu0 0
      %3964 = vmatmul.mubr.bf16.gmra.mrb[0].mxu0 %v3842
      %v3965 = vpop.f32.mrb[0].mxu0
      %v3966 = vadd.f32 0.0, %v3965
      %v3967 = vpop.f32.mrb[0].mxu0
      %v3968 = vpop.f32.mrb[0].mxu0
      %v3969 = vadd.f32 0.0, %v3968
      %v3970 = vpop.f32.mrb[0].mxu0
      %3971 = vdwg.mxu0
      %v3972 = vmul.f32 %v3942, %v3942
      %v3973 = vmul.f32 %v3945, %v3945
      %v3974 = vmul.f32 %v3950, %v3950
      %v3975 = vmul.f32 %v3953, %v3953
      %v3976 = vmul.f32 %v3958, %v3958
      %v3977 = vmul.f32 %v3961, %v3961
      %v3978 = vmul.f32 %v3966, %v3966
      %v3979 = vmul.f32 %v3969, %v3969
      %3980 = vadd.xlane.f32.xlu0 %v3972
      %v3981 = vpop.xlane.xlu0 %3980
      %3982 = vadd.xlane.f32.xlu0 %v3973
      %v3983 = vpop.xlane.xlu0 %3982
      %3984 = vadd.xlane.f32.xlu0 %v3974
      %v3985 = vpop.xlane.xlu0 %3984
      %3986 = vadd.xlane.f32.xlu0 %v3975
      %v3987 = vpop.xlane.xlu0 %3986
      %3988 = vadd.xlane.f32.xlu0 %v3976
      %v3989 = vpop.xlane.xlu0 %3988
      %3990 = vadd.xlane.f32.xlu0 %v3977
      %v3991 = vpop.xlane.xlu0 %3990
      %3992 = vadd.xlane.f32.xlu0 %v3978
      %v3993 = vpop.xlane.xlu0 %3992
      %3994 = vadd.xlane.f32.xlu0 %v3979
      %v3995 = vpop.xlane.xlu0 %3994
      %v3996 = vmax.f32 %v3981, 1e-24
      %v3997 = vmax.f32 %v3983, 1e-24
      %v3998 = vmax.f32 %v3985, 1e-24
      %v3999 = vmax.f32 %v3987, 1e-24
      %v4000 = vmax.f32 %v3989, 1e-24
      %v4001 = vmax.f32 %v3991, 1e-24
      %v4002 = vmax.f32 %v3993, 1e-24
      %v4003 = vmax.f32 %v3995, 1e-24
      %v4004 = vrsqrt.pop %v3996
      %v4005 = vrsqrt.pop %v3997
      %v4006 = vrsqrt.pop %v3998
      %v4007 = vrsqrt.pop %v3999
      %v4008 = vrsqrt.pop %v4000
      %v4009 = vrsqrt.pop %v4001
      %v4010 = vrsqrt.pop %v4002
      %v4011 = vrsqrt.pop %v4003
      %v4012 = vmul.f32 %v3942, %v4004
      %v4013 = vmul.f32 %v3945, %v4005
      %v4014 = vmul.f32 %v3950, %v4006
      %v4015 = vmul.f32 %v3953, %v4007
      %v4016 = vmul.f32 %v3958, %v4008
      %v4017 = vmul.f32 %v3961, %v4009
      %v4018 = vmul.f32 %v3966, %v4010
      %v4019 = vmul.f32 %v3969, %v4011
      %4020 = vst [vmem:[#allocation19] sm:$0xff] %v4012
      %4021 = vst [vmem:[#allocation19 + $0x8] sm:$0xff] %v4013
      %4022 = vst [vmem:[#allocation19 + $0x10] sm:$0xff] %v4014
      %4023 = vst [vmem:[#allocation19 + $0x18] sm:$0xff] %v4015
      %4024 = vst [vmem:[#allocation19 + $0x20] sm:$0xff] %v4016
      %4025 = vst [vmem:[#allocation19 + $0x28] sm:$0xff] %v4017
      %4026 = vst [vmem:[#allocation19 + $0x30] sm:$0xff] %v4018
      %4027 = vst [vmem:[#allocation19 + $0x38] sm:$0xff] %v4019
    $region101: #{tpu_custom_call.1} parent=1 // pred_fallthru
      _
    // Predicated region
    $region102: #{tpu_custom_call.1} parent=1 // pred_check
      _
    $region103: #{tpu_custom_call.1} parent=1 // pred_check_branch
      %4029 = sbr.rel (0) target = $region105
    $region104: #{tpu_custom_call.1} parent=1 // pred_region
      %s4031 = ssub.s32 1024, 1024
      %4032 = vsyncadd [#allocation5], %s4031
      %s4033 = sshll.u32 [#allocation18], 4
      %s4034 = int_to_ptr.vmem [resolvable:$true] %s4033
      %4039 = dma.vmem_to_hbm [thread:$0]  %s4034, 1024, %s15, [#allocation5], 512, 512, 32
    $region105: #{tpu_custom_call.1} parent=1 // pred_fallthru
      _
    // Predicated region
    $region106: #{tpu_custom_call.1} parent=1 // pred_check
      _
    $region107: #{tpu_custom_call.1} parent=1 // pred_check_branch
      %4041 = sbr.rel (0) target = $region109
    $region108: #{tpu_custom_call.1} parent=1 // pred_region
      %s4043 = ssub.s32 1024, 1024
      %4044 = vsyncadd [#allocation20], %s4043
      %s4045 = sshll.u32 [#allocation19], 4
      %s4046 = int_to_ptr.vmem [resolvable:$true] %s4045
      %4051 = dma.vmem_to_hbm [thread:$0]  %s4046, 1024, %s16, [#allocation20], 128, 128, 8
    $region109: #{tpu_custom_call.1} parent=1 // pred_fallthru
      _
    // Predicated region
    $region110: #{tpu_custom_call.1} parent=1 // pred_check
      _
    $region111: #{tpu_custom_call.1} parent=1 // pred_check_branch
      %4053 = sbr.rel (0) target = $region113
    $region112: #{tpu_custom_call.1} parent=1 // pred_region
      %4054 = dma.done [#allocation5], 1024
    $region113: #{tpu_custom_call.1} parent=1 // pred_fallthru
      _
    // Predicated region
    $region114: #{tpu_custom_call.1} parent=1 // pred_check
      _
    $region115: #{tpu_custom_call.1} parent=1 // pred_check_branch
      %4056 = sbr.rel (0) target = $region117
    $region116: #{tpu_custom_call.1} parent=1 // pred_region
      %4057 = dma.done [#allocation20], 1024
    $region117: #{tpu_custom_call.1} parent=1 // pred_fallthru
      _
    %4058 = vsyncpa [#allocation4], 1
    %4059 = vsyncpa [#allocation7], 1
    %4060 = vsyncpa [#allocation10], 1
    %4061 = vsyncpa [#allocation13], 1
    %4062 = vsyncpa [#allocation16], 1
    %4063 = vsyncpa [#allocation5], 1
    %4064 = vsyncpa [#allocation20], 1

</llo_original>
